<compile_context>
chip_gen: v6e
topology: v6e:2x2x1
jax: 0.10.0
libtpu: 0.0.40
codegen_flags: <defaults>
</compile_context>

<pallas_src>
import functools

import jax
import jax.numpy as jnp
from jax.experimental import pallas as pl
from jax.experimental.pallas import tpu as pltpu

NEG_INF = -1e30
_VMEM_LIMIT = 48 * 1024 * 1024  # safe on v5e/v6e/v7x; well above what the blocks need


def _pick_tile(dim, candidates):
    """Largest candidate (<= dim) that tiles `dim`; otherwise use the full dim."""
    for c in candidates:
        if c <= dim and dim % c == 0:
            return c
    return dim


# ---------------------------------------------------------------------------
# Tiled linear kernel:  y = act(x @ w + b) [+ residual] [-> LayerNorm]
# MXU operands are bf16, accumulation is f32.
# ---------------------------------------------------------------------------
def _linear_kernel(x_ref, w_ref, b_ref, *rest, activation, has_residual, has_ln):
    rest = list(rest)
    r_ref = rest.pop(0) if has_residual else None
    if has_ln:
        g_ref = rest.pop(0)
        beta_ref = rest.pop(0)
    else:
        g_ref = beta_ref = None
    o_ref, acc_ref = rest

    kk = pl.program_id(2)

    @pl.when(kk == 0)
    def _():
        acc_ref[...] = jnp.zeros_like(acc_ref)

    acc_ref[...] += jnp.dot(x_ref[...].astype(jnp.bfloat16),
                            w_ref[...].astype(jnp.bfloat16),
                            preferred_element_type=jnp.float32)

    @pl.when(kk == pl.num_programs(2) - 1)
    def _():
        y = acc_ref[...] + b_ref[...].astype(jnp.float32)
        if activation == "relu":
            y = jnp.maximum(y, 0.0)
        if has_residual:
            y = y + r_ref[...].astype(jnp.float32)
        if has_ln:
            mean = jnp.mean(y, axis=-1, keepdims=True)
            var = jnp.mean(jnp.square(y - mean), axis=-1, keepdims=True)
            y = (y - mean) * jax.lax.rsqrt(var + 1e-5)
            y = y * g_ref[...].astype(jnp.float32) + beta_ref[...].astype(jnp.float32)
        o_ref[...] = y.astype(o_ref.dtype)


def linear(x2d, w, b, *, activation=None, residual=None, ln=None, out_dtype=None):
    """x2d: (M, K), w: (K, N) [bf16], b: (N,), residual: optional (M, N),
    ln: optional (gamma, beta) fused LayerNorm over the last dim (forces tn == N)."""
    m, kdim = x2d.shape
    n = w.shape[1]
    out_dtype = x2d.dtype if out_dtype is None else out_dtype

    tm = _pick_tile(m, (512, 256, 128))
    tk = _pick_tile(kdim, (512, 256, 128))
    tn = n if ln is not None else _pick_tile(n, (512, 256, 128))
    grid = (m // tm, n // tn, kdim // tk)

    in_specs = [
        pl.BlockSpec((tm, tk), lambda i, j, kk: (i, kk)),
        pl.BlockSpec((tk, tn), lambda i, j, kk: (kk, j)),
        pl.BlockSpec((1, tn), lambda i, j, kk: (0, j)),
    ]
    args = [x2d, w, b.reshape(1, n).astype(jnp.float32)]

    if residual is not None:
        in_specs.append(pl.BlockSpec((tm, tn), lambda i, j, kk: (i, j)))
        args.append(residual)
    if ln is not None:
        gamma, beta = ln
        in_specs.append(pl.BlockSpec((1, tn), lambda i, j, kk: (0, j)))
        in_specs.append(pl.BlockSpec((1, tn), lambda i, j, kk: (0, j)))
        args.append(gamma.reshape(1, n).astype(jnp.float32))
        args.append(beta.reshape(1, n).astype(jnp.float32))

    return pl.pallas_call(
        functools.partial(_linear_kernel, activation=activation,
                          has_residual=residual is not None,
                          has_ln=ln is not None),
        out_shape=jax.ShapeDtypeStruct((m, n), out_dtype),
        grid=grid,
        in_specs=in_specs,
        out_specs=pl.BlockSpec((tm, tn), lambda i, j, kk: (i, j)),
        scratch_shapes=[pltpu.VMEM((tm, tn), jnp.float32)],
        compiler_params=pltpu.CompilerParams(
            dimension_semantics=("parallel", "parallel", "arbitrary"),
            vmem_limit_bytes=_VMEM_LIMIT),
    )(*args)


# ---------------------------------------------------------------------------
# Attention kernels: one batch element per grid step, all heads inside the block.
# Inputs come straight from the fused projections as (T, B, G*H, Dh) (free reshape,
# no split copies).  Outputs are lane-dense (B, T, E) slabs written in one store.
# ---------------------------------------------------------------------------
def _self_attn_kernel(qkv_ref, o_ref, *, num_heads):
    # qkv_ref block: (T, 1, 3H, Dh)  [q = heads 0..H-1, k = H..2H-1, v = 2H..3H-1]
    # o_ref   block: (1, T, E)
    t = qkv_ref.shape[0]
    # Causal (mask_future_timesteps=True) mask generated in-kernel.
    row = jax.lax.broadcasted_iota(jnp.int32, (t, t), 0)
    col = jax.lax.broadcasted_iota(jnp.int32, (t, t), 1)
    future = col > row

    outs = []
    for h in range(num_heads):
        q = qkv_ref[:, 0, h, :]                      # (T, Dh) bf16; 1/sqrt(Dh) folded into Wq
        k = qkv_ref[:, 0, num_heads + h, :]          # (T, Dh)
        v = qkv_ref[:, 0, 2 * num_heads + h, :]      # (T, Dh)
        s = jax.lax.dot_general(q, k, (((1,), (1,)), ((), ())),
                                preferred_element_type=jnp.float32)   # (T, T) f32
        s = jnp.where(future, NEG_INF, s)
        m = jnp.max(s, axis=-1, keepdims=True)
        ex = jnp.exp(s - m)
        denom = jnp.sum(ex, axis=-1, keepdims=True)
        o = jnp.dot(ex.astype(v.dtype), v, preferred_element_type=jnp.float32)
        # Deferred normalization: scale the (T, Dh) output, reciprocal on the EUP.
        outs.append(o * pl.reciprocal(denom, approx=True))
    # Single lane-dense (T, E) store (need_weights=False: no probs materialized).
    o_ref[0] = jnp.concatenate(outs, axis=-1).astype(o_ref.dtype)


def _cross_attn_kernel(q_ref, kv_ref, bias_ref, o_ref, pavg_ref, *, num_heads):
    # q_ref: (T, 1, H, Dh), kv_ref: (S, 1, 2H, Dh), bias_ref: (1, 1, S)
    # o_ref: (1, T, E), pavg_ref: (1, T, S)
    bias = bias_ref[0]                               # (1, S) additive key-padding bias
    inv_h = jnp.float32(1.0 / num_heads)

    outs = []
    for h in range(num_heads):
        q = q_ref[:, 0, h, :]                        # (T, Dh) bf16; scale folded into Wq
        k = kv_ref[:, 0, h, :]                       # (S, Dh)
        v = kv_ref[:, 0, num_heads + h, :]           # (S, Dh)
        s = jax.lax.dot_general(q, k, (((1,), (1,)), ((), ())),
                                preferred_element_type=jnp.float32)   # (T, S) f32
        s = s + bias
        m = jnp.max(s, axis=-1, keepdims=True)
        ex = jnp.exp(s - m)
        # Exact reciprocal here: the averaged probs are a user-visible output.
        recip = 1.0 / jnp.sum(ex, axis=-1, keepdims=True)             # (T, 1)
        outs.append(jnp.dot(ex.astype(v.dtype), v,
                            preferred_element_type=jnp.float32) * recip)
        # Accumulate head-averaged probs directly into the VMEM output block
        # (bounded vreg pressure; only (B, T, S) ever hits HBM).
        p = ex * (recip * inv_h)
        if h == 0:
            pavg_ref[0] = p
        else:
            pavg_ref[0] += p
    o_ref[0] = jnp.concatenate(outs, axis=-1).astype(o_ref.dtype)
    # NOTE: rows whose keys are ALL padded get a uniform softmax (same as before).


def self_attention_core(qkv4, *, num_heads):
    """qkv4: (T, B, 3H, Dh) fused projection output -> (B, T, E) bf16."""
    t, b, threeh, dh = qkv4.shape
    e = num_heads * dh
    return pl.pallas_call(
        functools.partial(_self_attn_kernel, num_heads=num_heads),
        out_shape=jax.ShapeDtypeStruct((b, t, e), qkv4.dtype),
        grid=(b,),
        in_specs=[pl.BlockSpec((t, 1, threeh, dh), lambda i: (0, i, 0, 0))],
        out_specs=pl.BlockSpec((1, t, e), lambda i: (i, 0, 0)),
        compiler_params=pltpu.CompilerParams(
            dimension_semantics=("parallel",),
            vmem_limit_bytes=_VMEM_LIMIT),
    )(qkv4)


def cross_attention_core(q4, kv4, pad_bias, *, num_heads):
    """q4: (T, B, H, Dh), kv4: (S, B, 2H, Dh), pad_bias: (B, 1, S) additive bias.
    Returns attn_out (B, T, E) and head-averaged probs (B, T, S)."""
    t, b, h, dh = q4.shape
    s = kv4.shape[0]
    e = h * dh
    return pl.pallas_call(
        functools.partial(_cross_attn_kernel, num_heads=num_heads),
        out_shape=(jax.ShapeDtypeStruct((b, t, e), q4.dtype),
                   jax.ShapeDtypeStruct((b, t, s), jnp.float32)),
        grid=(b,),
        in_specs=[pl.BlockSpec((t, 1, h, dh), lambda i: (0, i, 0, 0)),
                  pl.BlockSpec((s, 1, 2 * h, dh), lambda i: (0, i, 0, 0)),
                  pl.BlockSpec((1, 1, s), lambda i: (i, 0, 0))],
        out_specs=(pl.BlockSpec((1, t, e), lambda i: (i, 0, 0)),
                   pl.BlockSpec((1, t, s), lambda i: (i, 0, 0))),
        compiler_params=pltpu.CompilerParams(
            dimension_semantics=("parallel",),
            vmem_limit_bytes=_VMEM_LIMIT),
    )(q4, kv4, pad_bias)


# ---------------------------------------------------------------------------
# Decoder layer forward (post-norm, eval mode => dropout is identity)
# ---------------------------------------------------------------------------
def transformer_decoder_layer(x, encoder_outs, encoder_padding_mask, params, num_heads):
    t, b, e = x.shape
    s = encoder_outs.shape[0]
    h = num_heads
    dh = e // h
    ln_g, ln_b = params["ln_g"], params["ln_b"]

    # ----- self-attention (causal), fused QKV projection, no splits -----
    residual = x.reshape(t * b, e)                                   # f32, t-major
    qkv = linear(residual, params["self_attn"]["w_qkv"], params["self_attn"]["b_qkv"],
                 out_dtype=jnp.bfloat16)                             # (T*B, 3E) bf16
    qkv4 = qkv.reshape(t, b, 3 * h, dh)                              # free reshape
    attn_out = self_attention_core(qkv4, num_heads=h)                # (B, T, E) bf16
    # Layout plumbing: back to the t-major residual-stream order (cheap bf16 pass).
    attn_out = jnp.swapaxes(attn_out, 0, 1).reshape(t * b, e)
    # out-projection fused with residual add + shared LayerNorm
    x2 = linear(attn_out, params["self_attn"]["wo"], params["self_attn"]["bo"],
                residual=residual, ln=(ln_g, ln_b), out_dtype=jnp.float32)

    # ----- encoder-decoder attention: fused KV projection, in-kernel head-avg probs -----
    residual = x2
    q = linear(x2, params["enc_attn"]["wq"], params["enc_attn"]["bq"],
               out_dtype=jnp.bfloat16)                               # (T*B, E) bf16
    kv = linear(encoder_outs.reshape(s * b, e),
                params["enc_attn"]["w_kv"], params["enc_attn"]["b_kv"],
                out_dtype=jnp.bfloat16)                              # (S*B, 2E) bf16
    q4 = q.reshape(t, b, h, dh)
    kv4 = kv.reshape(s, b, 2 * h, dh)
    # Only a tiny (B, 1, S) additive bias is materialized for the key-padding mask.
    pad_bias = jnp.where(encoder_padding_mask, NEG_INF, 0.0).astype(jnp.float32)
    pad_bias = pad_bias.reshape(b, 1, s)
    attn_out, attn = cross_attention_core(q4, kv4, pad_bias, num_heads=h)
    attn_out = jnp.swapaxes(attn_out, 0, 1).reshape(t * b, e)
    x2 = linear(attn_out, params["enc_attn"]["wo"], params["enc_attn"]["bo"],
                residual=residual, ln=(ln_g, ln_b), out_dtype=jnp.float32)

    # ----- feed-forward: fc1+relu, fc2 fused with residual add (no norm after FFN) -----
    residual = x2
    hdn = linear(x2, params["fc1_w"], params["fc1_b"], activation="relu",
                 out_dtype=jnp.bfloat16)
    x2 = linear(hdn, params["fc2_w"], params["fc2_b"], residual=residual,
                out_dtype=jnp.float32)
    return x2.reshape(t, b, e), attn


# ---------------------------------------------------------------------------
# Deterministic parameter init (xavier-uniform weights, zero biases).
# Weights are stored bf16 (MXU-native); the 1/sqrt(Dh) attention scale is folded
# into W_q / b_q so no per-element scaling happens inside the attention kernels.
# ---------------------------------------------------------------------------
def xavier_uniform(key, shape):
    fan_in, fan_out = shape
    limit = (6.0 / (fan_in + fan_out)) ** 0.5
    return jax.random.uniform(key, shape, jnp.float32, -limit, limit)


def make_self_attn_params(key, e, num_heads):
    scale = (e // num_heads) ** -0.5
    ks = jax.random.split(key, 4)
    wq, wk, wv, wo = (xavier_uniform(ks[i], (e, e)) for i in range(4))
    return {
        "w_qkv": jnp.concatenate([wq * scale, wk, wv], axis=1).astype(jnp.bfloat16),
        "b_qkv": jnp.zeros((3 * e,), jnp.float32),   # bq is zero, scale fold is a no-op
        "wo": wo.astype(jnp.bfloat16), "bo": jnp.zeros((e,), jnp.float32),
    }


def make_enc_attn_params(key, e, num_heads):
    scale = (e // num_heads) ** -0.5
    ks = jax.random.split(key, 4)
    return {
        "wq": (xavier_uniform(ks[0], (e, e)) * scale).astype(jnp.bfloat16),
        "bq": jnp.zeros((e,), jnp.float32),
        "w_kv": jnp.concatenate([xavier_uniform(ks[1], (e, e)),
                                 xavier_uniform(ks[2], (e, e))],
                                axis=1).astype(jnp.bfloat16),
        "b_kv": jnp.zeros((2 * e,), jnp.float32),
        "wo": xavier_uniform(ks[3], (e, e)).astype(jnp.bfloat16),
        "bo": jnp.zeros((e,), jnp.float32),
    }


def make_params(key, e, ffn, num_heads):
    k1, k2, k3, k4 = jax.random.split(key, 4)
    return {
        "self_attn": make_self_attn_params(k1, e, num_heads),
        "enc_attn": make_enc_attn_params(k2, e, num_heads),
        "fc1_w": xavier_uniform(k3, (e, ffn)).astype(jnp.bfloat16),
        "fc1_b": jnp.zeros((ffn,), jnp.float32),
        "fc2_w": xavier_uniform(k4, (ffn, e)).astype(jnp.bfloat16),
        "fc2_b": jnp.zeros((e,), jnp.float32),
        # single shared layer_norm (used after self-attn and enc-attn, post-norm)
        "ln_g": jnp.ones((e,), jnp.float32), "ln_b": jnp.zeros((e,), jnp.float32),
    }


if __name__ == "__main__":
    # small shapes: tgt_len=8, src_len=16, batch=2, embed=32, heads=4, ffn=64
    T, S, B, E, H, FFN = 8, 16, 2, 32, 4, 64

    root = jax.random.PRNGKey(0)
    k_p, k_x, k_enc = jax.random.split(root, 3)

    params = make_params(k_p, E, FFN, H)
    x = jax.random.normal(k_x, (T, B, E), jnp.float32)
    encoder_outs = jax.random.normal(k_enc, (S, B, E), jnp.float32)
    # pad the last 3 source positions of batch element 1
    encoder_padding_mask = jnp.zeros((B, S), dtype=bool).at[1, S - 3:].set(True)

    fwd = jax.jit(functools.partial(transformer_decoder_layer, num_heads=H))
    out, attn = fwd(x, encoder_outs, encoder_padding_mask, params)
    jax.block_until_ready((out, attn))

    assert out.shape == (T, B, E) and attn.shape == (B, T, S)
    assert bool(jnp.all(jnp.isfinite(out))) and bool(jnp.all(jnp.isfinite(attn)))
    # attention rows sum to ~1 and padded keys get ~0 weight
    assert bool(jnp.allclose(jnp.sum(attn, axis=-1), 1.0, atol=1e-3))
    assert bool(jnp.all(attn[1, :, S - 3:] < 1e-6))
    print("KERNEL_OK")
</pallas_src>

<mosaic_0001>
module attributes {stable_mosaic.version = 11 : i64} {
  func.func @_linear_kernel(%arg0: i32, %arg1: i32, %arg2: i32, %arg3: memref<16x32xf32, #tpu.memory_space<vmem>>, %arg4: memref<32x96xbf16, #tpu.memory_space<vmem>>, %arg5: memref<1x96xf32, #tpu.memory_space<vmem>>, %arg6: memref<16x96xbf16, #tpu.memory_space<vmem>>, %arg7: memref<16x96xf32, #tpu.memory_space<vmem>>) attributes {dimension_semantics = [#tpu.dimension_semantics<parallel>, #tpu.dimension_semantics<parallel>, #tpu.dimension_semantics<arbitrary>], iteration_bounds = array<i64: 1, 1, 1>, scalar_prefetch = 0 : i64, scratch_operands = 1 : i64, tpu.core_type = #tpu.core_type<tc>, window_params = [{transform_indices = @transform_0, window_bounds = array<i64: 16, 32>}, {transform_indices = @transform_1, window_bounds = array<i64: 32, 96>}, {transform_indices = @transform_2, window_bounds = array<i64: 1, 96>}, {transform_indices = @transform_3, window_bounds = array<i64: 16, 96>}]} {
    %c0_i32 = arith.constant 0 : i32
    %0 = arith.cmpi eq, %arg2, %c0_i32 : i32
    %1 = arith.extui %0 : i1 to i32
    %c0_i32_0 = arith.constant 0 : i32
    %2 = arith.cmpi ne, %1, %c0_i32_0 : i32
    scf.if %2 {
      %cst_10 = arith.constant 0.000000e+00 : f32
      %13 = vector.broadcast %cst_10 : f32 to vector<16x96xf32>
      %c0_11 = arith.constant 0 : index
      %c0_12 = arith.constant 0 : index
      %14 = vector.load %arg7[%c0_11, %c0_12] : memref<16x96xf32, #tpu.memory_space<vmem>>, vector<16x96xf32>
      tpu.vector_store %arg7[%c0_11, %c0_12], %13 {strides = array<i32>} : memref<16x96xf32, #tpu.memory_space<vmem>>, vector<16x96xf32>,
    } else {
    }
    %c0 = arith.constant 0 : index
    %c0_1 = arith.constant 0 : index
    %3 = vector.load %arg7[%c0, %c0_1] : memref<16x96xf32, #tpu.memory_space<vmem>>, vector<16x96xf32>
    %c0_2 = arith.constant 0 : index
    %c0_3 = arith.constant 0 : index
    %4 = vector.load %arg3[%c0_2, %c0_3] : memref<16x32xf32, #tpu.memory_space<vmem>>, vector<16x32xf32>
    %5 = arith.truncf %4 : vector<16x32xf32> to vector<16x32xbf16>
    %c0_4 = arith.constant 0 : index
    %c0_5 = arith.constant 0 : index
    %6 = vector.load %arg4[%c0_4, %c0_5] : memref<32x96xbf16, #tpu.memory_space<vmem>>, vector<32x96xbf16>
    %cst = arith.constant dense<0.000000e+00> : vector<16x96xf32>
    %7 = tpu.matmul %5, %6, %cst {dimension_numbers = #tpu.dot_dimension_numbers<[1], [0], [0], [1], [0, 0, 1, 1], [], []>} : vector<16x32xbf16>, vector<32x96xbf16>, vector<16x96xf32> -> vector<16x96xf32>
    %8 = arith.addf %3, %7 : vector<16x96xf32>
    %c0_6 = arith.constant 0 : index
    %c0_7 = arith.constant 0 : index
    %9 = vector.load %arg7[%c0_6, %c0_7] : memref<16x96xf32, #tpu.memory_space<vmem>>, vector<16x96xf32>
    tpu.vector_store %arg7[%c0_6, %c0_7], %8 {strides = array<i32>} : memref<16x96xf32, #tpu.memory_space<vmem>>, vector<16x96xf32>,
    %c0_i32_8 = arith.constant 0 : i32
    %10 = arith.cmpi eq, %arg2, %c0_i32_8 : i32
    %11 = arith.extui %10 : i1 to i32
    %c0_i32_9 = arith.constant 0 : i32
    %12 = arith.cmpi ne, %11, %c0_i32_9 : i32
    scf.if %12 {
      %c0_10 = arith.constant 0 : index
      %c0_11 = arith.constant 0 : index
      %13 = vector.load %arg7[%c0_10, %c0_11] : memref<16x96xf32, #tpu.memory_space<vmem>>, vector<16x96xf32>
      %c0_12 = arith.constant 0 : index
      %c0_13 = arith.constant 0 : index
      %14 = vector.load %arg5[%c0_12, %c0_13] : memref<1x96xf32, #tpu.memory_space<vmem>>, vector<1x96xf32>
      %15 = vector.broadcast %14 : vector<1x96xf32> to vector<16x96xf32>
      %16 = arith.addf %13, %15 : vector<16x96xf32>
      %17 = arith.truncf %16 : vector<16x96xf32> to vector<16x96xbf16>
      %c0_14 = arith.constant 0 : index
      %c0_15 = arith.constant 0 : index
      %18 = vector.load %arg6[%c0_14, %c0_15] : memref<16x96xbf16, #tpu.memory_space<vmem>>, vector<16x96xbf16>
      tpu.vector_store %arg6[%c0_14, %c0_15], %17 {strides = array<i32>} : memref<16x96xbf16, #tpu.memory_space<vmem>>, vector<16x96xbf16>,
    } else {
    }
    return
  }
  func.func @transform_0(%arg0: i32, %arg1: i32, %arg2: i32) -> (i32, i32) {
    %c0_i32 = arith.constant 0 : i32
    return %arg0, %arg2 : i32, i32
  }
  func.func @transform_1(%arg0: i32, %arg1: i32, %arg2: i32) -> (i32, i32) {
    %c0_i32 = arith.constant 0 : i32
    return %arg2, %arg1 : i32, i32
  }
  func.func @transform_2(%arg0: i32, %arg1: i32, %arg2: i32) -> (i32, i32) {
    %c0_i32 = arith.constant 0 : i32
    %c0_i32_0 = arith.constant 0 : i32
    return %c0_i32, %arg1 : i32, i32
  }
  func.func @transform_3(%arg0: i32, %arg1: i32, %arg2: i32) -> (i32, i32) {
    %c0_i32 = arith.constant 0 : i32
    return %arg0, %arg1 : i32, i32
  }
}

module attributes {stable_mosaic.version = 11 : i64} {
  func.func @_self_attn_kernel(%arg0: i32, %arg1: memref<8x1x12x8xbf16, #tpu.memory_space<vmem>>, %arg2: memref<1x8x32xbf16, #tpu.memory_space<vmem>>) attributes {dimension_semantics = [#tpu.dimension_semantics<parallel>], iteration_bounds = array<i64: 2>, scalar_prefetch = 0 : i64, scratch_operands = 0 : i64, tpu.core_type = #tpu.core_type<tc>, window_params = [{transform_indices = @transform_0, window_bounds = array<i64: 8, 1, 12, 8>}, {transform_indices = @transform_1, window_bounds = array<i64: 1, 8, 32>}]} {
    %0 = tpu.iota {dimensions = array<i32: 0>} : vector<8x8xi32>
    %1 = tpu.iota {dimensions = array<i32: 1>} : vector<8x8xi32>
    %2 = arith.cmpi sgt, %1, %0 : vector<8x8xi32>
    %c0 = arith.constant 0 : index
    %c0_0 = arith.constant 0 : index
    %c0_1 = arith.constant 0 : index
    %c0_2 = arith.constant 0 : index
    %3 = vector.load %arg1[%c0, %c0_0, %c0_1, %c0_2] : memref<8x1x12x8xbf16, #tpu.memory_space<vmem>>, vector<8x1x1x8xbf16>
    %4 = vector.shape_cast %3 : vector<8x1x1x8xbf16> to vector<8x8xbf16>
    %c0_3 = arith.constant 0 : index
    %c0_4 = arith.constant 0 : index
    %c4 = arith.constant 4 : index
    %c0_5 = arith.constant 0 : index
    %5 = vector.load %arg1[%c0_3, %c0_4, %c4, %c0_5] : memref<8x1x12x8xbf16, #tpu.memory_space<vmem>>, vector<8x1x1x8xbf16>
    %6 = vector.shape_cast %5 : vector<8x1x1x8xbf16> to vector<8x8xbf16>
    %c0_6 = arith.constant 0 : index
    %c0_7 = arith.constant 0 : index
    %c8 = arith.constant 8 : index
    %c0_8 = arith.constant 0 : index
    %7 = vector.load %arg1[%c0_6, %c0_7, %c8, %c0_8] : memref<8x1x12x8xbf16, #tpu.memory_space<vmem>>, vector<8x1x1x8xbf16>
    %8 = vector.shape_cast %7 : vector<8x1x1x8xbf16> to vector<8x8xbf16>
    %cst = arith.constant dense<0.000000e+00> : vector<8x8xf32>
    %9 = tpu.matmul %4, %6, %cst {dimension_numbers = #tpu.dot_dimension_numbers<[1], [1], [0], [0], [0, 0, 1, 0], [], []>} : vector<8x8xbf16>, vector<8x8xbf16>, vector<8x8xf32> -> vector<8x8xf32>
    %cst_9 = arith.constant -1.000000e+30 : f32
    %10 = vector.broadcast %cst_9 : f32 to vector<8x8xf32>
    %11 = arith.select %2, %10, %9 : vector<8x8xi1>, vector<8x8xf32>
    %cst_10 = arith.constant dense<0xFF800000> : vector<8xf32>
    %12 = vector.multi_reduction <maximumf>, %11, %cst_10 [1] : vector<8x8xf32> to vector<8xf32>
    %13 = vector.shape_cast %12 : vector<8xf32> to vector<8x1xf32>
    %14 = vector.broadcast %13 : vector<8x1xf32> to vector<8x8xf32>
    %15 = arith.subf %11, %14 : vector<8x8xf32>
    %16 = math.exp %15 : vector<8x8xf32>
    %cst_11 = arith.constant dense<0.000000e+00> : vector<8xf32>
    %17 = vector.multi_reduction <add>, %16, %cst_11 [1] : vector<8x8xf32> to vector<8xf32>
    %18 = vector.shape_cast %17 : vector<8xf32> to vector<8x1xf32>
    %19 = arith.truncf %16 : vector<8x8xf32> to vector<8x8xbf16>
    %cst_12 = arith.constant dense<0.000000e+00> : vector<8x8xf32>
    %20 = tpu.matmul %19, %8, %cst_12 {dimension_numbers = #tpu.dot_dimension_numbers<[1], [0], [0], [1], [0, 0, 1, 1], [], []>} : vector<8x8xbf16>, vector<8x8xbf16>, vector<8x8xf32> -> vector<8x8xf32>
    %21 = tpu.reciprocal %18 {approx = true} : vector<8x1xf32> -> vector<8x1xf32>
    %22 = vector.broadcast %21 : vector<8x1xf32> to vector<8x8xf32>
    %23 = arith.mulf %20, %22 : vector<8x8xf32>
    %c0_13 = arith.constant 0 : index
    %c0_14 = arith.constant 0 : index
    %c1 = arith.constant 1 : index
    %c0_15 = arith.constant 0 : index
    %24 = vector.load %arg1[%c0_13, %c0_14, %c1, %c0_15] : memref<8x1x12x8xbf16, #tpu.memory_space<vmem>>, vector<8x1x1x8xbf16>
    %25 = vector.shape_cast %24 : vector<8x1x1x8xbf16> to vector<8x8xbf16>
    %c0_16 = arith.constant 0 : index
    %c0_17 = arith.constant 0 : index
    %c5 = arith.constant 5 : index
    %c0_18 = arith.constant 0 : index
    %26 = vector.load %arg1[%c0_16, %c0_17, %c5, %c0_18] : memref<8x1x12x8xbf16, #tpu.memory_space<vmem>>, vector<8x1x1x8xbf16>
    %27 = vector.shape_cast %26 : vector<8x1x1x8xbf16> to vector<8x8xbf16>
    %c0_19 = arith.constant 0 : index
    %c0_20 = arith.constant 0 : index
    %c9 = arith.constant 9 : index
    %c0_21 = arith.constant 0 : index
    %28 = vector.load %arg1[%c0_19, %c0_20, %c9, %c0_21] : memref<8x1x12x8xbf16, #tpu.memory_space<vmem>>, vector<8x1x1x8xbf16>
    %29 = vector.shape_cast %28 : vector<8x1x1x8xbf16> to vector<8x8xbf16>
    %cst_22 = arith.constant dense<0.000000e+00> : vector<8x8xf32>
    %30 = tpu.matmul %25, %27, %cst_22 {dimension_numbers = #tpu.dot_dimension_numbers<[1], [1], [0], [0], [0, 0, 1, 0], [], []>} : vector<8x8xbf16>, vector<8x8xbf16>, vector<8x8xf32> -> vector<8x8xf32>
    %cst_23 = arith.constant -1.000000e+30 : f32
    %31 = vector.broadcast %cst_23 : f32 to vector<8x8xf32>
    %32 = arith.select %2, %31, %30 : vector<8x8xi1>, vector<8x8xf32>
    %cst_24 = arith.constant dense<0xFF800000> : vector<8xf32>
    %33 = vector.multi_reduction <maximumf>, %32, %cst_24 [1] : vector<8x8xf32> to vector<8xf32>
    %34 = vector.shape_cast %33 : vector<8xf32> to vector<8x1xf32>
    %35 = vector.broadcast %34 : vector<8x1xf32> to vector<8x8xf32>
    %36 = arith.subf %32, %35 : vector<8x8xf32>
    %37 = math.exp %36 : vector<8x8xf32>
    %cst_25 = arith.constant dense<0.000000e+00> : vector<8xf32>
    %38 = vector.multi_reduction <add>, %37, %cst_25 [1] : vector<8x8xf32> to vector<8xf32>
    %39 = vector.shape_cast %38 : vector<8xf32> to vector<8x1xf32>
    %40 = arith.truncf %37 : vector<8x8xf32> to vector<8x8xbf16>
    %cst_26 = arith.constant dense<0.000000e+00> : vector<8x8xf32>
    %41 = tpu.matmul %40, %29, %cst_26 {dimension_numbers = #tpu.dot_dimension_numbers<[1], [0], [0], [1], [0, 0, 1, 1], [], []>} : vector<8x8xbf16>, vector<8x8xbf16>, vector<8x8xf32> -> vector<8x8xf32>
    %42 = tpu.reciprocal %39 {approx = true} : vector<8x1xf32> -> vector<8x1xf32>
    %43 = vector.broadcast %42 : vector<8x1xf32> to vector<8x8xf32>
    %44 = arith.mulf %41, %43 : vector<8x8xf32>
    %c0_27 = arith.constant 0 : index
    %c0_28 = arith.constant 0 : index
    %c2 = arith.constant 2 : index
    %c0_29 = arith.constant 0 : index
    %45 = vector.load %arg1[%c0_27, %c0_28, %c2, %c0_29] : memref<8x1x12x8xbf16, #tpu.memory_space<vmem>>, vector<8x1x1x8xbf16>
    %46 = vector.shape_cast %45 : vector<8x1x1x8xbf16> to vector<8x8xbf16>
    %c0_30 = arith.constant 0 : index
    %c0_31 = arith.constant 0 : index
    %c6 = arith.constant 6 : index
    %c0_32 = arith.constant 0 : index
    %47 = vector.load %arg1[%c0_30, %c0_31, %c6, %c0_32] : memref<8x1x12x8xbf16, #tpu.memory_space<vmem>>, vector<8x1x1x8xbf16>
    %48 = vector.shape_cast %47 : vector<8x1x1x8xbf16> to vector<8x8xbf16>
    %c0_33 = arith.constant 0 : index
    %c0_34 = arith.constant 0 : index
    %c10 = arith.constant 10 : index
    %c0_35 = arith.constant 0 : index
    %49 = vector.load %arg1[%c0_33, %c0_34, %c10, %c0_35] : memref<8x1x12x8xbf16, #tpu.memory_space<vmem>>, vector<8x1x1x8xbf16>
    %50 = vector.shape_cast %49 : vector<8x1x1x8xbf16> to vector<8x8xbf16>
    %cst_36 = arith.constant dense<0.000000e+00> : vector<8x8xf32>
    %51 = tpu.matmul %46, %48, %cst_36 {dimension_numbers = #tpu.dot_dimension_numbers<[1], [1], [0], [0], [0, 0, 1, 0], [], []>} : vector<8x8xbf16>, vector<8x8xbf16>, vector<8x8xf32> -> vector<8x8xf32>
    %cst_37 = arith.constant -1.000000e+30 : f32
    %52 = vector.broadcast %cst_37 : f32 to vector<8x8xf32>
    %53 = arith.select %2, %52, %51 : vector<8x8xi1>, vector<8x8xf32>
    %cst_38 = arith.constant dense<0xFF800000> : vector<8xf32>
    %54 = vector.multi_reduction <maximumf>, %53, %cst_38 [1] : vector<8x8xf32> to vector<8xf32>
    %55 = vector.shape_cast %54 : vector<8xf32> to vector<8x1xf32>
    %56 = vector.broadcast %55 : vector<8x1xf32> to vector<8x8xf32>
    %57 = arith.subf %53, %56 : vector<8x8xf32>
    %58 = math.exp %57 : vector<8x8xf32>
    %cst_39 = arith.constant dense<0.000000e+00> : vector<8xf32>
    %59 = vector.multi_reduction <add>, %58, %cst_39 [1] : vector<8x8xf32> to vector<8xf32>
    %60 = vector.shape_cast %59 : vector<8xf32> to vector<8x1xf32>
    %61 = arith.truncf %58 : vector<8x8xf32> to vector<8x8xbf16>
    %cst_40 = arith.constant dense<0.000000e+00> : vector<8x8xf32>
    %62 = tpu.matmul %61, %50, %cst_40 {dimension_numbers = #tpu.dot_dimension_numbers<[1], [0], [0], [1], [0, 0, 1, 1], [], []>} : vector<8x8xbf16>, vector<8x8xbf16>, vector<8x8xf32> -> vector<8x8xf32>
    %63 = tpu.reciprocal %60 {approx = true} : vector<8x1xf32> -> vector<8x1xf32>
    %64 = vector.broadcast %63 : vector<8x1xf32> to vector<8x8xf32>
    %65 = arith.mulf %62, %64 : vector<8x8xf32>
    %c0_41 = arith.constant 0 : index
    %c0_42 = arith.constant 0 : index
    %c3 = arith.constant 3 : index
    %c0_43 = arith.constant 0 : index
    %66 = vector.load %arg1[%c0_41, %c0_42, %c3, %c0_43] : memref<8x1x12x8xbf16, #tpu.memory_space<vmem>>, vector<8x1x1x8xbf16>
    %67 = vector.shape_cast %66 : vector<8x1x1x8xbf16> to vector<8x8xbf16>
    %c0_44 = arith.constant 0 : index
    %c0_45 = arith.constant 0 : index
    %c7 = arith.constant 7 : index
    %c0_46 = arith.constant 0 : index
    %68 = vector.load %arg1[%c0_44, %c0_45, %c7, %c0_46] : memref<8x1x12x8xbf16, #tpu.memory_space<vmem>>, vector<8x1x1x8xbf16>
    %69 = vector.shape_cast %68 : vector<8x1x1x8xbf16> to vector<8x8xbf16>
    %c0_47 = arith.constant 0 : index
    %c0_48 = arith.constant 0 : index
    %c11 = arith.constant 11 : index
    %c0_49 = arith.constant 0 : index
    %70 = vector.load %arg1[%c0_47, %c0_48, %c11, %c0_49] : memref<8x1x12x8xbf16, #tpu.memory_space<vmem>>, vector<8x1x1x8xbf16>
    %71 = vector.shape_cast %70 : vector<8x1x1x8xbf16> to vector<8x8xbf16>
    %cst_50 = arith.constant dense<0.000000e+00> : vector<8x8xf32>
    %72 = tpu.matmul %67, %69, %cst_50 {dimension_numbers = #tpu.dot_dimension_numbers<[1], [1], [0], [0], [0, 0, 1, 0], [], []>} : vector<8x8xbf16>, vector<8x8xbf16>, vector<8x8xf32> -> vector<8x8xf32>
    %cst_51 = arith.constant -1.000000e+30 : f32
    %73 = vector.broadcast %cst_51 : f32 to vector<8x8xf32>
    %74 = arith.select %2, %73, %72 : vector<8x8xi1>, vector<8x8xf32>
    %cst_52 = arith.constant dense<0xFF800000> : vector<8xf32>
    %75 = vector.multi_reduction <maximumf>, %74, %cst_52 [1] : vector<8x8xf32> to vector<8xf32>
    %76 = vector.shape_cast %75 : vector<8xf32> to vector<8x1xf32>
    %77 = vector.broadcast %76 : vector<8x1xf32> to vector<8x8xf32>
    %78 = arith.subf %74, %77 : vector<8x8xf32>
    %79 = math.exp %78 : vector<8x8xf32>
    %cst_53 = arith.constant dense<0.000000e+00> : vector<8xf32>
    %80 = vector.multi_reduction <add>, %79, %cst_53 [1] : vector<8x8xf32> to vector<8xf32>
    %81 = vector.shape_cast %80 : vector<8xf32> to vector<8x1xf32>
    %82 = arith.truncf %79 : vector<8x8xf32> to vector<8x8xbf16>
    %cst_54 = arith.constant dense<0.000000e+00> : vector<8x8xf32>
    %83 = tpu.matmul %82, %71, %cst_54 {dimension_numbers = #tpu.dot_dimension_numbers<[1], [0], [0], [1], [0, 0, 1, 1], [], []>} : vector<8x8xbf16>, vector<8x8xbf16>, vector<8x8xf32> -> vector<8x8xf32>
    %84 = tpu.reciprocal %81 {approx = true} : vector<8x1xf32> -> vector<8x1xf32>
    %85 = vector.broadcast %84 : vector<8x1xf32> to vector<8x8xf32>
    %86 = arith.mulf %83, %85 : vector<8x8xf32>
    %87 = tpu.concatenate %23, %44, %65, %86 in 1 : vector<8x8xf32>, vector<8x8xf32>, vector<8x8xf32>, vector<8x8xf32> -> vector<8x32xf32>
    %88 = arith.truncf %87 : vector<8x32xf32> to vector<8x32xbf16>
    %c0_55 = arith.constant 0 : index
    %c0_56 = arith.constant 0 : index
    %c0_57 = arith.constant 0 : index
    %89 = vector.load %arg2[%c0_55, %c0_56, %c0_57] : memref<1x8x32xbf16, #tpu.memory_space<vmem>>, vector<1x8x32xbf16>
    %90 = vector.shape_cast %89 : vector<1x8x32xbf16> to vector<8x32xbf16>
    %91 = vector.shape_cast %88 : vector<8x32xbf16> to vector<1x8x32xbf16>
    tpu.vector_store %arg2[%c0_55, %c0_56, %c0_57], %91 {strides = array<i32>} : memref<1x8x32xbf16, #tpu.memory_space<vmem>>, vector<1x8x32xbf16>,
    return
  }
  func.func @transform_0(%arg0: i32) -> (i32, i32, i32, i32) {
    %c0_i32 = arith.constant 0 : i32
    %c0_i32_0 = arith.constant 0 : i32
    %c0_i32_1 = arith.constant 0 : i32
    %c0_i32_2 = arith.constant 0 : i32
    return %c0_i32, %arg0, %c0_i32_0, %c0_i32_1 : i32, i32, i32, i32
  }
  func.func @transform_1(%arg0: i32) -> (i32, i32, i32) {
    %c0_i32 = arith.constant 0 : i32
    %c0_i32_0 = arith.constant 0 : i32
    %c0_i32_1 = arith.constant 0 : i32
    return %arg0, %c0_i32, %c0_i32_0 : i32, i32, i32
  }
}

module attributes {stable_mosaic.version = 11 : i64} {
  func.func @_linear_kernel(%arg0: i32, %arg1: i32, %arg2: i32, %arg3: memref<16x32xf32, #tpu.memory_space<vmem>>, %arg4: memref<32x32xbf16, #tpu.memory_space<vmem>>, %arg5: memref<1x32xf32, #tpu.memory_space<vmem>>, %arg6: memref<16x32xbf16, #tpu.memory_space<vmem>>, %arg7: memref<16x32xf32, #tpu.memory_space<vmem>>) attributes {dimension_semantics = [#tpu.dimension_semantics<parallel>, #tpu.dimension_semantics<parallel>, #tpu.dimension_semantics<arbitrary>], iteration_bounds = array<i64: 1, 1, 1>, scalar_prefetch = 0 : i64, scratch_operands = 1 : i64, tpu.core_type = #tpu.core_type<tc>, window_params = [{transform_indices = @transform_0, window_bounds = array<i64: 16, 32>}, {transform_indices = @transform_1, window_bounds = array<i64: 32, 32>}, {transform_indices = @transform_2, window_bounds = array<i64: 1, 32>}, {transform_indices = @transform_3, window_bounds = array<i64: 16, 32>}]} {
    %c0_i32 = arith.constant 0 : i32
    %0 = arith.cmpi eq, %arg2, %c0_i32 : i32
    %1 = arith.extui %0 : i1 to i32
    %c0_i32_0 = arith.constant 0 : i32
    %2 = arith.cmpi ne, %1, %c0_i32_0 : i32
    scf.if %2 {
      %cst_10 = arith.constant 0.000000e+00 : f32
      %13 = vector.broadcast %cst_10 : f32 to vector<16x32xf32>
      %c0_11 = arith.constant 0 : index
      %c0_12 = arith.constant 0 : index
      %14 = vector.load %arg7[%c0_11, %c0_12] : memref<16x32xf32, #tpu.memory_space<vmem>>, vector<16x32xf32>
      tpu.vector_store %arg7[%c0_11, %c0_12], %13 {strides = array<i32>} : memref<16x32xf32, #tpu.memory_space<vmem>>, vector<16x32xf32>,
    } else {
    }
    %c0 = arith.constant 0 : index
    %c0_1 = arith.constant 0 : index
    %3 = vector.load %arg7[%c0, %c0_1] : memref<16x32xf32, #tpu.memory_space<vmem>>, vector<16x32xf32>
    %c0_2 = arith.constant 0 : index
    %c0_3 = arith.constant 0 : index
    %4 = vector.load %arg3[%c0_2, %c0_3] : memref<16x32xf32, #tpu.memory_space<vmem>>, vector<16x32xf32>
    %5 = arith.truncf %4 : vector<16x32xf32> to vector<16x32xbf16>
    %c0_4 = arith.constant 0 : index
    %c0_5 = arith.constant 0 : index
    %6 = vector.load %arg4[%c0_4, %c0_5] : memref<32x32xbf16, #tpu.memory_space<vmem>>, vector<32x32xbf16>
    %cst = arith.constant dense<0.000000e+00> : vector<16x32xf32>
    %7 = tpu.matmul %5, %6, %cst {dimension_numbers = #tpu.dot_dimension_numbers<[1], [0], [0], [1], [0, 0, 1, 1], [], []>} : vector<16x32xbf16>, vector<32x32xbf16>, vector<16x32xf32> -> vector<16x32xf32>
    %8 = arith.addf %3, %7 : vector<16x32xf32>
    %c0_6 = arith.constant 0 : index
    %c0_7 = arith.constant 0 : index
    %9 = vector.load %arg7[%c0_6, %c0_7] : memref<16x32xf32, #tpu.memory_space<vmem>>, vector<16x32xf32>
    tpu.vector_store %arg7[%c0_6, %c0_7], %8 {strides = array<i32>} : memref<16x32xf32, #tpu.memory_space<vmem>>, vector<16x32xf32>,
    %c0_i32_8 = arith.constant 0 : i32
    %10 = arith.cmpi eq, %arg2, %c0_i32_8 : i32
    %11 = arith.extui %10 : i1 to i32
    %c0_i32_9 = arith.constant 0 : i32
    %12 = arith.cmpi ne, %11, %c0_i32_9 : i32
    scf.if %12 {
      %c0_10 = arith.constant 0 : index
      %c0_11 = arith.constant 0 : index
      %13 = vector.load %arg7[%c0_10, %c0_11] : memref<16x32xf32, #tpu.memory_space<vmem>>, vector<16x32xf32>
      %c0_12 = arith.constant 0 : index
      %c0_13 = arith.constant 0 : index
      %14 = vector.load %arg5[%c0_12, %c0_13] : memref<1x32xf32, #tpu.memory_space<vmem>>, vector<1x32xf32>
      %15 = vector.broadcast %14 : vector<1x32xf32> to vector<16x32xf32>
      %16 = arith.addf %13, %15 : vector<16x32xf32>
      %17 = arith.truncf %16 : vector<16x32xf32> to vector<16x32xbf16>
      %c0_14 = arith.constant 0 : index
      %c0_15 = arith.constant 0 : index
      %18 = vector.load %arg6[%c0_14, %c0_15] : memref<16x32xbf16, #tpu.memory_space<vmem>>, vector<16x32xbf16>
      tpu.vector_store %arg6[%c0_14, %c0_15], %17 {strides = array<i32>} : memref<16x32xbf16, #tpu.memory_space<vmem>>, vector<16x32xbf16>,
    } else {
    }
    return
  }
  func.func @transform_0(%arg0: i32, %arg1: i32, %arg2: i32) -> (i32, i32) {
    %c0_i32 = arith.constant 0 : i32
    return %arg0, %arg2 : i32, i32
  }
  func.func @transform_1(%arg0: i32, %arg1: i32, %arg2: i32) -> (i32, i32) {
    %c0_i32 = arith.constant 0 : i32
    return %arg2, %arg1 : i32, i32
  }
  func.func @transform_2(%arg0: i32, %arg1: i32, %arg2: i32) -> (i32, i32) {
    %c0_i32 = arith.constant 0 : i32
    %c0_i32_0 = arith.constant 0 : i32
    return %c0_i32, %arg1 : i32, i32
  }
  func.func @transform_3(%arg0: i32, %arg1: i32, %arg2: i32) -> (i32, i32) {
    %c0_i32 = arith.constant 0 : i32
    return %arg0, %arg1 : i32, i32
  }
}

module attributes {stable_mosaic.version = 11 : i64} {
  func.func @_linear_kernel(%arg0: i32, %arg1: i32, %arg2: i32, %arg3: memref<16x32xbf16, #tpu.memory_space<vmem>>, %arg4: memref<32x32xbf16, #tpu.memory_space<vmem>>, %arg5: memref<1x32xf32, #tpu.memory_space<vmem>>, %arg6: memref<16x32xf32, #tpu.memory_space<vmem>>, %arg7: memref<1x32xf32, #tpu.memory_space<vmem>>, %arg8: memref<1x32xf32, #tpu.memory_space<vmem>>, %arg9: memref<16x32xf32, #tpu.memory_space<vmem>>, %arg10: memref<16x32xf32, #tpu.memory_space<vmem>>) attributes {dimension_semantics = [#tpu.dimension_semantics<parallel>, #tpu.dimension_semantics<parallel>, #tpu.dimension_semantics<arbitrary>], iteration_bounds = array<i64: 1, 1, 1>, scalar_prefetch = 0 : i64, scratch_operands = 1 : i64, tpu.core_type = #tpu.core_type<tc>, window_params = [{transform_indices = @transform_0, window_bounds = array<i64: 16, 32>}, {transform_indices = @transform_1, window_bounds = array<i64: 32, 32>}, {transform_indices = @transform_2, window_bounds = array<i64: 1, 32>}, {transform_indices = @transform_3, window_bounds = array<i64: 16, 32>}, {transform_indices = @transform_4, window_bounds = array<i64: 1, 32>}, {transform_indices = @transform_5, window_bounds = array<i64: 1, 32>}, {transform_indices = @transform_6, window_bounds = array<i64: 16, 32>}]} {
    %c0_i32 = arith.constant 0 : i32
    %0 = arith.cmpi eq, %arg2, %c0_i32 : i32
    %1 = arith.extui %0 : i1 to i32
    %c0_i32_0 = arith.constant 0 : i32
    %2 = arith.cmpi ne, %1, %c0_i32_0 : i32
    scf.if %2 {
      %cst_10 = arith.constant 0.000000e+00 : f32
      %12 = vector.broadcast %cst_10 : f32 to vector<16x32xf32>
      %c0_11 = arith.constant 0 : index
      %c0_12 = arith.constant 0 : index
      %13 = vector.load %arg10[%c0_11, %c0_12] : memref<16x32xf32, #tpu.memory_space<vmem>>, vector<16x32xf32>
      tpu.vector_store %arg10[%c0_11, %c0_12], %12 {strides = array<i32>} : memref<16x32xf32, #tpu.memory_space<vmem>>, vector<16x32xf32>,
    } else {
    }
    %c0 = arith.constant 0 : index
    %c0_1 = arith.constant 0 : index
    %3 = vector.load %arg10[%c0, %c0_1] : memref<16x32xf32, #tpu.memory_space<vmem>>, vector<16x32xf32>
    %c0_2 = arith.constant 0 : index
    %c0_3 = arith.constant 0 : index
    %4 = vector.load %arg3[%c0_2, %c0_3] : memref<16x32xbf16, #tpu.memory_space<vmem>>, vector<16x32xbf16>
    %c0_4 = arith.constant 0 : index
    %c0_5 = arith.constant 0 : index
    %5 = vector.load %arg4[%c0_4, %c0_5] : memref<32x32xbf16, #tpu.memory_space<vmem>>, vector<32x32xbf16>
    %cst = arith.constant dense<0.000000e+00> : vector<16x32xf32>
    %6 = tpu.matmul %4, %5, %cst {dimension_numbers = #tpu.dot_dimension_numbers<[1], [0], [0], [1], [0, 0, 1, 1], [], []>} : vector<16x32xbf16>, vector<32x32xbf16>, vector<16x32xf32> -> vector<16x32xf32>
    %7 = arith.addf %3, %6 : vector<16x32xf32>
    %c0_6 = arith.constant 0 : index
    %c0_7 = arith.constant 0 : index
    %8 = vector.load %arg10[%c0_6, %c0_7] : memref<16x32xf32, #tpu.memory_space<vmem>>, vector<16x32xf32>
    tpu.vector_store %arg10[%c0_6, %c0_7], %7 {strides = array<i32>} : memref<16x32xf32, #tpu.memory_space<vmem>>, vector<16x32xf32>,
    %c0_i32_8 = arith.constant 0 : i32
    %9 = arith.cmpi eq, %arg2, %c0_i32_8 : i32
    %10 = arith.extui %9 : i1 to i32
    %c0_i32_9 = arith.constant 0 : i32
    %11 = arith.cmpi ne, %10, %c0_i32_9 : i32
    scf.if %11 {
      %c0_10 = arith.constant 0 : index
      %c0_11 = arith.constant 0 : index
      %12 = vector.load %arg10[%c0_10, %c0_11] : memref<16x32xf32, #tpu.memory_space<vmem>>, vector<16x32xf32>
      %c0_12 = arith.constant 0 : index
      %c0_13 = arith.constant 0 : index
      %13 = vector.load %arg5[%c0_12, %c0_13] : memref<1x32xf32, #tpu.memory_space<vmem>>, vector<1x32xf32>
      %14 = vector.broadcast %13 : vector<1x32xf32> to vector<16x32xf32>
      %15 = arith.addf %12, %14 : vector<16x32xf32>
      %c0_14 = arith.constant 0 : index
      %c0_15 = arith.constant 0 : index
      %16 = vector.load %arg6[%c0_14, %c0_15] : memref<16x32xf32, #tpu.memory_space<vmem>>, vector<16x32xf32>
      %17 = arith.addf %15, %16 : vector<16x32xf32>
      %cst_16 = arith.constant dense<0.000000e+00> : vector<16xf32>
      %18 = vector.multi_reduction <add>, %17, %cst_16 [1] : vector<16x32xf32> to vector<16xf32>
      %19 = vector.shape_cast %18 : vector<16xf32> to vector<16x1xf32>
      %cst_17 = arith.constant 3.200000e+01 : f32
      %20 = vector.broadcast %cst_17 : f32 to vector<16x1xf32>
      %21 = arith.divf %19, %20 : vector<16x1xf32>
      %22 = vector.broadcast %21 : vector<16x1xf32> to vector<16x32xf32>
      %23 = arith.subf %17, %22 : vector<16x32xf32>
      %24 = arith.mulf %23, %23 : vector<16x32xf32>
      %cst_18 = arith.constant dense<0.000000e+00> : vector<16xf32>
      %25 = vector.multi_reduction <add>, %24, %cst_18 [1] : vector<16x32xf32> to vector<16xf32>
      %26 = vector.shape_cast %25 : vector<16xf32> to vector<16x1xf32>
      %cst_19 = arith.constant 3.200000e+01 : f32
      %27 = vector.broadcast %cst_19 : f32 to vector<16x1xf32>
      %28 = arith.divf %26, %27 : vector<16x1xf32>
      %29 = vector.broadcast %21 : vector<16x1xf32> to vector<16x32xf32>
      %30 = arith.subf %17, %29 : vector<16x32xf32>
      %cst_20 = arith.constant 9.99999974E-6 : f32
      %31 = vector.broadcast %cst_20 : f32 to vector<16x1xf32>
      %32 = arith.addf %28, %31 : vector<16x1xf32>
      %33 = math.rsqrt %32 : vector<16x1xf32>
      %34 = vector.broadcast %33 : vector<16x1xf32> to vector<16x32xf32>
      %35 = arith.mulf %30, %34 : vector<16x32xf32>
      %c0_21 = arith.constant 0 : index
      %c0_22 = arith.constant 0 : index
      %36 = vector.load %arg7[%c0_21, %c0_22] : memref<1x32xf32, #tpu.memory_space<vmem>>, vector<1x32xf32>
      %37 = vector.broadcast %36 : vector<1x32xf32> to vector<16x32xf32>
      %38 = arith.mulf %35, %37 : vector<16x32xf32>
      %c0_23 = arith.constant 0 : index
      %c0_24 = arith.constant 0 : index
      %39 = vector.load %arg8[%c0_23, %c0_24] : memref<1x32xf32, #tpu.memory_space<vmem>>, vector<1x32xf32>
      %40 = vector.broadcast %39 : vector<1x32xf32> to vector<16x32xf32>
      %41 = arith.addf %38, %40 : vector<16x32xf32>
      %c0_25 = arith.constant 0 : index
      %c0_26 = arith.constant 0 : index
      %42 = vector.load %arg9[%c0_25, %c0_26] : memref<16x32xf32, #tpu.memory_space<vmem>>, vector<16x32xf32>
      tpu.vector_store %arg9[%c0_25, %c0_26], %41 {strides = array<i32>} : memref<16x32xf32, #tpu.memory_space<vmem>>, vector<16x32xf32>,
    } else {
    }
    return
  }
  func.func @transform_0(%arg0: i32, %arg1: i32, %arg2: i32) -> (i32, i32) {
    %c0_i32 = arith.constant 0 : i32
    return %arg0, %arg2 : i32, i32
  }
  func.func @transform_1(%arg0: i32, %arg1: i32, %arg2: i32) -> (i32, i32) {
    %c0_i32 = arith.constant 0 : i32
    return %arg2, %arg1 : i32, i32
  }
  func.func @transform_2(%arg0: i32, %arg1: i32, %arg2: i32) -> (i32, i32) {
    %c0_i32 = arith.constant 0 : i32
    %c0_i32_0 = arith.constant 0 : i32
    return %c0_i32, %arg1 : i32, i32
  }
  func.func @transform_3(%arg0: i32, %arg1: i32, %arg2: i32) -> (i32, i32) {
    %c0_i32 = arith.constant 0 : i32
    return %arg0, %arg1 : i32, i32
  }
  func.func @transform_4(%arg0: i32, %arg1: i32, %arg2: i32) -> (i32, i32) {
    %c0_i32 = arith.constant 0 : i32
    %c0_i32_0 = arith.constant 0 : i32
    return %c0_i32, %arg1 : i32, i32
  }
  func.func @transform_5(%arg0: i32, %arg1: i32, %arg2: i32) -> (i32, i32) {
    %c0_i32 = arith.constant 0 : i32
    %c0_i32_0 = arith.constant 0 : i32
    return %c0_i32, %arg1 : i32, i32
  }
  func.func @transform_6(%arg0: i32, %arg1: i32, %arg2: i32) -> (i32, i32) {
    %c0_i32 = arith.constant 0 : i32
    return %arg0, %arg1 : i32, i32
  }
}

module attributes {stable_mosaic.version = 11 : i64} {
  func.func @_linear_kernel(%arg0: i32, %arg1: i32, %arg2: i32, %arg3: memref<32x32xf32, #tpu.memory_space<vmem>>, %arg4: memref<32x64xbf16, #tpu.memory_space<vmem>>, %arg5: memref<1x64xf32, #tpu.memory_space<vmem>>, %arg6: memref<32x64xbf16, #tpu.memory_space<vmem>>, %arg7: memref<32x64xf32, #tpu.memory_space<vmem>>) attributes {dimension_semantics = [#tpu.dimension_semantics<parallel>, #tpu.dimension_semantics<parallel>, #tpu.dimension_semantics<arbitrary>], iteration_bounds = array<i64: 1, 1, 1>, scalar_prefetch = 0 : i64, scratch_operands = 1 : i64, tpu.core_type = #tpu.core_type<tc>, window_params = [{transform_indices = @transform_0, window_bounds = array<i64: 32, 32>}, {transform_indices = @transform_1, window_bounds = array<i64: 32, 64>}, {transform_indices = @transform_2, window_bounds = array<i64: 1, 64>}, {transform_indices = @transform_3, window_bounds = array<i64: 32, 64>}]} {
    %c0_i32 = arith.constant 0 : i32
    %0 = arith.cmpi eq, %arg2, %c0_i32 : i32
    %1 = arith.extui %0 : i1 to i32
    %c0_i32_0 = arith.constant 0 : i32
    %2 = arith.cmpi ne, %1, %c0_i32_0 : i32
    scf.if %2 {
      %cst_10 = arith.constant 0.000000e+00 : f32
      %13 = vector.broadcast %cst_10 : f32 to vector<32x64xf32>
      %c0_11 = arith.constant 0 : index
      %c0_12 = arith.constant 0 : index
      %14 = vector.load %arg7[%c0_11, %c0_12] : memref<32x64xf32, #tpu.memory_space<vmem>>, vector<32x64xf32>
      tpu.vector_store %arg7[%c0_11, %c0_12], %13 {strides = array<i32>} : memref<32x64xf32, #tpu.memory_space<vmem>>, vector<32x64xf32>,
    } else {
    }
    %c0 = arith.constant 0 : index
    %c0_1 = arith.constant 0 : index
    %3 = vector.load %arg7[%c0, %c0_1] : memref<32x64xf32, #tpu.memory_space<vmem>>, vector<32x64xf32>
    %c0_2 = arith.constant 0 : index
    %c0_3 = arith.constant 0 : index
    %4 = vector.load %arg3[%c0_2, %c0_3] : memref<32x32xf32, #tpu.memory_space<vmem>>, vector<32x32xf32>
    %5 = arith.truncf %4 : vector<32x32xf32> to vector<32x32xbf16>
    %c0_4 = arith.constant 0 : index
    %c0_5 = arith.constant 0 : index
    %6 = vector.load %arg4[%c0_4, %c0_5] : memref<32x64xbf16, #tpu.memory_space<vmem>>, vector<32x64xbf16>
    %cst = arith.constant dense<0.000000e+00> : vector<32x64xf32>
    %7 = tpu.matmul %5, %6, %cst {dimension_numbers = #tpu.dot_dimension_numbers<[1], [0], [0], [1], [0, 0, 1, 1], [], []>} : vector<32x32xbf16>, vector<32x64xbf16>, vector<32x64xf32> -> vector<32x64xf32>
    %8 = arith.addf %3, %7 : vector<32x64xf32>
    %c0_6 = arith.constant 0 : index
    %c0_7 = arith.constant 0 : index
    %9 = vector.load %arg7[%c0_6, %c0_7] : memref<32x64xf32, #tpu.memory_space<vmem>>, vector<32x64xf32>
    tpu.vector_store %arg7[%c0_6, %c0_7], %8 {strides = array<i32>} : memref<32x64xf32, #tpu.memory_space<vmem>>, vector<32x64xf32>,
    %c0_i32_8 = arith.constant 0 : i32
    %10 = arith.cmpi eq, %arg2, %c0_i32_8 : i32
    %11 = arith.extui %10 : i1 to i32
    %c0_i32_9 = arith.constant 0 : i32
    %12 = arith.cmpi ne, %11, %c0_i32_9 : i32
    scf.if %12 {
      %c0_10 = arith.constant 0 : index
      %c0_11 = arith.constant 0 : index
      %13 = vector.load %arg7[%c0_10, %c0_11] : memref<32x64xf32, #tpu.memory_space<vmem>>, vector<32x64xf32>
      %c0_12 = arith.constant 0 : index
      %c0_13 = arith.constant 0 : index
      %14 = vector.load %arg5[%c0_12, %c0_13] : memref<1x64xf32, #tpu.memory_space<vmem>>, vector<1x64xf32>
      %15 = vector.broadcast %14 : vector<1x64xf32> to vector<32x64xf32>
      %16 = arith.addf %13, %15 : vector<32x64xf32>
      %17 = arith.truncf %16 : vector<32x64xf32> to vector<32x64xbf16>
      %c0_14 = arith.constant 0 : index
      %c0_15 = arith.constant 0 : index
      %18 = vector.load %arg6[%c0_14, %c0_15] : memref<32x64xbf16, #tpu.memory_space<vmem>>, vector<32x64xbf16>
      tpu.vector_store %arg6[%c0_14, %c0_15], %17 {strides = array<i32>} : memref<32x64xbf16, #tpu.memory_space<vmem>>, vector<32x64xbf16>,
    } else {
    }
    return
  }
  func.func @transform_0(%arg0: i32, %arg1: i32, %arg2: i32) -> (i32, i32) {
    %c0_i32 = arith.constant 0 : i32
    return %arg0, %arg2 : i32, i32
  }
  func.func @transform_1(%arg0: i32, %arg1: i32, %arg2: i32) -> (i32, i32) {
    %c0_i32 = arith.constant 0 : i32
    return %arg2, %arg1 : i32, i32
  }
  func.func @transform_2(%arg0: i32, %arg1: i32, %arg2: i32) -> (i32, i32) {
    %c0_i32 = arith.constant 0 : i32
    %c0_i32_0 = arith.constant 0 : i32
    return %c0_i32, %arg1 : i32, i32
  }
  func.func @transform_3(%arg0: i32, %arg1: i32, %arg2: i32) -> (i32, i32) {
    %c0_i32 = arith.constant 0 : i32
    return %arg0, %arg1 : i32, i32
  }
}

module attributes {stable_mosaic.version = 11 : i64} {
  func.func @_cross_attn_kernel(%arg0: i32, %arg1: memref<8x1x4x8xbf16, #tpu.memory_space<vmem>>, %arg2: memref<16x1x8x8xbf16, #tpu.memory_space<vmem>>, %arg3: memref<1x1x16xf32, #tpu.memory_space<vmem>>, %arg4: memref<1x8x32xbf16, #tpu.memory_space<vmem>>, %arg5: memref<1x8x16xf32, #tpu.memory_space<vmem>>) attributes {dimension_semantics = [#tpu.dimension_semantics<parallel>], iteration_bounds = array<i64: 2>, scalar_prefetch = 0 : i64, scratch_operands = 0 : i64, tpu.core_type = #tpu.core_type<tc>, window_params = [{transform_indices = @transform_0, window_bounds = array<i64: 8, 1, 4, 8>}, {transform_indices = @transform_1, window_bounds = array<i64: 16, 1, 8, 8>}, {transform_indices = @transform_2, window_bounds = array<i64: 1, 1, 16>}, {transform_indices = @transform_3, window_bounds = array<i64: 1, 8, 32>}, {transform_indices = @transform_4, window_bounds = array<i64: 1, 8, 16>}]} {
    %c0 = arith.constant 0 : index
    %c0_0 = arith.constant 0 : index
    %c0_1 = arith.constant 0 : index
    %0 = vector.load %arg3[%c0, %c0_0, %c0_1] : memref<1x1x16xf32, #tpu.memory_space<vmem>>, vector<1x1x16xf32>
    %1 = vector.shape_cast %0 : vector<1x1x16xf32> to vector<1x16xf32>
    %c0_2 = arith.constant 0 : index
    %c0_3 = arith.constant 0 : index
    %c0_4 = arith.constant 0 : index
    %c0_5 = arith.constant 0 : index
    %2 = vector.load %arg1[%c0_2, %c0_3, %c0_4, %c0_5] : memref<8x1x4x8xbf16, #tpu.memory_space<vmem>>, vector<8x1x1x8xbf16>
    %3 = vector.shape_cast %2 : vector<8x1x1x8xbf16> to vector<8x8xbf16>
    %c0_6 = arith.constant 0 : index
    %c0_7 = arith.constant 0 : index
    %c0_8 = arith.constant 0 : index
    %c0_9 = arith.constant 0 : index
    %4 = vector.load %arg2[%c0_6, %c0_7, %c0_8, %c0_9] : memref<16x1x8x8xbf16, #tpu.memory_space<vmem>>, vector<16x1x1x8xbf16>
    %5 = vector.shape_cast %4 : vector<16x1x1x8xbf16> to vector<16x8xbf16>
    %c0_10 = arith.constant 0 : index
    %c0_11 = arith.constant 0 : index
    %c4 = arith.constant 4 : index
    %c0_12 = arith.constant 0 : index
    %6 = vector.load %arg2[%c0_10, %c0_11, %c4, %c0_12] : memref<16x1x8x8xbf16, #tpu.memory_space<vmem>>, vector<16x1x1x8xbf16>
    %7 = vector.shape_cast %6 : vector<16x1x1x8xbf16> to vector<16x8xbf16>
    %cst = arith.constant dense<0.000000e+00> : vector<8x16xf32>
    %8 = tpu.matmul %3, %5, %cst {dimension_numbers = #tpu.dot_dimension_numbers<[1], [1], [0], [0], [0, 0, 1, 0], [], []>} : vector<8x8xbf16>, vector<16x8xbf16>, vector<8x16xf32> -> vector<8x16xf32>
    %9 = vector.broadcast %1 : vector<1x16xf32> to vector<8x16xf32>
    %10 = arith.addf %8, %9 : vector<8x16xf32>
    %cst_13 = arith.constant dense<0xFF800000> : vector<8xf32>
    %11 = vector.multi_reduction <maximumf>, %10, %cst_13 [1] : vector<8x16xf32> to vector<8xf32>
    %12 = vector.shape_cast %11 : vector<8xf32> to vector<8x1xf32>
    %13 = vector.broadcast %12 : vector<8x1xf32> to vector<8x16xf32>
    %14 = arith.subf %10, %13 : vector<8x16xf32>
    %15 = math.exp %14 : vector<8x16xf32>
    %cst_14 = arith.constant dense<0.000000e+00> : vector<8xf32>
    %16 = vector.multi_reduction <add>, %15, %cst_14 [1] : vector<8x16xf32> to vector<8xf32>
    %17 = vector.shape_cast %16 : vector<8xf32> to vector<8x1xf32>
    %cst_15 = arith.constant 1.000000e+00 : f32
    %18 = vector.broadcast %cst_15 : f32 to vector<8x1xf32>
    %19 = arith.divf %18, %17 : vector<8x1xf32>
    %20 = arith.truncf %15 : vector<8x16xf32> to vector<8x16xbf16>
    %cst_16 = arith.constant dense<0.000000e+00> : vector<8x8xf32>
    %21 = tpu.matmul %20, %7, %cst_16 {dimension_numbers = #tpu.dot_dimension_numbers<[1], [0], [0], [1], [0, 0, 1, 1], [], []>} : vector<8x16xbf16>, vector<16x8xbf16>, vector<8x8xf32> -> vector<8x8xf32>
    %22 = vector.broadcast %19 : vector<8x1xf32> to vector<8x8xf32>
    %23 = arith.mulf %21, %22 : vector<8x8xf32>
    %cst_17 = arith.constant 2.500000e-01 : f32
    %24 = vector.broadcast %cst_17 : f32 to vector<8x1xf32>
    %25 = arith.mulf %19, %24 : vector<8x1xf32>
    %26 = vector.broadcast %25 : vector<8x1xf32> to vector<8x16xf32>
    %27 = arith.mulf %15, %26 : vector<8x16xf32>
    %c0_18 = arith.constant 0 : index
    %c0_19 = arith.constant 0 : index
    %c0_20 = arith.constant 0 : index
    %28 = vector.load %arg5[%c0_18, %c0_19, %c0_20] : memref<1x8x16xf32, #tpu.memory_space<vmem>>, vector<1x8x16xf32>
    %29 = vector.shape_cast %28 : vector<1x8x16xf32> to vector<8x16xf32>
    %30 = vector.shape_cast %27 : vector<8x16xf32> to vector<1x8x16xf32>
    tpu.vector_store %arg5[%c0_18, %c0_19, %c0_20], %30 {strides = array<i32>} : memref<1x8x16xf32, #tpu.memory_space<vmem>>, vector<1x8x16xf32>,
    %c0_21 = arith.constant 0 : index
    %c0_22 = arith.constant 0 : index
    %c1 = arith.constant 1 : index
    %c0_23 = arith.constant 0 : index
    %31 = vector.load %arg1[%c0_21, %c0_22, %c1, %c0_23] : memref<8x1x4x8xbf16, #tpu.memory_space<vmem>>, vector<8x1x1x8xbf16>
    %32 = vector.shape_cast %31 : vector<8x1x1x8xbf16> to vector<8x8xbf16>
    %c0_24 = arith.constant 0 : index
    %c0_25 = arith.constant 0 : index
    %c1_26 = arith.constant 1 : index
    %c0_27 = arith.constant 0 : index
    %33 = vector.load %arg2[%c0_24, %c0_25, %c1_26, %c0_27] : memref<16x1x8x8xbf16, #tpu.memory_space<vmem>>, vector<16x1x1x8xbf16>
    %34 = vector.shape_cast %33 : vector<16x1x1x8xbf16> to vector<16x8xbf16>
    %c0_28 = arith.constant 0 : index
    %c0_29 = arith.constant 0 : index
    %c5 = arith.constant 5 : index
    %c0_30 = arith.constant 0 : index
    %35 = vector.load %arg2[%c0_28, %c0_29, %c5, %c0_30] : memref<16x1x8x8xbf16, #tpu.memory_space<vmem>>, vector<16x1x1x8xbf16>
    %36 = vector.shape_cast %35 : vector<16x1x1x8xbf16> to vector<16x8xbf16>
    %cst_31 = arith.constant dense<0.000000e+00> : vector<8x16xf32>
    %37 = tpu.matmul %32, %34, %cst_31 {dimension_numbers = #tpu.dot_dimension_numbers<[1], [1], [0], [0], [0, 0, 1, 0], [], []>} : vector<8x8xbf16>, vector<16x8xbf16>, vector<8x16xf32> -> vector<8x16xf32>
    %38 = vector.broadcast %1 : vector<1x16xf32> to vector<8x16xf32>
    %39 = arith.addf %37, %38 : vector<8x16xf32>
    %cst_32 = arith.constant dense<0xFF800000> : vector<8xf32>
    %40 = vector.multi_reduction <maximumf>, %39, %cst_32 [1] : vector<8x16xf32> to vector<8xf32>
    %41 = vector.shape_cast %40 : vector<8xf32> to vector<8x1xf32>
    %42 = vector.broadcast %41 : vector<8x1xf32> to vector<8x16xf32>
    %43 = arith.subf %39, %42 : vector<8x16xf32>
    %44 = math.exp %43 : vector<8x16xf32>
    %cst_33 = arith.constant dense<0.000000e+00> : vector<8xf32>
    %45 = vector.multi_reduction <add>, %44, %cst_33 [1] : vector<8x16xf32> to vector<8xf32>
    %46 = vector.shape_cast %45 : vector<8xf32> to vector<8x1xf32>
    %cst_34 = arith.constant 1.000000e+00 : f32
    %47 = vector.broadcast %cst_34 : f32 to vector<8x1xf32>
    %48 = arith.divf %47, %46 : vector<8x1xf32>
    %49 = arith.truncf %44 : vector<8x16xf32> to vector<8x16xbf16>
    %cst_35 = arith.constant dense<0.000000e+00> : vector<8x8xf32>
    %50 = tpu.matmul %49, %36, %cst_35 {dimension_numbers = #tpu.dot_dimension_numbers<[1], [0], [0], [1], [0, 0, 1, 1], [], []>} : vector<8x16xbf16>, vector<16x8xbf16>, vector<8x8xf32> -> vector<8x8xf32>
    %51 = vector.broadcast %48 : vector<8x1xf32> to vector<8x8xf32>
    %52 = arith.mulf %50, %51 : vector<8x8xf32>
    %cst_36 = arith.constant 2.500000e-01 : f32
    %53 = vector.broadcast %cst_36 : f32 to vector<8x1xf32>
    %54 = arith.mulf %48, %53 : vector<8x1xf32>
    %55 = vector.broadcast %54 : vector<8x1xf32> to vector<8x16xf32>
    %56 = arith.mulf %44, %55 : vector<8x16xf32>
    %c0_37 = arith.constant 0 : index
    %c0_38 = arith.constant 0 : index
    %c0_39 = arith.constant 0 : index
    %57 = vector.load %arg5[%c0_37, %c0_38, %c0_39] : memref<1x8x16xf32, #tpu.memory_space<vmem>>, vector<1x8x16xf32>
    %58 = vector.shape_cast %57 : vector<1x8x16xf32> to vector<8x16xf32>
    %59 = arith.addf %58, %56 : vector<8x16xf32>
    %c0_40 = arith.constant 0 : index
    %c0_41 = arith.constant 0 : index
    %c0_42 = arith.constant 0 : index
    %60 = vector.load %arg5[%c0_40, %c0_41, %c0_42] : memref<1x8x16xf32, #tpu.memory_space<vmem>>, vector<1x8x16xf32>
    %61 = vector.shape_cast %60 : vector<1x8x16xf32> to vector<8x16xf32>
    %62 = vector.shape_cast %59 : vector<8x16xf32> to vector<1x8x16xf32>
    tpu.vector_store %arg5[%c0_40, %c0_41, %c0_42], %62 {strides = array<i32>} : memref<1x8x16xf32, #tpu.memory_space<vmem>>, vector<1x8x16xf32>,
    %c0_43 = arith.constant 0 : index
    %c0_44 = arith.constant 0 : index
    %c2 = arith.constant 2 : index
    %c0_45 = arith.constant 0 : index
    %63 = vector.load %arg1[%c0_43, %c0_44, %c2, %c0_45] : memref<8x1x4x8xbf16, #tpu.memory_space<vmem>>, vector<8x1x1x8xbf16>
    %64 = vector.shape_cast %63 : vector<8x1x1x8xbf16> to vector<8x8xbf16>
    %c0_46 = arith.constant 0 : index
    %c0_47 = arith.constant 0 : index
    %c2_48 = arith.constant 2 : index
    %c0_49 = arith.constant 0 : index
    %65 = vector.load %arg2[%c0_46, %c0_47, %c2_48, %c0_49] : memref<16x1x8x8xbf16, #tpu.memory_space<vmem>>, vector<16x1x1x8xbf16>
    %66 = vector.shape_cast %65 : vector<16x1x1x8xbf16> to vector<16x8xbf16>
    %c0_50 = arith.constant 0 : index
    %c0_51 = arith.constant 0 : index
    %c6 = arith.constant 6 : index
    %c0_52 = arith.constant 0 : index
    %67 = vector.load %arg2[%c0_50, %c0_51, %c6, %c0_52] : memref<16x1x8x8xbf16, #tpu.memory_space<vmem>>, vector<16x1x1x8xbf16>
    %68 = vector.shape_cast %67 : vector<16x1x1x8xbf16> to vector<16x8xbf16>
    %cst_53 = arith.constant dense<0.000000e+00> : vector<8x16xf32>
    %69 = tpu.matmul %64, %66, %cst_53 {dimension_numbers = #tpu.dot_dimension_numbers<[1], [1], [0], [0], [0, 0, 1, 0], [], []>} : vector<8x8xbf16>, vector<16x8xbf16>, vector<8x16xf32> -> vector<8x16xf32>
    %70 = vector.broadcast %1 : vector<1x16xf32> to vector<8x16xf32>
    %71 = arith.addf %69, %70 : vector<8x16xf32>
    %cst_54 = arith.constant dense<0xFF800000> : vector<8xf32>
    %72 = vector.multi_reduction <maximumf>, %71, %cst_54 [1] : vector<8x16xf32> to vector<8xf32>
    %73 = vector.shape_cast %72 : vector<8xf32> to vector<8x1xf32>
    %74 = vector.broadcast %73 : vector<8x1xf32> to vector<8x16xf32>
    %75 = arith.subf %71, %74 : vector<8x16xf32>
    %76 = math.exp %75 : vector<8x16xf32>
    %cst_55 = arith.constant dense<0.000000e+00> : vector<8xf32>
    %77 = vector.multi_reduction <add>, %76, %cst_55 [1] : vector<8x16xf32> to vector<8xf32>
    %78 = vector.shape_cast %77 : vector<8xf32> to vector<8x1xf32>
    %cst_56 = arith.constant 1.000000e+00 : f32
    %79 = vector.broadcast %cst_56 : f32 to vector<8x1xf32>
    %80 = arith.divf %79, %78 : vector<8x1xf32>
    %81 = arith.truncf %76 : vector<8x16xf32> to vector<8x16xbf16>
    %cst_57 = arith.constant dense<0.000000e+00> : vector<8x8xf32>
    %82 = tpu.matmul %81, %68, %cst_57 {dimension_numbers = #tpu.dot_dimension_numbers<[1], [0], [0], [1], [0, 0, 1, 1], [], []>} : vector<8x16xbf16>, vector<16x8xbf16>, vector<8x8xf32> -> vector<8x8xf32>
    %83 = vector.broadcast %80 : vector<8x1xf32> to vector<8x8xf32>
    %84 = arith.mulf %82, %83 : vector<8x8xf32>
    %cst_58 = arith.constant 2.500000e-01 : f32
    %85 = vector.broadcast %cst_58 : f32 to vector<8x1xf32>
    %86 = arith.mulf %80, %85 : vector<8x1xf32>
    %87 = vector.broadcast %86 : vector<8x1xf32> to vector<8x16xf32>
    %88 = arith.mulf %76, %87 : vector<8x16xf32>
    %c0_59 = arith.constant 0 : index
    %c0_60 = arith.constant 0 : index
    %c0_61 = arith.constant 0 : index
    %89 = vector.load %arg5[%c0_59, %c0_60, %c0_61] : memref<1x8x16xf32, #tpu.memory_space<vmem>>, vector<1x8x16xf32>
    %90 = vector.shape_cast %89 : vector<1x8x16xf32> to vector<8x16xf32>
    %91 = arith.addf %90, %88 : vector<8x16xf32>
    %c0_62 = arith.constant 0 : index
    %c0_63 = arith.constant 0 : index
    %c0_64 = arith.constant 0 : index
    %92 = vector.load %arg5[%c0_62, %c0_63, %c0_64] : memref<1x8x16xf32, #tpu.memory_space<vmem>>, vector<1x8x16xf32>
    %93 = vector.shape_cast %92 : vector<1x8x16xf32> to vector<8x16xf32>
    %94 = vector.shape_cast %91 : vector<8x16xf32> to vector<1x8x16xf32>
    tpu.vector_store %arg5[%c0_62, %c0_63, %c0_64], %94 {strides = array<i32>} : memref<1x8x16xf32, #tpu.memory_space<vmem>>, vector<1x8x16xf32>,
    %c0_65 = arith.constant 0 : index
    %c0_66 = arith.constant 0 : index
    %c3 = arith.constant 3 : index
    %c0_67 = arith.constant 0 : index
    %95 = vector.load %arg1[%c0_65, %c0_66, %c3, %c0_67] : memref<8x1x4x8xbf16, #tpu.memory_space<vmem>>, vector<8x1x1x8xbf16>
    %96 = vector.shape_cast %95 : vector<8x1x1x8xbf16> to vector<8x8xbf16>
    %c0_68 = arith.constant 0 : index
    %c0_69 = arith.constant 0 : index
    %c3_70 = arith.constant 3 : index
    %c0_71 = arith.constant 0 : index
    %97 = vector.load %arg2[%c0_68, %c0_69, %c3_70, %c0_71] : memref<16x1x8x8xbf16, #tpu.memory_space<vmem>>, vector<16x1x1x8xbf16>
    %98 = vector.shape_cast %97 : vector<16x1x1x8xbf16> to vector<16x8xbf16>
    %c0_72 = arith.constant 0 : index
    %c0_73 = arith.constant 0 : index
    %c7 = arith.constant 7 : index
    %c0_74 = arith.constant 0 : index
    %99 = vector.load %arg2[%c0_72, %c0_73, %c7, %c0_74] : memref<16x1x8x8xbf16, #tpu.memory_space<vmem>>, vector<16x1x1x8xbf16>
    %100 = vector.shape_cast %99 : vector<16x1x1x8xbf16> to vector<16x8xbf16>
    %cst_75 = arith.constant dense<0.000000e+00> : vector<8x16xf32>
    %101 = tpu.matmul %96, %98, %cst_75 {dimension_numbers = #tpu.dot_dimension_numbers<[1], [1], [0], [0], [0, 0, 1, 0], [], []>} : vector<8x8xbf16>, vector<16x8xbf16>, vector<8x16xf32> -> vector<8x16xf32>
    %102 = vector.broadcast %1 : vector<1x16xf32> to vector<8x16xf32>
    %103 = arith.addf %101, %102 : vector<8x16xf32>
    %cst_76 = arith.constant dense<0xFF800000> : vector<8xf32>
    %104 = vector.multi_reduction <maximumf>, %103, %cst_76 [1] : vector<8x16xf32> to vector<8xf32>
    %105 = vector.shape_cast %104 : vector<8xf32> to vector<8x1xf32>
    %106 = vector.broadcast %105 : vector<8x1xf32> to vector<8x16xf32>
    %107 = arith.subf %103, %106 : vector<8x16xf32>
    %108 = math.exp %107 : vector<8x16xf32>
    %cst_77 = arith.constant dense<0.000000e+00> : vector<8xf32>
    %109 = vector.multi_reduction <add>, %108, %cst_77 [1] : vector<8x16xf32> to vector<8xf32>
    %110 = vector.shape_cast %109 : vector<8xf32> to vector<8x1xf32>
    %cst_78 = arith.constant 1.000000e+00 : f32
    %111 = vector.broadcast %cst_78 : f32 to vector<8x1xf32>
    %112 = arith.divf %111, %110 : vector<8x1xf32>
    %113 = arith.truncf %108 : vector<8x16xf32> to vector<8x16xbf16>
    %cst_79 = arith.constant dense<0.000000e+00> : vector<8x8xf32>
    %114 = tpu.matmul %113, %100, %cst_79 {dimension_numbers = #tpu.dot_dimension_numbers<[1], [0], [0], [1], [0, 0, 1, 1], [], []>} : vector<8x16xbf16>, vector<16x8xbf16>, vector<8x8xf32> -> vector<8x8xf32>
    %115 = vector.broadcast %112 : vector<8x1xf32> to vector<8x8xf32>
    %116 = arith.mulf %114, %115 : vector<8x8xf32>
    %cst_80 = arith.constant 2.500000e-01 : f32
    %117 = vector.broadcast %cst_80 : f32 to vector<8x1xf32>
    %118 = arith.mulf %112, %117 : vector<8x1xf32>
    %119 = vector.broadcast %118 : vector<8x1xf32> to vector<8x16xf32>
    %120 = arith.mulf %108, %119 : vector<8x16xf32>
    %c0_81 = arith.constant 0 : index
    %c0_82 = arith.constant 0 : index
    %c0_83 = arith.constant 0 : index
    %121 = vector.load %arg5[%c0_81, %c0_82, %c0_83] : memref<1x8x16xf32, #tpu.memory_space<vmem>>, vector<1x8x16xf32>
    %122 = vector.shape_cast %121 : vector<1x8x16xf32> to vector<8x16xf32>
    %123 = arith.addf %122, %120 : vector<8x16xf32>
    %c0_84 = arith.constant 0 : index
    %c0_85 = arith.constant 0 : index
    %c0_86 = arith.constant 0 : index
    %124 = vector.load %arg5[%c0_84, %c0_85, %c0_86] : memref<1x8x16xf32, #tpu.memory_space<vmem>>, vector<1x8x16xf32>
    %125 = vector.shape_cast %124 : vector<1x8x16xf32> to vector<8x16xf32>
    %126 = vector.shape_cast %123 : vector<8x16xf32> to vector<1x8x16xf32>
    tpu.vector_store %arg5[%c0_84, %c0_85, %c0_86], %126 {strides = array<i32>} : memref<1x8x16xf32, #tpu.memory_space<vmem>>, vector<1x8x16xf32>,
    %127 = tpu.concatenate %23, %52, %84, %116 in 1 : vector<8x8xf32>, vector<8x8xf32>, vector<8x8xf32>, vector<8x8xf32> -> vector<8x32xf32>
    %128 = arith.truncf %127 : vector<8x32xf32> to vector<8x32xbf16>
    %c0_87 = arith.constant 0 : index
    %c0_88 = arith.constant 0 : index
    %c0_89 = arith.constant 0 : index
    %129 = vector.load %arg4[%c0_87, %c0_88, %c0_89] : memref<1x8x32xbf16, #tpu.memory_space<vmem>>, vector<1x8x32xbf16>
    %130 = vector.shape_cast %129 : vector<1x8x32xbf16> to vector<8x32xbf16>
    %131 = vector.shape_cast %128 : vector<8x32xbf16> to vector<1x8x32xbf16>
    tpu.vector_store %arg4[%c0_87, %c0_88, %c0_89], %131 {strides = array<i32>} : memref<1x8x32xbf16, #tpu.memory_space<vmem>>, vector<1x8x32xbf16>,
    return
  }
  func.func @transform_0(%arg0: i32) -> (i32, i32, i32, i32) {
    %c0_i32 = arith.constant 0 : i32
    %c0_i32_0 = arith.constant 0 : i32
    %c0_i32_1 = arith.constant 0 : i32
    %c0_i32_2 = arith.constant 0 : i32
    return %c0_i32, %arg0, %c0_i32_0, %c0_i32_1 : i32, i32, i32, i32
  }
  func.func @transform_1(%arg0: i32) -> (i32, i32, i32, i32) {
    %c0_i32 = arith.constant 0 : i32
    %c0_i32_0 = arith.constant 0 : i32
    %c0_i32_1 = arith.constant 0 : i32
    %c0_i32_2 = arith.constant 0 : i32
    return %c0_i32, %arg0, %c0_i32_0, %c0_i32_1 : i32, i32, i32, i32
  }
  func.func @transform_2(%arg0: i32) -> (i32, i32, i32) {
    %c0_i32 = arith.constant 0 : i32
    %c0_i32_0 = arith.constant 0 : i32
    %c0_i32_1 = arith.constant 0 : i32
    return %arg0, %c0_i32, %c0_i32_0 : i32, i32, i32
  }
  func.func @transform_3(%arg0: i32) -> (i32, i32, i32) {
    %c0_i32 = arith.constant 0 : i32
    %c0_i32_0 = arith.constant 0 : i32
    %c0_i32_1 = arith.constant 0 : i32
    return %arg0, %c0_i32, %c0_i32_0 : i32, i32, i32
  }
  func.func @transform_4(%arg0: i32) -> (i32, i32, i32) {
    %c0_i32 = arith.constant 0 : i32
    %c0_i32_0 = arith.constant 0 : i32
    %c0_i32_1 = arith.constant 0 : i32
    return %arg0, %c0_i32, %c0_i32_0 : i32, i32, i32
  }
}

module attributes {stable_mosaic.version = 11 : i64} {
  func.func @_linear_kernel(%arg0: i32, %arg1: i32, %arg2: i32, %arg3: memref<16x32xf32, #tpu.memory_space<vmem>>, %arg4: memref<32x64xbf16, #tpu.memory_space<vmem>>, %arg5: memref<1x64xf32, #tpu.memory_space<vmem>>, %arg6: memref<16x64xbf16, #tpu.memory_space<vmem>>, %arg7: memref<16x64xf32, #tpu.memory_space<vmem>>) attributes {dimension_semantics = [#tpu.dimension_semantics<parallel>, #tpu.dimension_semantics<parallel>, #tpu.dimension_semantics<arbitrary>], iteration_bounds = array<i64: 1, 1, 1>, scalar_prefetch = 0 : i64, scratch_operands = 1 : i64, tpu.core_type = #tpu.core_type<tc>, window_params = [{transform_indices = @transform_0, window_bounds = array<i64: 16, 32>}, {transform_indices = @transform_1, window_bounds = array<i64: 32, 64>}, {transform_indices = @transform_2, window_bounds = array<i64: 1, 64>}, {transform_indices = @transform_3, window_bounds = array<i64: 16, 64>}]} {
    %c0_i32 = arith.constant 0 : i32
    %0 = arith.cmpi eq, %arg2, %c0_i32 : i32
    %1 = arith.extui %0 : i1 to i32
    %c0_i32_0 = arith.constant 0 : i32
    %2 = arith.cmpi ne, %1, %c0_i32_0 : i32
    scf.if %2 {
      %cst_10 = arith.constant 0.000000e+00 : f32
      %13 = vector.broadcast %cst_10 : f32 to vector<16x64xf32>
      %c0_11 = arith.constant 0 : index
      %c0_12 = arith.constant 0 : index
      %14 = vector.load %arg7[%c0_11, %c0_12] : memref<16x64xf32, #tpu.memory_space<vmem>>, vector<16x64xf32>
      tpu.vector_store %arg7[%c0_11, %c0_12], %13 {strides = array<i32>} : memref<16x64xf32, #tpu.memory_space<vmem>>, vector<16x64xf32>,
    } else {
    }
    %c0 = arith.constant 0 : index
    %c0_1 = arith.constant 0 : index
    %3 = vector.load %arg7[%c0, %c0_1] : memref<16x64xf32, #tpu.memory_space<vmem>>, vector<16x64xf32>
    %c0_2 = arith.constant 0 : index
    %c0_3 = arith.constant 0 : index
    %4 = vector.load %arg3[%c0_2, %c0_3] : memref<16x32xf32, #tpu.memory_space<vmem>>, vector<16x32xf32>
    %5 = arith.truncf %4 : vector<16x32xf32> to vector<16x32xbf16>
    %c0_4 = arith.constant 0 : index
    %c0_5 = arith.constant 0 : index
    %6 = vector.load %arg4[%c0_4, %c0_5] : memref<32x64xbf16, #tpu.memory_space<vmem>>, vector<32x64xbf16>
    %cst = arith.constant dense<0.000000e+00> : vector<16x64xf32>
    %7 = tpu.matmul %5, %6, %cst {dimension_numbers = #tpu.dot_dimension_numbers<[1], [0], [0], [1], [0, 0, 1, 1], [], []>} : vector<16x32xbf16>, vector<32x64xbf16>, vector<16x64xf32> -> vector<16x64xf32>
    %8 = arith.addf %3, %7 : vector<16x64xf32>
    %c0_6 = arith.constant 0 : index
    %c0_7 = arith.constant 0 : index
    %9 = vector.load %arg7[%c0_6, %c0_7] : memref<16x64xf32, #tpu.memory_space<vmem>>, vector<16x64xf32>
    tpu.vector_store %arg7[%c0_6, %c0_7], %8 {strides = array<i32>} : memref<16x64xf32, #tpu.memory_space<vmem>>, vector<16x64xf32>,
    %c0_i32_8 = arith.constant 0 : i32
    %10 = arith.cmpi eq, %arg2, %c0_i32_8 : i32
    %11 = arith.extui %10 : i1 to i32
    %c0_i32_9 = arith.constant 0 : i32
    %12 = arith.cmpi ne, %11, %c0_i32_9 : i32
    scf.if %12 {
      %c0_10 = arith.constant 0 : index
      %c0_11 = arith.constant 0 : index
      %13 = vector.load %arg7[%c0_10, %c0_11] : memref<16x64xf32, #tpu.memory_space<vmem>>, vector<16x64xf32>
      %c0_12 = arith.constant 0 : index
      %c0_13 = arith.constant 0 : index
      %14 = vector.load %arg5[%c0_12, %c0_13] : memref<1x64xf32, #tpu.memory_space<vmem>>, vector<1x64xf32>
      %15 = vector.broadcast %14 : vector<1x64xf32> to vector<16x64xf32>
      %16 = arith.addf %13, %15 : vector<16x64xf32>
      %cst_14 = arith.constant 0.000000e+00 : f32
      %17 = vector.broadcast %cst_14 : f32 to vector<16x64xf32>
      %18 = arith.maximumf %16, %17 : vector<16x64xf32>
      %19 = arith.truncf %18 : vector<16x64xf32> to vector<16x64xbf16>
      %c0_15 = arith.constant 0 : index
      %c0_16 = arith.constant 0 : index
      %20 = vector.load %arg6[%c0_15, %c0_16] : memref<16x64xbf16, #tpu.memory_space<vmem>>, vector<16x64xbf16>
      tpu.vector_store %arg6[%c0_15, %c0_16], %19 {strides = array<i32>} : memref<16x64xbf16, #tpu.memory_space<vmem>>, vector<16x64xbf16>,
    } else {
    }
    return
  }
  func.func @transform_0(%arg0: i32, %arg1: i32, %arg2: i32) -> (i32, i32) {
    %c0_i32 = arith.constant 0 : i32
    return %arg0, %arg2 : i32, i32
  }
  func.func @transform_1(%arg0: i32, %arg1: i32, %arg2: i32) -> (i32, i32) {
    %c0_i32 = arith.constant 0 : i32
    return %arg2, %arg1 : i32, i32
  }
  func.func @transform_2(%arg0: i32, %arg1: i32, %arg2: i32) -> (i32, i32) {
    %c0_i32 = arith.constant 0 : i32
    %c0_i32_0 = arith.constant 0 : i32
    return %c0_i32, %arg1 : i32, i32
  }
  func.func @transform_3(%arg0: i32, %arg1: i32, %arg2: i32) -> (i32, i32) {
    %c0_i32 = arith.constant 0 : i32
    return %arg0, %arg1 : i32, i32
  }
}

module attributes {stable_mosaic.version = 11 : i64} {
  func.func @_linear_kernel(%arg0: i32, %arg1: i32, %arg2: i32, %arg3: memref<16x64xbf16, #tpu.memory_space<vmem>>, %arg4: memref<64x32xbf16, #tpu.memory_space<vmem>>, %arg5: memref<1x32xf32, #tpu.memory_space<vmem>>, %arg6: memref<16x32xf32, #tpu.memory_space<vmem>>, %arg7: memref<16x32xf32, #tpu.memory_space<vmem>>, %arg8: memref<16x32xf32, #tpu.memory_space<vmem>>) attributes {dimension_semantics = [#tpu.dimension_semantics<parallel>, #tpu.dimension_semantics<parallel>, #tpu.dimension_semantics<arbitrary>], iteration_bounds = array<i64: 1, 1, 1>, scalar_prefetch = 0 : i64, scratch_operands = 1 : i64, tpu.core_type = #tpu.core_type<tc>, window_params = [{transform_indices = @transform_0, window_bounds = array<i64: 16, 64>}, {transform_indices = @transform_1, window_bounds = array<i64: 64, 32>}, {transform_indices = @transform_2, window_bounds = array<i64: 1, 32>}, {transform_indices = @transform_3, window_bounds = array<i64: 16, 32>}, {transform_indices = @transform_4, window_bounds = array<i64: 16, 32>}]} {
    %c0_i32 = arith.constant 0 : i32
    %0 = arith.cmpi eq, %arg2, %c0_i32 : i32
    %1 = arith.extui %0 : i1 to i32
    %c0_i32_0 = arith.constant 0 : i32
    %2 = arith.cmpi ne, %1, %c0_i32_0 : i32
    scf.if %2 {
      %cst_10 = arith.constant 0.000000e+00 : f32
      %12 = vector.broadcast %cst_10 : f32 to vector<16x32xf32>
      %c0_11 = arith.constant 0 : index
      %c0_12 = arith.constant 0 : index
      %13 = vector.load %arg8[%c0_11, %c0_12] : memref<16x32xf32, #tpu.memory_space<vmem>>, vector<16x32xf32>
      tpu.vector_store %arg8[%c0_11, %c0_12], %12 {strides = array<i32>} : memref<16x32xf32, #tpu.memory_space<vmem>>, vector<16x32xf32>,
    } else {
    }
    %c0 = arith.constant 0 : index
    %c0_1 = arith.constant 0 : index
    %3 = vector.load %arg8[%c0, %c0_1] : memref<16x32xf32, #tpu.memory_space<vmem>>, vector<16x32xf32>
    %c0_2 = arith.constant 0 : index
    %c0_3 = arith.constant 0 : index
    %4 = vector.load %arg3[%c0_2, %c0_3] : memref<16x64xbf16, #tpu.memory_space<vmem>>, vector<16x64xbf16>
    %c0_4 = arith.constant 0 : index
    %c0_5 = arith.constant 0 : index
    %5 = vector.load %arg4[%c0_4, %c0_5] : memref<64x32xbf16, #tpu.memory_space<vmem>>, vector<64x32xbf16>
    %cst = arith.constant dense<0.000000e+00> : vector<16x32xf32>
    %6 = tpu.matmul %4, %5, %cst {dimension_numbers = #tpu.dot_dimension_numbers<[1], [0], [0], [1], [0, 0, 1, 1], [], []>} : vector<16x64xbf16>, vector<64x32xbf16>, vector<16x32xf32> -> vector<16x32xf32>
    %7 = arith.addf %3, %6 : vector<16x32xf32>
    %c0_6 = arith.constant 0 : index
    %c0_7 = arith.constant 0 : index
    %8 = vector.load %arg8[%c0_6, %c0_7] : memref<16x32xf32, #tpu.memory_space<vmem>>, vector<16x32xf32>
    tpu.vector_store %arg8[%c0_6, %c0_7], %7 {strides = array<i32>} : memref<16x32xf32, #tpu.memory_space<vmem>>, vector<16x32xf32>,
    %c0_i32_8 = arith.constant 0 : i32
    %9 = arith.cmpi eq, %arg2, %c0_i32_8 : i32
    %10 = arith.extui %9 : i1 to i32
    %c0_i32_9 = arith.constant 0 : i32
    %11 = arith.cmpi ne, %10, %c0_i32_9 : i32
    scf.if %11 {
      %c0_10 = arith.constant 0 : index
      %c0_11 = arith.constant 0 : index
      %12 = vector.load %arg8[%c0_10, %c0_11] : memref<16x32xf32, #tpu.memory_space<vmem>>, vector<16x32xf32>
      %c0_12 = arith.constant 0 : index
      %c0_13 = arith.constant 0 : index
      %13 = vector.load %arg5[%c0_12, %c0_13] : memref<1x32xf32, #tpu.memory_space<vmem>>, vector<1x32xf32>
      %14 = vector.broadcast %13 : vector<1x32xf32> to vector<16x32xf32>
      %15 = arith.addf %12, %14 : vector<16x32xf32>
      %c0_14 = arith.constant 0 : index
      %c0_15 = arith.constant 0 : index
      %16 = vector.load %arg6[%c0_14, %c0_15] : memref<16x32xf32, #tpu.memory_space<vmem>>, vector<16x32xf32>
      %17 = arith.addf %15, %16 : vector<16x32xf32>
      %c0_16 = arith.constant 0 : index
      %c0_17 = arith.constant 0 : index
      %18 = vector.load %arg7[%c0_16, %c0_17] : memref<16x32xf32, #tpu.memory_space<vmem>>, vector<16x32xf32>
      tpu.vector_store %arg7[%c0_16, %c0_17], %17 {strides = array<i32>} : memref<16x32xf32, #tpu.memory_space<vmem>>, vector<16x32xf32>,
    } else {
    }
    return
  }
  func.func @transform_0(%arg0: i32, %arg1: i32, %arg2: i32) -> (i32, i32) {
    %c0_i32 = arith.constant 0 : i32
    return %arg0, %arg2 : i32, i32
  }
  func.func @transform_1(%arg0: i32, %arg1: i32, %arg2: i32) -> (i32, i32) {
    %c0_i32 = arith.constant 0 : i32
    return %arg2, %arg1 : i32, i32
  }
  func.func @transform_2(%arg0: i32, %arg1: i32, %arg2: i32) -> (i32, i32) {
    %c0_i32 = arith.constant 0 : i32
    %c0_i32_0 = arith.constant 0 : i32
    return %c0_i32, %arg1 : i32, i32
  }
  func.func @transform_3(%arg0: i32, %arg1: i32, %arg2: i32) -> (i32, i32) {
    %c0_i32 = arith.constant 0 : i32
    return %arg0, %arg1 : i32, i32
  }
  func.func @transform_4(%arg0: i32, %arg1: i32, %arg2: i32) -> (i32, i32) {
    %c0_i32 = arith.constant 0 : i32
    return %arg0, %arg1 : i32, i32
  }
}

</mosaic_0001>

<llo_original>
// kernel: transformer_decoder_layer.9
$region0: #{transformer_decoder_layer.9}
  #allocation0 [shape = 'u32[]', space=smem, size = 0x4, offset = 0x4, fixed_abs, tag = 'smem constant byte address 0x4 - core index']
  #allocation1 [shape = 'u32[144,128]{1,0:T(1,128)}', space=vmem, size = 0x12000, scoped, tag = 'internal scratch']
  #allocation2 [shape = 'f32[16,96]{1,0:T(8,128)}', space=vmem, size = 0x2000, scoped, tag = 'scratch operand']
  %s0 = inlined_call_operand.vmem [shape: f32[16,32], index: 0, kind: input, shape index: {}]
  %s1 = inlined_call_operand.vmem [shape: bf16[32,96], index: 1, kind: input, shape index: {}]
  %s2 = inlined_call_operand.vmem [shape: f32[1,96], index: 2, kind: input, shape index: {}]
  %s3 = inlined_call_operand.vmem [shape: bf16[16,96], index: 3, kind: output, shape index: {}]
  %s4 = sld [smem:[#allocation0]]
  $region30: #{transformer_decoder_layer.9} parent=0
    _
  %s6 = ssub.s32 1, %s4
  %s7 = scalar_select 0, %s6, %s4
  // Predicated region
  $region2: #{transformer_decoder_layer.9} parent=0 // pred_check
    _
  $region3: #{transformer_decoder_layer.9} parent=0 // pred_check_branch
    %9 = sbr.rel (0) target = $region5
  $region4: #{transformer_decoder_layer.9} parent=0 // pred_region
    _
  $region5: #{transformer_decoder_layer.9} parent=0 // pred_fallthru
    _
  // Predicated region
  $region6: #{transformer_decoder_layer.9} parent=0 // pred_check
    _
  $region7: #{transformer_decoder_layer.9} parent=0 // pred_check_branch
    %11 = sbr.rel (0) target = $region9
  $region8: #{transformer_decoder_layer.9} parent=0 // pred_region
    _
  $region9: #{transformer_decoder_layer.9} parent=0 // pred_fallthru
    _
  // Predicated region
  $region10: #{transformer_decoder_layer.9} parent=0 // pred_check
    _
  $region11: #{transformer_decoder_layer.9} parent=0 // pred_check_branch
    %13 = sbr.rel (0) target = $region13
  $region12: #{transformer_decoder_layer.9} parent=0 // pred_region
    _
  $region13: #{transformer_decoder_layer.9} parent=0 // pred_fallthru
    _
  %p15 = scmp.eq.s32.totalorder 0, 0
  // Predicated region
  $region14: #{transformer_decoder_layer.9} parent=0 // pred_check
    %p16 = pneg %p15
  $region15: #{transformer_decoder_layer.9} parent=0 // pred_check_branch
    %18 = sbr.rel (%p16) target = $region17
  $region16: #{transformer_decoder_layer.9} parent=0 // pred_region
    %vm19 = vcmask 785408
    %20 = vst.msk [vmem:[#allocation2] sm:$0xff] %vm19, 0.0
    %21 = vst.msk [vmem:[#allocation2 + $0x8] sm:$0xff] %vm19, 0.0
  $region17: #{transformer_decoder_layer.9} parent=0 // pred_fallthru
    _
  %v22 = vld [vmem:[#allocation2] sm:$0xff]
  %v23 = vld [vmem:[#allocation2 + $0x8] sm:$0xff]
  %v24 = vld [vmem:[%s0] sm:$0xff]
  %v25 = vld [vmem:[%s0 + $0x8] sm:$0xff]
  %v26 = vpack.c.bf16 %v25, %v24
  %v27 = vld [vmem:[%s1] sm:$0xf]
  %v28 = vld [vmem:[%s1 + $0x4] sm:$0xf]
  %v29 = vld [vmem:[%s1 + $0x8] sm:$0xf]
  %v30 = vld [vmem:[%s1 + $0xc] sm:$0xf]
  %v35 = vunpack.c.l.b16 %v27
  %v36 = vunpack.c.l.b16 %v28
  %v37 = vunpack.c.l.b16 %v29
  %v38 = vunpack.c.l.b16 %v30
  %v39 = vpack.c.b16 %v36, %v35
  %v40 = vpack.c.b16 %v38, %v37
  %vm43 = vcmask 261120
  %v45 = vsel %vm43, %v26, 0
  %47 = vmatprep.subr.bf16.mxu0 0
  %48 = vmatpush1.bf16.msra.mxu0 0
  %49 = vmatprep.subr.bf16.mxu0 0
  %50 = vmatpush1.bf16.msra.mxu0 0
  %51 = vmatprep.subr.bf16.mxu0 0
  %52 = vmatpush1.bf16.msra.mxu0 0
  %53 = vmatprep.subr.bf16.mxu0 0
  %54 = vmatpush1.bf16.msra.mxu0 0
  %55 = vmatprep.subr.bf16.mxu0 0
  %56 = vmatpush1.bf16.msra.mxu0 0
  %57 = vmatprep.subr.bf16.mxu0 0
  %58 = vmatpush1.bf16.msra.mxu0 0
  %59 = vmatprep.subr.bf16.mxu0 0
  %60 = vmatpush1.bf16.msra.mxu0 %v40
  %61 = vmatprep.subr.bf16.mxu0 0
  %62 = vmatpush1.bf16.msra.mxu0 %v39
  %63 = vmatprep.subr.bf16.mxu0 0
  %64 = vmatpush2.bf16.msra.mxu0 0
  %65 = vmatprep.subr.bf16.mxu0 0
  %66 = vmatpush2.bf16.msra.mxu0 0
  %67 = vmatprep.subr.bf16.mxu0 0
  %68 = vmatpush2.bf16.msra.mxu0 0
  %69 = vmatprep.subr.bf16.mxu0 0
  %70 = vmatpush2.bf16.msra.mxu0 0
  %71 = vmatprep.subr.bf16.mxu0 0
  %72 = vmatpush2.bf16.msra.mxu0 0
  %73 = vmatprep.subr.bf16.mxu0 0
  %74 = vmatpush2.bf16.msra.mxu0 0
  %75 = vmatprep.subr.bf16.mxu0 0
  %76 = vmatpush2.bf16.msra.mxu0 0
  %77 = vmatprep.subr.bf16.mxu0 0
  %78 = vmatpush2.bf16.msra.mxu0 0
  %79 = vmatprep.mubr.bf16.mxu0 0
  %80 = vmatmul.mubr.bf16.gmra.mxu0 %v45
  %v81 = vpop.f32.mrf.mxu0
  %v82 = vadd.f32 0.0, %v81
  %v83 = vpop.f32.mrf.mxu0
  %v84 = vpop.f32.mrf.mxu0
  %v85 = vadd.f32 0.0, %v84
  %v86 = vpop.f32.mrf.mxu0
  %87 = vdwg.mxu0
  %v88 = vadd.f32 %v22, %v82
  %v89 = vadd.f32 %v23, %v85
  %vm90 = vcmask 785408
  %91 = vst.msk [vmem:[#allocation2] sm:$0xff] %vm90, %v88
  %92 = vst.msk [vmem:[#allocation2 + $0x8] sm:$0xff] %vm90, %v89
  // Predicated region
  $region18: #{transformer_decoder_layer.9} parent=0 // pred_check
    %p93 = pneg %p15
  $region19: #{transformer_decoder_layer.9} parent=0 // pred_check_branch
    %95 = sbr.rel (%p93) target = $region21
  $region20: #{transformer_decoder_layer.9} parent=0 // pred_region
    %v96 = vld [vmem:[#allocation2] sm:$0xff]
    %v97 = vld [vmem:[#allocation2 + $0x8] sm:$0xff]
    %v98 = vld [vmem:[%s2] sm:$0x1]
    %v100 = vlaneseq
    %v101 = vshrl.u32 %v100, 7
    %v102 = vsub.s32 0, %v101
    %v103 = vrot.slane %v98, %v102
    %v105 = vadd.f32 %v96, %v103
    %v106 = vadd.f32 %v97, %v103
    %v107 = vpack.c.bf16 %v106, %v105
    %v109 = vunpack.c.l.b16 %v107
    %v110 = vunpack.c.h.b16 %v107
    %v111 = vpack.c.b16 %v109, %v109
    %v112 = vpack.c.b16 %v110, %v110
    %vm115 = vcmask 781312
    %116 = vst.msk [vmem:[%s3] sm:$0xf] %vm115, %v111
    %117 = vst.msk [vmem:[%s3 + $0x4] sm:$0xf] %vm115, %v112
  $region21: #{transformer_decoder_layer.9} parent=0 // pred_fallthru
    _
  // Predicated region
  $region22: #{transformer_decoder_layer.9} parent=0 // pred_check
    _
  $region23: #{transformer_decoder_layer.9} parent=0 // pred_check_branch
    %119 = sbr.rel (0) target = $region25
  $region24: #{transformer_decoder_layer.9} parent=0 // pred_region
    _
  $region25: #{transformer_decoder_layer.9} parent=0 // pred_fallthru
    _
  // Predicated region
  $region26: #{transformer_decoder_layer.9} parent=0 // pred_check
    _
  $region27: #{transformer_decoder_layer.9} parent=0 // pred_check_branch
    %121 = sbr.rel (0) target = $region29
  $region28: #{transformer_decoder_layer.9} parent=0 // pred_region
    _
  $region29: #{transformer_decoder_layer.9} parent=0 // pred_fallthru
    _

// kernel: transformer_decoder_layer.12
$region0: #{transformer_decoder_layer.12}
  #allocation0 [shape = 'u32[]', space=smem, size = 0x4, offset = 0x4, fixed_abs, tag = 'smem constant byte address 0x4 - core index']
  #allocation1 [shape = 'u32[144,128]{1,0:T(1,128)}', space=vmem, size = 0x12000, scoped, tag = 'internal scratch']
  #allocation2 [shape = 'f32[16,32]{1,0:T(8,128)}', space=vmem, size = 0x2000, scoped, tag = 'scratch operand']
  %s0 = inlined_call_operand.vmem [shape: f32[16,32], index: 0, kind: input, shape index: {}]
  %s1 = inlined_call_operand.vmem [shape: bf16[32,32], index: 1, kind: input, shape index: {}]
  %s2 = inlined_call_operand.vmem [shape: f32[1,32], index: 2, kind: input, shape index: {}]
  %s3 = inlined_call_operand.vmem [shape: bf16[16,32], index: 3, kind: output, shape index: {}]
  %s4 = sld [smem:[#allocation0]]
  $region30: #{transformer_decoder_layer.12} parent=0
    _
  %s6 = ssub.s32 1, %s4
  %s7 = scalar_select 0, %s6, %s4
  // Predicated region
  $region2: #{transformer_decoder_layer.12} parent=0 // pred_check
    _
  $region3: #{transformer_decoder_layer.12} parent=0 // pred_check_branch
    %9 = sbr.rel (0) target = $region5
  $region4: #{transformer_decoder_layer.12} parent=0 // pred_region
    _
  $region5: #{transformer_decoder_layer.12} parent=0 // pred_fallthru
    _
  // Predicated region
  $region6: #{transformer_decoder_layer.12} parent=0 // pred_check
    _
  $region7: #{transformer_decoder_layer.12} parent=0 // pred_check_branch
    %11 = sbr.rel (0) target = $region9
  $region8: #{transformer_decoder_layer.12} parent=0 // pred_region
    _
  $region9: #{transformer_decoder_layer.12} parent=0 // pred_fallthru
    _
  // Predicated region
  $region10: #{transformer_decoder_layer.12} parent=0 // pred_check
    _
  $region11: #{transformer_decoder_layer.12} parent=0 // pred_check_branch
    %13 = sbr.rel (0) target = $region13
  $region12: #{transformer_decoder_layer.12} parent=0 // pred_region
    _
  $region13: #{transformer_decoder_layer.12} parent=0 // pred_fallthru
    _
  %p15 = scmp.eq.s32.totalorder 0, 0
  // Predicated region
  $region14: #{transformer_decoder_layer.12} parent=0 // pred_check
    %p16 = pneg %p15
  $region15: #{transformer_decoder_layer.12} parent=0 // pred_check_branch
    %18 = sbr.rel (%p16) target = $region17
  $region16: #{transformer_decoder_layer.12} parent=0 // pred_region
    %vm19 = vcmask 261120
    %20 = vst.msk [vmem:[#allocation2] sm:$0xff] %vm19, 0.0
    %21 = vst.msk [vmem:[#allocation2 + $0x8] sm:$0xff] %vm19, 0.0
  $region17: #{transformer_decoder_layer.12} parent=0 // pred_fallthru
    _
  %v22 = vld [vmem:[#allocation2] sm:$0xff]
  %v23 = vld [vmem:[#allocation2 + $0x8] sm:$0xff]
  %v24 = vld [vmem:[%s0] sm:$0xff]
  %v25 = vld [vmem:[%s0 + $0x8] sm:$0xff]
  %v26 = vpack.c.bf16 %v25, %v24
  %v27 = vld [vmem:[%s1] sm:$0xf]
  %v28 = vld [vmem:[%s1 + $0x4] sm:$0xf]
  %v29 = vld [vmem:[%s1 + $0x8] sm:$0xf]
  %v30 = vld [vmem:[%s1 + $0xc] sm:$0xf]
  %v35 = vunpack.c.l.b16 %v27
  %v36 = vunpack.c.l.b16 %v28
  %v37 = vunpack.c.l.b16 %v29
  %v38 = vunpack.c.l.b16 %v30
  %v39 = vpack.c.b16 %v36, %v35
  %v40 = vpack.c.b16 %v38, %v37
  %vm43 = vcmask 261120
  %v45 = vsel %vm43, %v26, 0
  %47 = vmatprep.subr.bf16.mxu0 0
  %48 = vmatpush1.bf16.msra.mxu0 0
  %49 = vmatprep.subr.bf16.mxu0 0
  %50 = vmatpush1.bf16.msra.mxu0 0
  %51 = vmatprep.subr.bf16.mxu0 0
  %52 = vmatpush1.bf16.msra.mxu0 0
  %53 = vmatprep.subr.bf16.mxu0 0
  %54 = vmatpush1.bf16.msra.mxu0 0
  %55 = vmatprep.subr.bf16.mxu0 0
  %56 = vmatpush1.bf16.msra.mxu0 0
  %57 = vmatprep.subr.bf16.mxu0 0
  %58 = vmatpush1.bf16.msra.mxu0 0
  %59 = vmatprep.subr.bf16.mxu0 0
  %60 = vmatpush1.bf16.msra.mxu0 %v40
  %61 = vmatprep.subr.bf16.mxu0 0
  %62 = vmatpush1.bf16.msra.mxu0 %v39
  %63 = vmatprep.subr.bf16.mxu0 0
  %64 = vmatpush2.bf16.msra.mxu0 0
  %65 = vmatprep.subr.bf16.mxu0 0
  %66 = vmatpush2.bf16.msra.mxu0 0
  %67 = vmatprep.subr.bf16.mxu0 0
  %68 = vmatpush2.bf16.msra.mxu0 0
  %69 = vmatprep.subr.bf16.mxu0 0
  %70 = vmatpush2.bf16.msra.mxu0 0
  %71 = vmatprep.subr.bf16.mxu0 0
  %72 = vmatpush2.bf16.msra.mxu0 0
  %73 = vmatprep.subr.bf16.mxu0 0
  %74 = vmatpush2.bf16.msra.mxu0 0
  %75 = vmatprep.subr.bf16.mxu0 0
  %76 = vmatpush2.bf16.msra.mxu0 0
  %77 = vmatprep.subr.bf16.mxu0 0
  %78 = vmatpush2.bf16.msra.mxu0 0
  %79 = vmatprep.mubr.bf16.mxu0 0
  %80 = vmatmul.mubr.bf16.gmra.mxu0 %v45
  %v81 = vpop.f32.mrf.mxu0
  %v82 = vadd.f32 0.0, %v81
  %v83 = vpop.f32.mrf.mxu0
  %v84 = vpop.f32.mrf.mxu0
  %v85 = vadd.f32 0.0, %v84
  %v86 = vpop.f32.mrf.mxu0
  %87 = vdwg.mxu0
  %v88 = vadd.f32 %v22, %v82
  %v89 = vadd.f32 %v23, %v85
  %90 = vst.msk [vmem:[#allocation2] sm:$0xff] %vm43, %v88
  %91 = vst.msk [vmem:[#allocation2 + $0x8] sm:$0xff] %vm43, %v89
  // Predicated region
  $region18: #{transformer_decoder_layer.12} parent=0 // pred_check
    %p92 = pneg %p15
  $region19: #{transformer_decoder_layer.12} parent=0 // pred_check_branch
    %94 = sbr.rel (%p92) target = $region21
  $region20: #{transformer_decoder_layer.12} parent=0 // pred_region
    %v95 = vld [vmem:[#allocation2] sm:$0xff]
    %v96 = vld [vmem:[#allocation2 + $0x8] sm:$0xff]
    %v97 = vld [vmem:[%s2] sm:$0x1]
    %v99 = vlaneseq
    %v100 = vshrl.u32 %v99, 7
    %v101 = vsub.s32 0, %v100
    %v102 = vrot.slane %v97, %v101
    %v104 = vadd.f32 %v95, %v102
    %v105 = vadd.f32 %v96, %v102
    %v106 = vpack.c.bf16 %v105, %v104
    %v108 = vunpack.c.l.b16 %v106
    %v109 = vunpack.c.h.b16 %v106
    %v110 = vpack.c.b16 %v108, %v108
    %v111 = vpack.c.b16 %v109, %v109
    %vm114 = vcmask 257024
    %115 = vst.msk [vmem:[%s3] sm:$0xf] %vm114, %v110
    %116 = vst.msk [vmem:[%s3 + $0x4] sm:$0xf] %vm114, %v111
  $region21: #{transformer_decoder_layer.12} parent=0 // pred_fallthru
    _
  // Predicated region
  $region22: #{transformer_decoder_layer.12} parent=0 // pred_check
    _
  $region23: #{transformer_decoder_layer.12} parent=0 // pred_check_branch
    %118 = sbr.rel (0) target = $region25
  $region24: #{transformer_decoder_layer.12} parent=0 // pred_region
    _
  $region25: #{transformer_decoder_layer.12} parent=0 // pred_fallthru
    _
  // Predicated region
  $region26: #{transformer_decoder_layer.12} parent=0 // pred_check
    _
  $region27: #{transformer_decoder_layer.12} parent=0 // pred_check_branch
    %120 = sbr.rel (0) target = $region29
  $region28: #{transformer_decoder_layer.12} parent=0 // pred_region
    _
  $region29: #{transformer_decoder_layer.12} parent=0 // pred_fallthru
    _

// kernel: transformer_decoder_layer.11
$region0: #{transformer_decoder_layer.11}
  #allocation0 [shape = 'u32[]', space=smem, size = 0x4, offset = 0x4, fixed_abs, tag = 'smem constant byte address 0x4 - core index']
  #allocation1 [shape = 'u32[144,128]{1,0:T(1,128)}', space=vmem, size = 0x12000, scoped, tag = 'internal scratch']
  #allocation2 [shape = 'f32[16,32]{1,0:T(8,128)}', space=vmem, size = 0x2000, scoped, tag = 'scratch operand']
  %s0 = inlined_call_operand.vmem [shape: bf16[16,32], index: 0, kind: input, shape index: {}]
  %s1 = inlined_call_operand.vmem [shape: bf16[32,32], index: 1, kind: input, shape index: {}]
  %s2 = inlined_call_operand.vmem [shape: f32[1,32], index: 2, kind: input, shape index: {}]
  %s3 = inlined_call_operand.vmem [shape: f32[16,32], index: 3, kind: input, shape index: {}]
  %s4 = inlined_call_operand.vmem [shape: f32[1,32], index: 4, kind: input, shape index: {}]
  %s5 = inlined_call_operand.vmem [shape: f32[1,32], index: 5, kind: input, shape index: {}]
  %s6 = inlined_call_operand.vmem [shape: f32[16,32], index: 6, kind: output, shape index: {}]
  %s7 = sld [smem:[#allocation0]]
  $region42: #{transformer_decoder_layer.11} parent=0
    _
  %s9 = ssub.s32 1, %s7
  %s10 = scalar_select 0, %s9, %s7
  // Predicated region
  $region2: #{transformer_decoder_layer.11} parent=0 // pred_check
    _
  $region3: #{transformer_decoder_layer.11} parent=0 // pred_check_branch
    %12 = sbr.rel (0) target = $region5
  $region4: #{transformer_decoder_layer.11} parent=0 // pred_region
    _
  $region5: #{transformer_decoder_layer.11} parent=0 // pred_fallthru
    _
  // Predicated region
  $region6: #{transformer_decoder_layer.11} parent=0 // pred_check
    _
  $region7: #{transformer_decoder_layer.11} parent=0 // pred_check_branch
    %14 = sbr.rel (0) target = $region9
  $region8: #{transformer_decoder_layer.11} parent=0 // pred_region
    _
  $region9: #{transformer_decoder_layer.11} parent=0 // pred_fallthru
    _
  // Predicated region
  $region10: #{transformer_decoder_layer.11} parent=0 // pred_check
    _
  $region11: #{transformer_decoder_layer.11} parent=0 // pred_check_branch
    %16 = sbr.rel (0) target = $region13
  $region12: #{transformer_decoder_layer.11} parent=0 // pred_region
    _
  $region13: #{transformer_decoder_layer.11} parent=0 // pred_fallthru
    _
  // Predicated region
  $region14: #{transformer_decoder_layer.11} parent=0 // pred_check
    _
  $region15: #{transformer_decoder_layer.11} parent=0 // pred_check_branch
    %18 = sbr.rel (0) target = $region17
  $region16: #{transformer_decoder_layer.11} parent=0 // pred_region
    _
  $region17: #{transformer_decoder_layer.11} parent=0 // pred_fallthru
    _
  // Predicated region
  $region18: #{transformer_decoder_layer.11} parent=0 // pred_check
    _
  $region19: #{transformer_decoder_layer.11} parent=0 // pred_check_branch
    %20 = sbr.rel (0) target = $region21
  $region20: #{transformer_decoder_layer.11} parent=0 // pred_region
    _
  $region21: #{transformer_decoder_layer.11} parent=0 // pred_fallthru
    _
  // Predicated region
  $region22: #{transformer_decoder_layer.11} parent=0 // pred_check
    _
  $region23: #{transformer_decoder_layer.11} parent=0 // pred_check_branch
    %22 = sbr.rel (0) target = $region25
  $region24: #{transformer_decoder_layer.11} parent=0 // pred_region
    _
  $region25: #{transformer_decoder_layer.11} parent=0 // pred_fallthru
    _
  %p24 = scmp.eq.s32.totalorder 0, 0
  // Predicated region
  $region26: #{transformer_decoder_layer.11} parent=0 // pred_check
    %p25 = pneg %p24
  $region27: #{transformer_decoder_layer.11} parent=0 // pred_check_branch
    %27 = sbr.rel (%p25) target = $region29
  $region28: #{transformer_decoder_layer.11} parent=0 // pred_region
    %vm28 = vcmask 261120
    %29 = vst.msk [vmem:[#allocation2] sm:$0xff] %vm28, 0.0
    %30 = vst.msk [vmem:[#allocation2 + $0x8] sm:$0xff] %vm28, 0.0
  $region29: #{transformer_decoder_layer.11} parent=0 // pred_fallthru
    _
  %v31 = vld [vmem:[#allocation2] sm:$0xff]
  %v32 = vld [vmem:[#allocation2 + $0x8] sm:$0xff]
  %v33 = vld [vmem:[%s0] sm:$0xf]
  %v34 = vld [vmem:[%s0 + $0x4] sm:$0xf]
  %v35 = vld [vmem:[%s1] sm:$0xf]
  %v36 = vld [vmem:[%s1 + $0x4] sm:$0xf]
  %v37 = vld [vmem:[%s1 + $0x8] sm:$0xf]
  %v38 = vld [vmem:[%s1 + $0xc] sm:$0xf]
  %v41 = vunpack.c.l.b16 %v33
  %v42 = vunpack.c.l.b16 %v34
  %v43 = vpack.c.b16 %v42, %v41
  %v48 = vunpack.c.l.b16 %v35
  %v49 = vunpack.c.l.b16 %v36
  %v50 = vunpack.c.l.b16 %v37
  %v51 = vunpack.c.l.b16 %v38
  %v52 = vpack.c.b16 %v49, %v48
  %v53 = vpack.c.b16 %v51, %v50
  %vm56 = vcmask 261120
  %v58 = vsel %vm56, %v43, 0
  %60 = vmatprep.subr.bf16.mxu0 0
  %61 = vmatpush1.bf16.msra.mxu0 0
  %62 = vmatprep.subr.bf16.mxu0 0
  %63 = vmatpush1.bf16.msra.mxu0 0
  %64 = vmatprep.subr.bf16.mxu0 0
  %65 = vmatpush1.bf16.msra.mxu0 0
  %66 = vmatprep.subr.bf16.mxu0 0
  %67 = vmatpush1.bf16.msra.mxu0 0
  %68 = vmatprep.subr.bf16.mxu0 0
  %69 = vmatpush1.bf16.msra.mxu0 0
  %70 = vmatprep.subr.bf16.mxu0 0
  %71 = vmatpush1.bf16.msra.mxu0 0
  %72 = vmatprep.subr.bf16.mxu0 0
  %73 = vmatpush1.bf16.msra.mxu0 %v53
  %74 = vmatprep.subr.bf16.mxu0 0
  %75 = vmatpush1.bf16.msra.mxu0 %v52
  %76 = vmatprep.subr.bf16.mxu0 0
  %77 = vmatpush2.bf16.msra.mxu0 0
  %78 = vmatprep.subr.bf16.mxu0 0
  %79 = vmatpush2.bf16.msra.mxu0 0
  %80 = vmatprep.subr.bf16.mxu0 0
  %81 = vmatpush2.bf16.msra.mxu0 0
  %82 = vmatprep.subr.bf16.mxu0 0
  %83 = vmatpush2.bf16.msra.mxu0 0
  %84 = vmatprep.subr.bf16.mxu0 0
  %85 = vmatpush2.bf16.msra.mxu0 0
  %86 = vmatprep.subr.bf16.mxu0 0
  %87 = vmatpush2.bf16.msra.mxu0 0
  %88 = vmatprep.subr.bf16.mxu0 0
  %89 = vmatpush2.bf16.msra.mxu0 0
  %90 = vmatprep.subr.bf16.mxu0 0
  %91 = vmatpush2.bf16.msra.mxu0 0
  %92 = vmatprep.mubr.bf16.mxu0 0
  %93 = vmatmul.mubr.bf16.gmra.mxu0 %v58
  %v94 = vpop.f32.mrf.mxu0
  %v95 = vadd.f32 0.0, %v94
  %v96 = vpop.f32.mrf.mxu0
  %v97 = vpop.f32.mrf.mxu0
  %v98 = vadd.f32 0.0, %v97
  %v99 = vpop.f32.mrf.mxu0
  %100 = vdwg.mxu0
  %v101 = vadd.f32 %v31, %v95
  %v102 = vadd.f32 %v32, %v98
  %103 = vst.msk [vmem:[#allocation2] sm:$0xff] %vm56, %v101
  %104 = vst.msk [vmem:[#allocation2 + $0x8] sm:$0xff] %vm56, %v102
  // Predicated region
  $region30: #{transformer_decoder_layer.11} parent=0 // pred_check
    %p105 = pneg %p24
  $region31: #{transformer_decoder_layer.11} parent=0 // pred_check_branch
    %107 = sbr.rel (%p105) target = $region33
  $region32: #{transformer_decoder_layer.11} parent=0 // pred_region
    %v108 = vld [vmem:[#allocation2] sm:$0xff]
    %v109 = vld [vmem:[#allocation2 + $0x8] sm:$0xff]
    %v110 = vld [vmem:[%s2] sm:$0x1]
    %v112 = vlaneseq
    %v113 = vshrl.u32 %v112, 7
    %v114 = vsub.s32 0, %v113
    %v115 = vrot.slane %v110, %v114
    %v117 = vadd.f32 %v108, %v115
    %v118 = vadd.f32 %v109, %v115
    %v119 = vld [vmem:[%s3] sm:$0xff]
    %v120 = vld [vmem:[%s3 + $0x8] sm:$0xff]
    %v121 = vadd.f32 %v117, %v119
    %v122 = vadd.f32 %v118, %v120
    %v123 = vsel %vm56, %v121, 0.0
    %124 = vadd.xlane.f32.xlu0 %v123
    %v125 = vpop.xlane.xlu0 %124
    %v126 = vsel %vm56, %v122, 0.0
    %127 = vadd.xlane.f32.xlu0 %v126
    %v128 = vpop.xlane.xlu0 %127
    %v129 = vrcp.pop 32.0
    %v130 = vmul.f32 %v125, %v129
    %v131 = vmul.f32 %v128, %v129
    %v132 = vsub.f32 %v121, %v130
    %v133 = vsub.f32 %v122, %v131
    %v134 = vmul.f32 %v132, %v132
    %v135 = vmul.f32 %v133, %v133
    %v136 = vsel %vm56, %v134, 0.0
    %137 = vadd.xlane.f32.xlu0 %v136
    %v138 = vpop.xlane.xlu0 %137
    %v139 = vsel %vm56, %v135, 0.0
    %140 = vadd.xlane.f32.xlu0 %v139
    %v141 = vpop.xlane.xlu0 %140
    %v142 = vmul.f32 %v138, %v129
    %v143 = vmul.f32 %v141, %v129
    %v144 = vadd.f32 %v142, 1e-05
    %v145 = vadd.f32 %v143, 1e-05
    %v146 = vrsqrt.pop %v144
    %v147 = vrsqrt.pop %v145
    %v148 = vmul.f32 %v132, %v146
    %v149 = vmul.f32 %v133, %v147
    %v150 = vld [vmem:[%s4] sm:$0x1]
    %v152 = vlaneseq
    %v153 = vshrl.u32 %v152, 7
    %v154 = vsub.s32 0, %v153
    %v155 = vrot.slane %v150, %v154
    %v157 = vmul.f32 %v148, %v155
    %v158 = vmul.f32 %v149, %v155
    %v159 = vld [vmem:[%s5] sm:$0x1]
    %v161 = vlaneseq
    %v162 = vshrl.u32 %v161, 7
    %v163 = vsub.s32 0, %v162
    %v164 = vrot.slane %v159, %v163
    %v166 = vadd.f32 %v157, %v164
    %v167 = vadd.f32 %v158, %v164
    %168 = vst.msk [vmem:[%s6] sm:$0xff] %vm56, %v166
    %169 = vst.msk [vmem:[%s6 + $0x8] sm:$0xff] %vm56, %v167
  $region33: #{transformer_decoder_layer.11} parent=0 // pred_fallthru
    _
  // Predicated region
  $region34: #{transformer_decoder_layer.11} parent=0 // pred_check
    _
  $region35: #{transformer_decoder_layer.11} parent=0 // pred_check_branch
    %171 = sbr.rel (0) target = $region37
  $region36: #{transformer_decoder_layer.11} parent=0 // pred_region
    _
  $region37: #{transformer_decoder_layer.11} parent=0 // pred_fallthru
    _
  // Predicated region
  $region38: #{transformer_decoder_layer.11} parent=0 // pred_check
    _
  $region39: #{transformer_decoder_layer.11} parent=0 // pred_check_branch
    %173 = sbr.rel (0) target = $region41
  $region40: #{transformer_decoder_layer.11} parent=0 // pred_region
    _
  $region41: #{transformer_decoder_layer.11} parent=0 // pred_fallthru
    _

// kernel: transformer_decoder_layer.10
$region0: #{transformer_decoder_layer.10}
  #allocation0 [shape = 'u32[]', space=smem, size = 0x4, offset = 0x4, fixed_abs, tag = 'smem constant byte address 0x4 - core index']
  #allocation1 [shape = 'u32[144,128]{1,0:T(1,128)}', space=vmem, size = 0x12000, scoped, tag = 'internal scratch']
  %s0 = inlined_call_operand.vmem [shape: bf16[8,2,12,8], index: 0, kind: input, shape index: {}]
  %s1 = inlined_call_operand.vmem [shape: bf16[2,8,32], index: 1, kind: output, shape index: {}]
  %s2 = sld [smem:[#allocation0]]
  $region78: #{transformer_decoder_layer.10} parent=0
    _
  %s4 = ssub.s32 1, %s2
  %s5 = scalar_select 0, %s4, %s2
  $region1: #{transformer_decoder_layer.10} parent=0
    #allocation2 [shape = 'u8[65536]{0}', space=vmem, size = 0x10000, scoped, tag = 'input window, operand 0']
    loop: start=0, step=1, limit=4
    $region2: #{transformer_decoder_layer.10} parent=1 // loop_pre_header
      _
    $region3: #{transformer_decoder_layer.10} parent=1 // loop_header
      %s7 = sphi 0, %s11
      %p8 = scmp.ge.s32.totalorder %s7, 4
      %s17 = sphi 0, %s19
      %s20 = sphi 0, %s17
      %s21 = sphi 0, %s20
      %s37 = sphi 0, %s21
      %s43 = sphi 0, %s45
      %s46 = sphi 0, %s43
      %s47 = sphi 0, %s46
      %s63 = sphi 0, %s47
    $region4: #{transformer_decoder_layer.10} parent=1 // loop_header_branch
      %10 = sbr.rel (%p8) target = $region8
    $region5: #{transformer_decoder_layer.10} parent=1 // loop_body
      %s12 = ssub.s32 %s7, 1
      %s13 = ssub.s32 %s7, 2
      %s14 = sadd.s32 %s7, 1
      %s15 = ssub.s32 %s7, %s14
      %p16 = scmp.eq.s32.totalorder %s15, 0
      %s18 = sadd.s32 %s17, 1
      %s19 = scalar_select %p16, %s17, %s18
      %p22 = pneg %p16
      %p23 = scmp.eq.s32.totalorder %s7, 1
      %p24 = por %p22, %p23
      %p25 = scmp.ne.s32.totalorder %s17, %s20
      %p26 = scmp.eq.s32.totalorder %s7, 0
      %p27 = por %p25, %p26
      %p28 = scmp.ne.s32.totalorder %s17, %s20
      %p29 = scmp.eq.s32.totalorder %s12, 1
      %p30 = por %p28, %p29
      %p31 = scmp.ne.s32.totalorder %s20, %s21
      %p32 = scmp.eq.s32.totalorder %s12, 0
      %p33 = por %p31, %p32
      %p34 = scmp.ne.s32.totalorder %s20, %s21
      %p35 = scmp.eq.s32.totalorder %s13, 1
      %p36 = por %p34, %p35
      %p38 = scmp.ne.s32.totalorder %s21, %s37
      %p39 = scmp.eq.s32.totalorder %s13, 0
      %p40 = por %p38, %p39
      %s41 = ssub.s32 %s7, %s14
      %p42 = scmp.eq.s32.totalorder %s41, 0
      %s44 = sadd.s32 %s43, 1
      %s45 = scalar_select %p42, %s43, %s44
      %p48 = pneg %p42
      %p49 = scmp.eq.s32.totalorder %s7, 1
      %p50 = por %p48, %p49
      %p51 = scmp.ne.s32.totalorder %s43, %s46
      %p52 = scmp.eq.s32.totalorder %s7, 0
      %p53 = por %p51, %p52
      %p54 = scmp.ne.s32.totalorder %s43, %s46
      %p55 = scmp.eq.s32.totalorder %s12, 1
      %p56 = por %p54, %p55
      %p57 = scmp.ne.s32.totalorder %s46, %s47
      %p58 = scmp.eq.s32.totalorder %s12, 0
      %p59 = por %p57, %p58
      %p60 = scmp.ne.s32.totalorder %s46, %s47
      %p61 = scmp.eq.s32.totalorder %s13, 1
      %p62 = por %p60, %p61
      %p64 = scmp.ne.s32.totalorder %s47, %s63
      %p65 = scmp.eq.s32.totalorder %s13, 0
      %p66 = por %p64, %p65
      %p67 = scmp.le.s32.totalorder 1, %s7
      %p68 = scmp.lt.s32.totalorder %s7, 3
      %p69 = pnand %p67, %p68
      %p70 = pneg %p69
      // Predicated region
      $region9: #{transformer_decoder_layer.10} parent=5 // pred_check
        _
      $region10: #{transformer_decoder_layer.10} parent=5 // pred_check_branch
        %72 = sbr.rel (%p69) target = $region12
      $region11: #{transformer_decoder_layer.10} parent=5 // pred_region
        %s73 = ssub.s32 %s7, 1
      $region12: #{transformer_decoder_layer.10} parent=5 // pred_fallthru
        _
      %p74 = scmp.lt.s32.totalorder %s7, 2
      // Predicated region
      $region13: #{transformer_decoder_layer.10} parent=5 // pred_check
        %p75 = pneg %p74
      $region14: #{transformer_decoder_layer.10} parent=5 // pred_check_branch
        %77 = sbr.rel (%p75) target = $region16
      $region15: #{transformer_decoder_layer.10} parent=5 // pred_region
        // Predicated region
        $region17: #{transformer_decoder_layer.10} parent=15 // pred_check
          %p78 = pneg %p27
        $region18: #{transformer_decoder_layer.10} parent=15 // pred_check_branch
          %80 = sbr.rel (%p78) target = $region20
        $region19: #{transformer_decoder_layer.10} parent=15 // pred_region
          %s81 = sand.u32 %s17, 1
          %s82 = sand.u32 %s17, 1
          %s83 = smul.addr %s82, 64
          %s84 = scalar_lea.vmem [#allocation2], %s83
          %s85 = smul.addr %s7, 2
          %s86 = smul.addr %s85, 4
          %s87 = scalar_lea.vmem %s0, %s86
          // Predicated region
          $region21: #{transformer_decoder_layer.10} parent=19 // pred_check
            _
          $region22: #{transformer_decoder_layer.10} parent=19 // pred_check_branch
            %89 = sbr.rel (0) target = $region24
          $region23: #{transformer_decoder_layer.10} parent=19 // pred_region
            // Predicated region
            $region25: #{transformer_decoder_layer.10} parent=23 // pred_check
              _
            $region26: #{transformer_decoder_layer.10} parent=23 // pred_check_branch
              %91 = sbr.rel target = $region28
            $region27: #{transformer_decoder_layer.10} parent=23 // pred_region
              // Predicated region
              $region40: #{transformer_decoder_layer.10} parent=27 // pred_check
                _
              $region41: #{transformer_decoder_layer.10} parent=27 // pred_check_branch
                %137 = sbr.rel (0) target = $region43
              $region42: #{transformer_decoder_layer.10} parent=27 // pred_region
                loop: start=0, step=1, limit=1
                $region44: #{transformer_decoder_layer.10} parent=42 // loop_pre_header
                  _
                $region45: #{transformer_decoder_layer.10} parent=42 // loop_header
                  %s139 = sphi 0, %s143
                  %p140 = scmp.ge.s32.totalorder %s139, 1
                  %s144 = sphi %s87, %s87
                  %s145 = sphi %s84, %s84
                $region46: #{transformer_decoder_layer.10} parent=42 // loop_header_branch
                  %142 = sbr.rel (%p140) target = $region50
                $region47: #{transformer_decoder_layer.10} parent=42 // loop_body
                  _
                $region48: #{transformer_decoder_layer.10} parent=42 // loop_footer
                  %s143 = sadd.s32 1, %s139
                $region49: #{transformer_decoder_layer.10} parent=42 // loop_footer_branch
                  %138 = sbr.rel target = $region45
                $region50: #{transformer_decoder_layer.10} parent=42 // loop_exit
                  _
                %s147 = ssub.s32 16, 1
                loop: start=0, step=1, limit=1
                $region51: #{transformer_decoder_layer.10} parent=42 // loop_pre_header
                  _
                $region52: #{transformer_decoder_layer.10} parent=42 // loop_header
                  %s149 = sphi 0, %s153
                  %p150 = scmp.ge.s32.totalorder %s149, 1
                  %s154 = sphi %s87, %s87
                  %s155 = sphi %s84, %s84
                $region53: #{transformer_decoder_layer.10} parent=42 // loop_header_branch
                  %152 = sbr.rel (%p150) target = $region57
                $region54: #{transformer_decoder_layer.10} parent=42 // loop_body
                  %v156 = vld [vmem:[%s154] sm:%s147]
                  %157 = vst [vmem:[%s155] sm:%s147] %v156
                  %v158 = vld [vmem:[%s154 + $0x4] sm:%s147]
                  %159 = vst [vmem:[%s155 + $0x4] sm:%s147] %v158
                  %v160 = vld [vmem:[%s154 + $0x10] sm:%s147]
                  %161 = vst [vmem:[%s155 + $0x8] sm:%s147] %v160
                  %v162 = vld [vmem:[%s154 + $0x14] sm:%s147]
                  %163 = vst [vmem:[%s155 + $0xc] sm:%s147] %v162
                  %v164 = vld [vmem:[%s154 + $0x20] sm:%s147]
                  %165 = vst [vmem:[%s155 + $0x10] sm:%s147] %v164
                  %v166 = vld [vmem:[%s154 + $0x24] sm:%s147]
                  %167 = vst [vmem:[%s155 + $0x14] sm:%s147] %v166
                  %v168 = vld [vmem:[%s154 + $0x30] sm:%s147]
                  %169 = vst [vmem:[%s155 + $0x18] sm:%s147] %v168
                  %v170 = vld [vmem:[%s154 + $0x34] sm:%s147]
                  %171 = vst [vmem:[%s155 + $0x1c] sm:%s147] %v170
                  %v172 = vld [vmem:[%s154 + $0x40] sm:%s147]
                  %173 = vst [vmem:[%s155 + $0x20] sm:%s147] %v172
                  %v174 = vld [vmem:[%s154 + $0x44] sm:%s147]
                  %175 = vst [vmem:[%s155 + $0x24] sm:%s147] %v174
                  %v176 = vld [vmem:[%s154 + $0x50] sm:%s147]
                  %177 = vst [vmem:[%s155 + $0x28] sm:%s147] %v176
                  %v178 = vld [vmem:[%s154 + $0x54] sm:%s147]
                  %179 = vst [vmem:[%s155 + $0x2c] sm:%s147] %v178
                  %v180 = vld [vmem:[%s154 + $0x60] sm:%s147]
                  %181 = vst [vmem:[%s155 + $0x30] sm:%s147] %v180
                  %v182 = vld [vmem:[%s154 + $0x64] sm:%s147]
                  %183 = vst [vmem:[%s155 + $0x34] sm:%s147] %v182
                  %v184 = vld [vmem:[%s154 + $0x70] sm:%s147]
                  %185 = vst [vmem:[%s155 + $0x38] sm:%s147] %v184
                  %v186 = vld [vmem:[%s154 + $0x74] sm:%s147]
                  %187 = vst [vmem:[%s155 + $0x3c] sm:%s147] %v186
                $region55: #{transformer_decoder_layer.10} parent=42 // loop_footer
                  %s153 = sadd.s32 1, %s149
                $region56: #{transformer_decoder_layer.10} parent=42 // loop_footer_branch
                  %148 = sbr.rel target = $region52
                $region57: #{transformer_decoder_layer.10} parent=42 // loop_exit
                  _
              $region43: #{transformer_decoder_layer.10} parent=27 // pred_fallthru
                _
            $region28: #{transformer_decoder_layer.10} parent=23 // pred_fallthru
              _
            // Predicated region
            $region29: #{transformer_decoder_layer.10} parent=23 // pred_check
              _
            $region30: #{transformer_decoder_layer.10} parent=23 // pred_check_branch
              %93 = sbr.rel (0) target = $region32
            $region31: #{transformer_decoder_layer.10} parent=23 // pred_region
              %s95 = ssub.s32 16, 1
              loop: start=0, step=1, limit=1
              $region33: #{transformer_decoder_layer.10} parent=31 // loop_pre_header
                _
              $region34: #{transformer_decoder_layer.10} parent=31 // loop_header
                %s97 = sphi 0, %s101
                %p98 = scmp.ge.s32.totalorder %s97, 1
                %s102 = sphi %s87, %s87
                %s103 = sphi %s84, %s84
              $region35: #{transformer_decoder_layer.10} parent=31 // loop_header_branch
                %100 = sbr.rel (%p98) target = $region39
              $region36: #{transformer_decoder_layer.10} parent=31 // loop_body
                %v104 = vld [vmem:[%s102] sm:%s95]
                %105 = vst [vmem:[%s103] sm:%s95] %v104
                %v106 = vld [vmem:[%s102 + $0x4] sm:%s95]
                %107 = vst [vmem:[%s103 + $0x4] sm:%s95] %v106
                %v108 = vld [vmem:[%s102 + $0x10] sm:%s95]
                %109 = vst [vmem:[%s103 + $0x8] sm:%s95] %v108
                %v110 = vld [vmem:[%s102 + $0x14] sm:%s95]
                %111 = vst [vmem:[%s103 + $0xc] sm:%s95] %v110
                %v112 = vld [vmem:[%s102 + $0x20] sm:%s95]
                %113 = vst [vmem:[%s103 + $0x10] sm:%s95] %v112
                %v114 = vld [vmem:[%s102 + $0x24] sm:%s95]
                %115 = vst [vmem:[%s103 + $0x14] sm:%s95] %v114
                %v116 = vld [vmem:[%s102 + $0x30] sm:%s95]
                %117 = vst [vmem:[%s103 + $0x18] sm:%s95] %v116
                %v118 = vld [vmem:[%s102 + $0x34] sm:%s95]
                %119 = vst [vmem:[%s103 + $0x1c] sm:%s95] %v118
                %v120 = vld [vmem:[%s102 + $0x40] sm:%s95]
                %121 = vst [vmem:[%s103 + $0x20] sm:%s95] %v120
                %v122 = vld [vmem:[%s102 + $0x44] sm:%s95]
                %123 = vst [vmem:[%s103 + $0x24] sm:%s95] %v122
                %v124 = vld [vmem:[%s102 + $0x50] sm:%s95]
                %125 = vst [vmem:[%s103 + $0x28] sm:%s95] %v124
                %v126 = vld [vmem:[%s102 + $0x54] sm:%s95]
                %127 = vst [vmem:[%s103 + $0x2c] sm:%s95] %v126
                %v128 = vld [vmem:[%s102 + $0x60] sm:%s95]
                %129 = vst [vmem:[%s103 + $0x30] sm:%s95] %v128
                %v130 = vld [vmem:[%s102 + $0x64] sm:%s95]
                %131 = vst [vmem:[%s103 + $0x34] sm:%s95] %v130
                %v132 = vld [vmem:[%s102 + $0x70] sm:%s95]
                %133 = vst [vmem:[%s103 + $0x38] sm:%s95] %v132
                %v134 = vld [vmem:[%s102 + $0x74] sm:%s95]
                %135 = vst [vmem:[%s103 + $0x3c] sm:%s95] %v134
              $region37: #{transformer_decoder_layer.10} parent=31 // loop_footer
                %s101 = sadd.s32 1, %s97
              $region38: #{transformer_decoder_layer.10} parent=31 // loop_footer_branch
                %96 = sbr.rel target = $region34
              $region39: #{transformer_decoder_layer.10} parent=31 // loop_exit
                _
            $region32: #{transformer_decoder_layer.10} parent=23 // pred_fallthru
              _
          $region24: #{transformer_decoder_layer.10} parent=19 // pred_fallthru
            _
          %188 = vnop
        $region20: #{transformer_decoder_layer.10} parent=15 // pred_fallthru
          _
      $region16: #{transformer_decoder_layer.10} parent=5 // pred_fallthru
        _
      %p189 = scmp.le.s32.totalorder 1, %s7
      %p190 = scmp.lt.s32.totalorder %s7, 3
      %p191 = pnand %p189, %p190
      %p192 = pneg %p191
      // Predicated region
      $region58: #{transformer_decoder_layer.10} parent=5 // pred_check
        _
      $region59: #{transformer_decoder_layer.10} parent=5 // pred_check_branch
        %194 = sbr.rel (%p191) target = $region61
      $region60: #{transformer_decoder_layer.10} parent=5 // pred_region
        %s195 = ssub.s32 %s7, 1
        %s196 = sand.u32 %s20, 1
        %s197 = sand.u32 %s20, 1
        %s198 = smul.addr %s197, 64
        %s199 = scalar_lea.vmem [#allocation2], %s198
        // Predicated region
        $region62: #{transformer_decoder_layer.10} parent=60 // pred_check
          %p200 = pneg %p33
        $region63: #{transformer_decoder_layer.10} parent=60 // pred_check_branch
          %202 = sbr.rel (%p200) target = $region65
        $region64: #{transformer_decoder_layer.10} parent=60 // pred_region
          _
        $region65: #{transformer_decoder_layer.10} parent=60 // pred_fallthru
          _
        %s203 = sand.u32 %s20, 1
        %s204 = sand.u32 %s20, 1
        %s205 = smul.addr %s204, 64
        %s206 = scalar_lea.vmem [#allocation2], %s205
        %p207 = pneg %p33
        %p208 = pneg %p30
        %p209 = pneg %p59
        %p210 = pneg %p56
        %p211 = scmp.lt.s32.totalorder %s12, 1
        %s212 = scalar_select %p211, %s12, 1
        %s213 = smul.addr %s212, 4
        %s214 = scalar_lea.vmem %s1, %s213
        %p215 = scmp.lt.s32.totalorder %s12, 1
        %s216 = scalar_select %p215, %s12, 1
        %s217 = smul.addr %s216, 4
        %s218 = scalar_lea.vmem %s1, %s217
        %v220 = vlaneseq
        %v221 = vshrl.u32 %v220, 7
        %v222 = vlaneseq
        %v223 = vand.u32 %v222, 127
        %vm224 = vcmp.gt.s32.totalorder %v223, %v221
        %v225 = vld [vmem:[%s199] sm:$0x1]
        %v226 = vld [vmem:[%s199 + $0x8] sm:$0x1]
        %v227 = vld [vmem:[%s199 + $0x10] sm:$0x1]
        %v228 = vld [vmem:[%s199 + $0x18] sm:$0x1]
        %v229 = vld [vmem:[%s199 + $0x20] sm:$0x1]
        %v230 = vld [vmem:[%s199 + $0x28] sm:$0x1]
        %v231 = vld [vmem:[%s199 + $0x30] sm:$0x1]
        %v232 = vld [vmem:[%s199 + $0x38] sm:$0x1]
        %v233 = vld [vmem:[%s199] sm:$0x4]
        %v234 = vld [vmem:[%s199 + $0x8] sm:$0x4]
        %v235 = vld [vmem:[%s199 + $0x10] sm:$0x4]
        %v236 = vld [vmem:[%s199 + $0x18] sm:$0x4]
        %v237 = vld [vmem:[%s199 + $0x20] sm:$0x4]
        %v238 = vld [vmem:[%s199 + $0x28] sm:$0x4]
        %v239 = vld [vmem:[%s199 + $0x30] sm:$0x4]
        %v240 = vld [vmem:[%s199 + $0x38] sm:$0x4]
        %v241 = vld [vmem:[%s199 + $0x4] sm:$0x1]
        %v242 = vld [vmem:[%s199 + $0xc] sm:$0x1]
        %v243 = vld [vmem:[%s199 + $0x14] sm:$0x1]
        %v244 = vld [vmem:[%s199 + $0x1c] sm:$0x1]
        %v245 = vld [vmem:[%s199 + $0x24] sm:$0x1]
        %v246 = vld [vmem:[%s199 + $0x2c] sm:$0x1]
        %v247 = vld [vmem:[%s199 + $0x34] sm:$0x1]
        %v248 = vld [vmem:[%s199 + $0x3c] sm:$0x1]
        %v257 = vunpack.c.l.b16 %v225
        %v258 = vunpack.c.l.b16 %v226
        %v259 = vunpack.c.l.b16 %v227
        %v260 = vunpack.c.l.b16 %v228
        %v261 = vunpack.c.l.b16 %v229
        %v262 = vunpack.c.l.b16 %v230
        %v263 = vunpack.c.l.b16 %v231
        %v264 = vunpack.c.l.b16 %v232
        %v265 = vpack.c.b16 %v257, %v257
        %v266 = vpack.c.b16 %v258, %v258
        %v267 = vpack.c.b16 %v259, %v259
        %v268 = vpack.c.b16 %v260, %v260
        %v269 = vpack.c.b16 %v261, %v261
        %v270 = vpack.c.b16 %v262, %v262
        %v271 = vpack.c.b16 %v263, %v263
        %v272 = vpack.c.b16 %v264, %v264
        %v273 = vunpack.c.l.b16 %v265
        %v274 = vunpack.c.l.b16 %v266
        %v275 = vunpack.c.l.b16 %v267
        %v276 = vunpack.c.l.b16 %v268
        %v277 = vunpack.c.l.b16 %v269
        %v278 = vunpack.c.l.b16 %v270
        %v279 = vunpack.c.l.b16 %v271
        %v280 = vunpack.c.l.b16 %v272
        %v281 = vrot.slane %v274, 7
        %vm282 = vcmask 1041409
        %v283 = vsel %vm282, %v281, %v273
        %v284 = vrot.slane %v275, 6
        %vm285 = vcmask 1042434
        %v286 = vsel %vm285, %v284, %v283
        %v287 = vrot.slane %v276, 5
        %vm288 = vcmask 1043459
        %v289 = vsel %vm288, %v287, %v286
        %v290 = vrot.slane %v277, 4
        %vm291 = vcmask 1044484
        %v292 = vsel %vm291, %v290, %v289
        %v293 = vrot.slane %v278, 3
        %vm294 = vcmask 1045509
        %v295 = vsel %vm294, %v293, %v292
        %v296 = vrot.slane %v279, 2
        %vm297 = vcmask 1046534
        %v298 = vsel %vm297, %v296, %v295
        %v299 = vrot.slane %v280, 1
        %vm300 = vcmask 1047559
        %v301 = vsel %vm300, %v299, %v298
        %v302 = vpack.c.b16 %v301, %v301
        %v311 = vunpack.c.l.b16 %v233
        %v312 = vunpack.c.l.b16 %v234
        %v313 = vunpack.c.l.b16 %v235
        %v314 = vunpack.c.l.b16 %v236
        %v315 = vunpack.c.l.b16 %v237
        %v316 = vunpack.c.l.b16 %v238
        %v317 = vunpack.c.l.b16 %v239
        %v318 = vunpack.c.l.b16 %v240
        %v319 = vpack.c.b16 %v311, %v311
        %v320 = vpack.c.b16 %v312, %v312
        %v321 = vpack.c.b16 %v313, %v313
        %v322 = vpack.c.b16 %v314, %v314
        %v323 = vpack.c.b16 %v315, %v315
        %v324 = vpack.c.b16 %v316, %v316
        %v325 = vpack.c.b16 %v317, %v317
        %v326 = vpack.c.b16 %v318, %v318
        %v327 = vunpack.c.l.b16 %v319
        %v328 = vunpack.c.l.b16 %v320
        %v329 = vunpack.c.l.b16 %v321
        %v330 = vunpack.c.l.b16 %v322
        %v331 = vunpack.c.l.b16 %v323
        %v332 = vunpack.c.l.b16 %v324
        %v333 = vunpack.c.l.b16 %v325
        %v334 = vunpack.c.l.b16 %v326
        %v335 = vrot.slane %v327, 4
        %v336 = vrot.slane %v328, 3
        %v337 = vsel %vm282, %v336, %v335
        %v338 = vrot.slane %v329, 2
        %v339 = vsel %vm285, %v338, %v337
        %v340 = vrot.slane %v330, 1
        %v341 = vsel %vm288, %v340, %v339
        %v342 = vsel %vm291, %v331, %v341
        %v343 = vrot.slane %v332, 7
        %v344 = vsel %vm294, %v343, %v342
        %v345 = vrot.slane %v333, 6
        %v346 = vsel %vm297, %v345, %v344
        %v347 = vrot.slane %v334, 5
        %v348 = vsel %vm300, %v347, %v346
        %v349 = vpack.c.b16 %v348, %v348
        %vm350 = vcmask 64512
        %v352 = vsel %vm350, %v302, 0
        %v355 = vsel %vm350, %v349, 0
        %357 = vmatprep.subr.bf16.mxu0 0
        %358 = vmatpush1.bf16.xpose.msra.mxu0 0
        %359 = vmatprep.subr.bf16.mxu0 0
        %360 = vmatpush1.bf16.xpose.msra.mxu0 0
        %361 = vmatprep.subr.bf16.mxu0 0
        %362 = vmatpush1.bf16.xpose.msra.mxu0 0
        %363 = vmatprep.subr.bf16.mxu0 0
        %364 = vmatpush1.bf16.xpose.msra.mxu0 0
        %365 = vmatprep.subr.bf16.mxu0 0
        %366 = vmatpush1.bf16.xpose.msra.mxu0 0
        %367 = vmatprep.subr.bf16.mxu0 0
        %368 = vmatpush1.bf16.xpose.msra.mxu0 0
        %369 = vmatprep.subr.bf16.mxu0 0
        %370 = vmatpush1.bf16.xpose.msra.mxu0 0
        %371 = vmatprep.subr.bf16.mxu0 0
        %372 = vmatpush1.bf16.xpose.msra.mxu0 %v355
        %373 = vmatprep.subr.bf16.mxu0 0
        %374 = vmatpush2.bf16.xpose.msra.mxu0 0
        %375 = vmatprep.subr.bf16.mxu0 0
        %376 = vmatpush2.bf16.xpose.msra.mxu0 0
        %377 = vmatprep.subr.bf16.mxu0 0
        %378 = vmatpush2.bf16.xpose.msra.mxu0 0
        %379 = vmatprep.subr.bf16.mxu0 0
        %380 = vmatpush2.bf16.xpose.msra.mxu0 0
        %381 = vmatprep.subr.bf16.mxu0 0
        %382 = vmatpush2.bf16.xpose.msra.mxu0 0
        %383 = vmatprep.subr.bf16.mxu0 0
        %384 = vmatpush2.bf16.xpose.msra.mxu0 0
        %385 = vmatprep.subr.bf16.mxu0 0
        %386 = vmatpush2.bf16.xpose.msra.mxu0 0
        %387 = vmatprep.subr.bf16.mxu0 0
        %388 = vmatpush2.bf16.xpose.msra.mxu0 0
        %389 = vmatprep.mubr.bf16.mxu0 0
        %390 = vmatmul.mubr.bf16.gmra.mxu0 %v352
        %v391 = vpop.f32.mrf.mxu0
        %v392 = vadd.f32 0.0, %v391
        %v393 = vpop.f32.mrf.mxu0
        %v394 = vpop.f32.mrf.mxu0
        %v395 = vpop.f32.mrf.mxu0
        %396 = vdwg.mxu0
        %v397 = vsel %vm224, -1e+30, %v392
        %v398 = vsel %vm350, %v397, -inf
        %399 = vmax.xlane.f32.xlu0 %v398
        %v400 = vpop.xlane.xlu0 %399
        %v401 = vsub.f32 %v397, %v400
        %v402 = vmul.f32 %v401, 1.442695
        %v403 = vpow.pop %v402
        %v404 = vsel %vm350, %v403, 0.0
        %405 = vadd.xlane.f32.xlu0 %v404
        %v406 = vpop.xlane.xlu0 %405
        %v407 = vpack.c.bf16 %v403, %v403
        %v416 = vunpack.c.l.b16 %v241
        %v417 = vunpack.c.l.b16 %v242
        %v418 = vunpack.c.l.b16 %v243
        %v419 = vunpack.c.l.b16 %v244
        %v420 = vunpack.c.l.b16 %v245
        %v421 = vunpack.c.l.b16 %v246
        %v422 = vunpack.c.l.b16 %v247
        %v423 = vunpack.c.l.b16 %v248
        %v424 = vpack.c.b16 %v416, %v416
        %v425 = vpack.c.b16 %v417, %v417
        %v426 = vpack.c.b16 %v418, %v418
        %v427 = vpack.c.b16 %v419, %v419
        %v428 = vpack.c.b16 %v420, %v420
        %v429 = vpack.c.b16 %v421, %v421
        %v430 = vpack.c.b16 %v422, %v422
        %v431 = vpack.c.b16 %v423, %v423
        %v432 = vunpack.c.l.b16 %v424
        %v433 = vunpack.c.l.b16 %v425
        %v434 = vunpack.c.l.b16 %v426
        %v435 = vunpack.c.l.b16 %v427
        %v436 = vunpack.c.l.b16 %v428
        %v437 = vunpack.c.l.b16 %v429
        %v438 = vunpack.c.l.b16 %v430
        %v439 = vunpack.c.l.b16 %v431
        %v440 = vrot.slane %v433, 7
        %v441 = vsel %vm282, %v440, %v432
        %v442 = vrot.slane %v434, 6
        %v443 = vsel %vm285, %v442, %v441
        %v444 = vrot.slane %v435, 5
        %v445 = vsel %vm288, %v444, %v443
        %v446 = vrot.slane %v436, 4
        %v447 = vsel %vm291, %v446, %v445
        %v448 = vrot.slane %v437, 3
        %v449 = vsel %vm294, %v448, %v447
        %v450 = vrot.slane %v438, 2
        %v451 = vsel %vm297, %v450, %v449
        %v452 = vrot.slane %v439, 1
        %v453 = vsel %vm300, %v452, %v451
        %v454 = vpack.c.b16 %v453, %v453
        %v456 = vsel %vm350, %v407, 0
        %vm458 = vcmask 1043456
        %v460 = vsel %vm458, %v454, 0
        %462 = vmatprep.subr.bf16.mxu0 0
        %463 = vmatpush1.bf16.msra.mxu0 0
        %464 = vmatprep.subr.bf16.mxu0 0
        %465 = vmatpush1.bf16.msra.mxu0 0
        %466 = vmatprep.subr.bf16.mxu0 0
        %467 = vmatpush1.bf16.msra.mxu0 0
        %468 = vmatprep.subr.bf16.mxu0 0
        %469 = vmatpush1.bf16.msra.mxu0 0
        %470 = vmatprep.subr.bf16.mxu0 0
        %471 = vmatpush1.bf16.msra.mxu0 0
        %472 = vmatprep.subr.bf16.mxu0 0
        %473 = vmatpush1.bf16.msra.mxu0 0
        %474 = vmatprep.subr.bf16.mxu0 0
        %475 = vmatpush1.bf16.msra.mxu0 0
        %476 = vmatprep.subr.bf16.mxu0 0
        %477 = vmatpush1.bf16.msra.mxu0 %v460
        %478 = vmatprep.subr.bf16.mxu0 0
        %479 = vmatpush2.bf16.msra.mxu0 0
        %480 = vmatprep.subr.bf16.mxu0 0
        %481 = vmatpush2.bf16.msra.mxu0 0
        %482 = vmatprep.subr.bf16.mxu0 0
        %483 = vmatpush2.bf16.msra.mxu0 0
        %484 = vmatprep.subr.bf16.mxu0 0
        %485 = vmatpush2.bf16.msra.mxu0 0
        %486 = vmatprep.subr.bf16.mxu0 0
        %487 = vmatpush2.bf16.msra.mxu0 0
        %488 = vmatprep.subr.bf16.mxu0 0
        %489 = vmatpush2.bf16.msra.mxu0 0
        %490 = vmatprep.subr.bf16.mxu0 0
        %491 = vmatpush2.bf16.msra.mxu0 0
        %492 = vmatprep.subr.bf16.mxu0 0
        %493 = vmatpush2.bf16.msra.mxu0 0
        %494 = vmatprep.mubr.bf16.mxu0 0
        %495 = vmatmul.mubr.bf16.gmra.mxu0 %v456
        %v496 = vpop.f32.mrf.mxu0
        %v497 = vadd.f32 0.0, %v496
        %v498 = vpop.f32.mrf.mxu0
        %v499 = vpop.f32.mrf.mxu0
        %v500 = vpop.f32.mrf.mxu0
        %501 = vdwg.mxu0
        %v502 = vrcp.pop %v406
        %v503 = vmul.f32 %v497, %v502
        %v504 = vrot.slane %v273, 1
        %v505 = vsel %vm282, %v274, %v504
        %v506 = vrot.slane %v275, 7
        %v507 = vsel %vm285, %v506, %v505
        %v508 = vrot.slane %v276, 6
        %v509 = vsel %vm288, %v508, %v507
        %v510 = vrot.slane %v277, 5
        %v511 = vsel %vm291, %v510, %v509
        %v512 = vrot.slane %v278, 4
        %v513 = vsel %vm294, %v512, %v511
        %v514 = vrot.slane %v279, 3
        %v515 = vsel %vm297, %v514, %v513
        %v516 = vrot.slane %v280, 2
        %v517 = vsel %vm300, %v516, %v515
        %v518 = vpack.c.b16 %v517, %v517
        %v519 = vrot.slane %v327, 5
        %v520 = vrot.slane %v328, 4
        %v521 = vsel %vm282, %v520, %v519
        %v522 = vrot.slane %v329, 3
        %v523 = vsel %vm285, %v522, %v521
        %v524 = vrot.slane %v330, 2
        %v525 = vsel %vm288, %v524, %v523
        %v526 = vrot.slane %v331, 1
        %v527 = vsel %vm291, %v526, %v525
        %v528 = vsel %vm294, %v332, %v527
        %v529 = vrot.slane %v333, 7
        %v530 = vsel %vm297, %v529, %v528
        %v531 = vrot.slane %v334, 6
        %v532 = vsel %vm300, %v531, %v530
        %v533 = vpack.c.b16 %v532, %v532
        %v535 = vsel %vm350, %v518, 0
        %v538 = vsel %vm350, %v533, 0
        %540 = vmatprep.subr.bf16.mxu0 0
        %541 = vmatpush1.bf16.xpose.msra.mxu0 0
        %542 = vmatprep.subr.bf16.mxu0 0
        %543 = vmatpush1.bf16.xpose.msra.mxu0 0
        %544 = vmatprep.subr.bf16.mxu0 0
        %545 = vmatpush1.bf16.xpose.msra.mxu0 0
        %546 = vmatprep.subr.bf16.mxu0 0
        %547 = vmatpush1.bf16.xpose.msra.mxu0 0
        %548 = vmatprep.subr.bf16.mxu0 0
        %549 = vmatpush1.bf16.xpose.msra.mxu0 0
        %550 = vmatprep.subr.bf16.mxu0 0
        %551 = vmatpush1.bf16.xpose.msra.mxu0 0
        %552 = vmatprep.subr.bf16.mxu0 0
        %553 = vmatpush1.bf16.xpose.msra.mxu0 0
        %554 = vmatprep.subr.bf16.mxu0 0
        %555 = vmatpush1.bf16.xpose.msra.mxu0 %v538
        %556 = vmatprep.subr.bf16.mxu0 0
        %557 = vmatpush2.bf16.xpose.msra.mxu0 0
        %558 = vmatprep.subr.bf16.mxu0 0
        %559 = vmatpush2.bf16.xpose.msra.mxu0 0
        %560 = vmatprep.subr.bf16.mxu0 0
        %561 = vmatpush2.bf16.xpose.msra.mxu0 0
        %562 = vmatprep.subr.bf16.mxu0 0
        %563 = vmatpush2.bf16.xpose.msra.mxu0 0
        %564 = vmatprep.subr.bf16.mxu0 0
        %565 = vmatpush2.bf16.xpose.msra.mxu0 0
        %566 = vmatprep.subr.bf16.mxu0 0
        %567 = vmatpush2.bf16.xpose.msra.mxu0 0
        %568 = vmatprep.subr.bf16.mxu0 0
        %569 = vmatpush2.bf16.xpose.msra.mxu0 0
        %570 = vmatprep.subr.bf16.mxu0 0
        %571 = vmatpush2.bf16.xpose.msra.mxu0 0
        %572 = vmatprep.mubr.bf16.mxu0 0
        %573 = vmatmul.mubr.bf16.gmra.mxu0 %v535
        %v574 = vpop.f32.mrf.mxu0
        %v575 = vadd.f32 0.0, %v574
        %v576 = vpop.f32.mrf.mxu0
        %v577 = vpop.f32.mrf.mxu0
        %v578 = vpop.f32.mrf.mxu0
        %579 = vdwg.mxu0
        %v580 = vsel %vm224, -1e+30, %v575
        %v581 = vsel %vm350, %v580, -inf
        %582 = vmax.xlane.f32.xlu0 %v581
        %v583 = vpop.xlane.xlu0 %582
        %v584 = vsub.f32 %v580, %v583
        %v585 = vmul.f32 %v584, 1.442695
        %v586 = vpow.pop %v585
        %v587 = vsel %vm350, %v586, 0.0
        %588 = vadd.xlane.f32.xlu0 %v587
        %v589 = vpop.xlane.xlu0 %588
        %v590 = vpack.c.bf16 %v586, %v586
        %v591 = vrot.slane %v432, 1
        %v592 = vsel %vm282, %v433, %v591
        %v593 = vrot.slane %v434, 7
        %v594 = vsel %vm285, %v593, %v592
        %v595 = vrot.slane %v435, 6
        %v596 = vsel %vm288, %v595, %v594
        %v597 = vrot.slane %v436, 5
        %v598 = vsel %vm291, %v597, %v596
        %v599 = vrot.slane %v437, 4
        %v600 = vsel %vm294, %v599, %v598
        %v601 = vrot.slane %v438, 3
        %v602 = vsel %vm297, %v601, %v600
        %v603 = vrot.slane %v439, 2
        %v604 = vsel %vm300, %v603, %v602
        %v605 = vpack.c.b16 %v604, %v604
        %v607 = vsel %vm350, %v590, 0
        %v610 = vsel %vm458, %v605, 0
        %612 = vmatprep.subr.bf16.mxu0 0
        %613 = vmatpush1.bf16.msra.mxu0 0
        %614 = vmatprep.subr.bf16.mxu0 0
        %615 = vmatpush1.bf16.msra.mxu0 0
        %616 = vmatprep.subr.bf16.mxu0 0
        %617 = vmatpush1.bf16.msra.mxu0 0
        %618 = vmatprep.subr.bf16.mxu0 0
        %619 = vmatpush1.bf16.msra.mxu0 0
        %620 = vmatprep.subr.bf16.mxu0 0
        %621 = vmatpush1.bf16.msra.mxu0 0
        %622 = vmatprep.subr.bf16.mxu0 0
        %623 = vmatpush1.bf16.msra.mxu0 0
        %624 = vmatprep.subr.bf16.mxu0 0
        %625 = vmatpush1.bf16.msra.mxu0 0
        %626 = vmatprep.subr.bf16.mxu0 0
        %627 = vmatpush1.bf16.msra.mxu0 %v610
        %628 = vmatprep.subr.bf16.mxu0 0
        %629 = vmatpush2.bf16.msra.mxu0 0
        %630 = vmatprep.subr.bf16.mxu0 0
        %631 = vmatpush2.bf16.msra.mxu0 0
        %632 = vmatprep.subr.bf16.mxu0 0
        %633 = vmatpush2.bf16.msra.mxu0 0
        %634 = vmatprep.subr.bf16.mxu0 0
        %635 = vmatpush2.bf16.msra.mxu0 0
        %636 = vmatprep.subr.bf16.mxu0 0
        %637 = vmatpush2.bf16.msra.mxu0 0
        %638 = vmatprep.subr.bf16.mxu0 0
        %639 = vmatpush2.bf16.msra.mxu0 0
        %640 = vmatprep.subr.bf16.mxu0 0
        %641 = vmatpush2.bf16.msra.mxu0 0
        %642 = vmatprep.subr.bf16.mxu0 0
        %643 = vmatpush2.bf16.msra.mxu0 0
        %644 = vmatprep.mubr.bf16.mxu0 0
        %645 = vmatmul.mubr.bf16.gmra.mxu0 %v607
        %v646 = vpop.f32.mrf.mxu0
        %v647 = vadd.f32 0.0, %v646
        %v648 = vpop.f32.mrf.mxu0
        %v649 = vpop.f32.mrf.mxu0
        %v650 = vpop.f32.mrf.mxu0
        %651 = vdwg.mxu0
        %v652 = vrcp.pop %v589
        %v653 = vmul.f32 %v647, %v652
        %v654 = vld [vmem:[%s199] sm:$0x2]
        %v655 = vld [vmem:[%s199 + $0x8] sm:$0x2]
        %v656 = vld [vmem:[%s199 + $0x10] sm:$0x2]
        %v657 = vld [vmem:[%s199 + $0x18] sm:$0x2]
        %v658 = vld [vmem:[%s199 + $0x20] sm:$0x2]
        %v659 = vld [vmem:[%s199 + $0x28] sm:$0x2]
        %v660 = vld [vmem:[%s199 + $0x30] sm:$0x2]
        %v661 = vld [vmem:[%s199 + $0x38] sm:$0x2]
        %v662 = vld [vmem:[%s199] sm:$0x8]
        %v663 = vld [vmem:[%s199 + $0x8] sm:$0x8]
        %v664 = vld [vmem:[%s199 + $0x10] sm:$0x8]
        %v665 = vld [vmem:[%s199 + $0x18] sm:$0x8]
        %v666 = vld [vmem:[%s199 + $0x20] sm:$0x8]
        %v667 = vld [vmem:[%s199 + $0x28] sm:$0x8]
        %v668 = vld [vmem:[%s199 + $0x30] sm:$0x8]
        %v669 = vld [vmem:[%s199 + $0x38] sm:$0x8]
        %v670 = vld [vmem:[%s199 + $0x4] sm:$0x2]
        %v671 = vld [vmem:[%s199 + $0xc] sm:$0x2]
        %v672 = vld [vmem:[%s199 + $0x14] sm:$0x2]
        %v673 = vld [vmem:[%s199 + $0x1c] sm:$0x2]
        %v674 = vld [vmem:[%s199 + $0x24] sm:$0x2]
        %v675 = vld [vmem:[%s199 + $0x2c] sm:$0x2]
        %v676 = vld [vmem:[%s199 + $0x34] sm:$0x2]
        %v677 = vld [vmem:[%s199 + $0x3c] sm:$0x2]
        %v686 = vunpack.c.l.b16 %v654
        %v687 = vunpack.c.l.b16 %v655
        %v688 = vunpack.c.l.b16 %v656
        %v689 = vunpack.c.l.b16 %v657
        %v690 = vunpack.c.l.b16 %v658
        %v691 = vunpack.c.l.b16 %v659
        %v692 = vunpack.c.l.b16 %v660
        %v693 = vunpack.c.l.b16 %v661
        %v694 = vpack.c.b16 %v686, %v686
        %v695 = vpack.c.b16 %v687, %v687
        %v696 = vpack.c.b16 %v688, %v688
        %v697 = vpack.c.b16 %v689, %v689
        %v698 = vpack.c.b16 %v690, %v690
        %v699 = vpack.c.b16 %v691, %v691
        %v700 = vpack.c.b16 %v692, %v692
        %v701 = vpack.c.b16 %v693, %v693
        %v702 = vunpack.c.l.b16 %v694
        %v703 = vunpack.c.l.b16 %v695
        %v704 = vunpack.c.l.b16 %v696
        %v705 = vunpack.c.l.b16 %v697
        %v706 = vunpack.c.l.b16 %v698
        %v707 = vunpack.c.l.b16 %v699
        %v708 = vunpack.c.l.b16 %v700
        %v709 = vunpack.c.l.b16 %v701
        %v710 = vrot.slane %v702, 2
        %v711 = vrot.slane %v703, 1
        %v712 = vsel %vm282, %v711, %v710
        %v713 = vsel %vm285, %v704, %v712
        %v714 = vrot.slane %v705, 7
        %v715 = vsel %vm288, %v714, %v713
        %v716 = vrot.slane %v706, 6
        %v717 = vsel %vm291, %v716, %v715
        %v718 = vrot.slane %v707, 5
        %v719 = vsel %vm294, %v718, %v717
        %v720 = vrot.slane %v708, 4
        %v721 = vsel %vm297, %v720, %v719
        %v722 = vrot.slane %v709, 3
        %v723 = vsel %vm300, %v722, %v721
        %v724 = vpack.c.b16 %v723, %v723
        %v733 = vunpack.c.l.b16 %v662
        %v734 = vunpack.c.l.b16 %v663
        %v735 = vunpack.c.l.b16 %v664
        %v736 = vunpack.c.l.b16 %v665
        %v737 = vunpack.c.l.b16 %v666
        %v738 = vunpack.c.l.b16 %v667
        %v739 = vunpack.c.l.b16 %v668
        %v740 = vunpack.c.l.b16 %v669
        %v741 = vpack.c.b16 %v733, %v733
        %v742 = vpack.c.b16 %v734, %v734
        %v743 = vpack.c.b16 %v735, %v735
        %v744 = vpack.c.b16 %v736, %v736
        %v745 = vpack.c.b16 %v737, %v737
        %v746 = vpack.c.b16 %v738, %v738
        %v747 = vpack.c.b16 %v739, %v739
        %v748 = vpack.c.b16 %v740, %v740
        %v749 = vunpack.c.l.b16 %v741
        %v750 = vunpack.c.l.b16 %v742
        %v751 = vunpack.c.l.b16 %v743
        %v752 = vunpack.c.l.b16 %v744
        %v753 = vunpack.c.l.b16 %v745
        %v754 = vunpack.c.l.b16 %v746
        %v755 = vunpack.c.l.b16 %v747
        %v756 = vunpack.c.l.b16 %v748
        %v757 = vrot.slane %v749, 6
        %v758 = vrot.slane %v750, 5
        %v759 = vsel %vm282, %v758, %v757
        %v760 = vrot.slane %v751, 4
        %v761 = vsel %vm285, %v760, %v759
        %v762 = vrot.slane %v752, 3
        %v763 = vsel %vm288, %v762, %v761
        %v764 = vrot.slane %v753, 2
        %v765 = vsel %vm291, %v764, %v763
        %v766 = vrot.slane %v754, 1
        %v767 = vsel %vm294, %v766, %v765
        %v768 = vsel %vm297, %v755, %v767
        %v769 = vrot.slane %v756, 7
        %v770 = vsel %vm300, %v769, %v768
        %v771 = vpack.c.b16 %v770, %v770
        %v773 = vsel %vm350, %v724, 0
        %v776 = vsel %vm350, %v771, 0
        %778 = vmatprep.subr.bf16.mxu0 0
        %779 = vmatpush1.bf16.xpose.msra.mxu0 0
        %780 = vmatprep.subr.bf16.mxu0 0
        %781 = vmatpush1.bf16.xpose.msra.mxu0 0
        %782 = vmatprep.subr.bf16.mxu0 0
        %783 = vmatpush1.bf16.xpose.msra.mxu0 0
        %784 = vmatprep.subr.bf16.mxu0 0
        %785 = vmatpush1.bf16.xpose.msra.mxu0 0
        %786 = vmatprep.subr.bf16.mxu0 0
        %787 = vmatpush1.bf16.xpose.msra.mxu0 0
        %788 = vmatprep.subr.bf16.mxu0 0
        %789 = vmatpush1.bf16.xpose.msra.mxu0 0
        %790 = vmatprep.subr.bf16.mxu0 0
        %791 = vmatpush1.bf16.xpose.msra.mxu0 0
        %792 = vmatprep.subr.bf16.mxu0 0
        %793 = vmatpush1.bf16.xpose.msra.mxu0 %v776
        %794 = vmatprep.subr.bf16.mxu0 0
        %795 = vmatpush2.bf16.xpose.msra.mxu0 0
        %796 = vmatprep.subr.bf16.mxu0 0
        %797 = vmatpush2.bf16.xpose.msra.mxu0 0
        %798 = vmatprep.subr.bf16.mxu0 0
        %799 = vmatpush2.bf16.xpose.msra.mxu0 0
        %800 = vmatprep.subr.bf16.mxu0 0
        %801 = vmatpush2.bf16.xpose.msra.mxu0 0
        %802 = vmatprep.subr.bf16.mxu0 0
        %803 = vmatpush2.bf16.xpose.msra.mxu0 0
        %804 = vmatprep.subr.bf16.mxu0 0
        %805 = vmatpush2.bf16.xpose.msra.mxu0 0
        %806 = vmatprep.subr.bf16.mxu0 0
        %807 = vmatpush2.bf16.xpose.msra.mxu0 0
        %808 = vmatprep.subr.bf16.mxu0 0
        %809 = vmatpush2.bf16.xpose.msra.mxu0 0
        %810 = vmatprep.mubr.bf16.mxu0 0
        %811 = vmatmul.mubr.bf16.gmra.mxu0 %v773
        %v812 = vpop.f32.mrf.mxu0
        %v813 = vadd.f32 0.0, %v812
        %v814 = vpop.f32.mrf.mxu0
        %v815 = vpop.f32.mrf.mxu0
        %v816 = vpop.f32.mrf.mxu0
        %817 = vdwg.mxu0
        %v818 = vsel %vm224, -1e+30, %v813
        %v819 = vsel %vm350, %v818, -inf
        %820 = vmax.xlane.f32.xlu0 %v819
        %v821 = vpop.xlane.xlu0 %820
        %v822 = vsub.f32 %v818, %v821
        %v823 = vmul.f32 %v822, 1.442695
        %v824 = vpow.pop %v823
        %v825 = vsel %vm350, %v824, 0.0
        %826 = vadd.xlane.f32.xlu0 %v825
        %v827 = vpop.xlane.xlu0 %826
        %v828 = vpack.c.bf16 %v824, %v824
        %v837 = vunpack.c.l.b16 %v670
        %v838 = vunpack.c.l.b16 %v671
        %v839 = vunpack.c.l.b16 %v672
        %v840 = vunpack.c.l.b16 %v673
        %v841 = vunpack.c.l.b16 %v674
        %v842 = vunpack.c.l.b16 %v675
        %v843 = vunpack.c.l.b16 %v676
        %v844 = vunpack.c.l.b16 %v677
        %v845 = vpack.c.b16 %v837, %v837
        %v846 = vpack.c.b16 %v838, %v838
        %v847 = vpack.c.b16 %v839, %v839
        %v848 = vpack.c.b16 %v840, %v840
        %v849 = vpack.c.b16 %v841, %v841
        %v850 = vpack.c.b16 %v842, %v842
        %v851 = vpack.c.b16 %v843, %v843
        %v852 = vpack.c.b16 %v844, %v844
        %v853 = vunpack.c.l.b16 %v845
        %v854 = vunpack.c.l.b16 %v846
        %v855 = vunpack.c.l.b16 %v847
        %v856 = vunpack.c.l.b16 %v848
        %v857 = vunpack.c.l.b16 %v849
        %v858 = vunpack.c.l.b16 %v850
        %v859 = vunpack.c.l.b16 %v851
        %v860 = vunpack.c.l.b16 %v852
        %v861 = vrot.slane %v853, 2
        %v862 = vrot.slane %v854, 1
        %v863 = vsel %vm282, %v862, %v861
        %v864 = vsel %vm285, %v855, %v863
        %v865 = vrot.slane %v856, 7
        %v866 = vsel %vm288, %v865, %v864
        %v867 = vrot.slane %v857, 6
        %v868 = vsel %vm291, %v867, %v866
        %v869 = vrot.slane %v858, 5
        %v870 = vsel %vm294, %v869, %v868
        %v871 = vrot.slane %v859, 4
        %v872 = vsel %vm297, %v871, %v870
        %v873 = vrot.slane %v860, 3
        %v874 = vsel %vm300, %v873, %v872
        %v875 = vpack.c.b16 %v874, %v874
        %v877 = vsel %vm350, %v828, 0
        %v880 = vsel %vm458, %v875, 0
        %882 = vmatprep.subr.bf16.mxu0 0
        %883 = vmatpush1.bf16.msra.mxu0 0
        %884 = vmatprep.subr.bf16.mxu0 0
        %885 = vmatpush1.bf16.msra.mxu0 0
        %886 = vmatprep.subr.bf16.mxu0 0
        %887 = vmatpush1.bf16.msra.mxu0 0
        %888 = vmatprep.subr.bf16.mxu0 0
        %889 = vmatpush1.bf16.msra.mxu0 0
        %890 = vmatprep.subr.bf16.mxu0 0
        %891 = vmatpush1.bf16.msra.mxu0 0
        %892 = vmatprep.subr.bf16.mxu0 0
        %893 = vmatpush1.bf16.msra.mxu0 0
        %894 = vmatprep.subr.bf16.mxu0 0
        %895 = vmatpush1.bf16.msra.mxu0 0
        %896 = vmatprep.subr.bf16.mxu0 0
        %897 = vmatpush1.bf16.msra.mxu0 %v880
        %898 = vmatprep.subr.bf16.mxu0 0
        %899 = vmatpush2.bf16.msra.mxu0 0
        %900 = vmatprep.subr.bf16.mxu0 0
        %901 = vmatpush2.bf16.msra.mxu0 0
        %902 = vmatprep.subr.bf16.mxu0 0
        %903 = vmatpush2.bf16.msra.mxu0 0
        %904 = vmatprep.subr.bf16.mxu0 0
        %905 = vmatpush2.bf16.msra.mxu0 0
        %906 = vmatprep.subr.bf16.mxu0 0
        %907 = vmatpush2.bf16.msra.mxu0 0
        %908 = vmatprep.subr.bf16.mxu0 0
        %909 = vmatpush2.bf16.msra.mxu0 0
        %910 = vmatprep.subr.bf16.mxu0 0
        %911 = vmatpush2.bf16.msra.mxu0 0
        %912 = vmatprep.subr.bf16.mxu0 0
        %913 = vmatpush2.bf16.msra.mxu0 0
        %914 = vmatprep.mubr.bf16.mxu0 0
        %915 = vmatmul.mubr.bf16.gmra.mxu0 %v877
        %v916 = vpop.f32.mrf.mxu0
        %v917 = vadd.f32 0.0, %v916
        %v918 = vpop.f32.mrf.mxu0
        %v919 = vpop.f32.mrf.mxu0
        %v920 = vpop.f32.mrf.mxu0
        %921 = vdwg.mxu0
        %v922 = vrcp.pop %v827
        %v923 = vmul.f32 %v917, %v922
        %v924 = vrot.slane %v702, 3
        %v925 = vrot.slane %v703, 2
        %v926 = vsel %vm282, %v925, %v924
        %v927 = vrot.slane %v704, 1
        %v928 = vsel %vm285, %v927, %v926
        %v929 = vsel %vm288, %v705, %v928
        %v930 = vrot.slane %v706, 7
        %v931 = vsel %vm291, %v930, %v929
        %v932 = vrot.slane %v707, 6
        %v933 = vsel %vm294, %v932, %v931
        %v934 = vrot.slane %v708, 5
        %v935 = vsel %vm297, %v934, %v933
        %v936 = vrot.slane %v709, 4
        %v937 = vsel %vm300, %v936, %v935
        %v938 = vpack.c.b16 %v937, %v937
        %v939 = vrot.slane %v749, 7
        %v940 = vrot.slane %v750, 6
        %v941 = vsel %vm282, %v940, %v939
        %v942 = vrot.slane %v751, 5
        %v943 = vsel %vm285, %v942, %v941
        %v944 = vrot.slane %v752, 4
        %v945 = vsel %vm288, %v944, %v943
        %v946 = vrot.slane %v753, 3
        %v947 = vsel %vm291, %v946, %v945
        %v948 = vrot.slane %v754, 2
        %v949 = vsel %vm294, %v948, %v947
        %v950 = vrot.slane %v755, 1
        %v951 = vsel %vm297, %v950, %v949
        %v952 = vsel %vm300, %v756, %v951
        %v953 = vpack.c.b16 %v952, %v952
        %v955 = vsel %vm350, %v938, 0
        %v958 = vsel %vm350, %v953, 0
        %960 = vmatprep.subr.bf16.mxu0 0
        %961 = vmatpush1.bf16.xpose.msra.mxu0 0
        %962 = vmatprep.subr.bf16.mxu0 0
        %963 = vmatpush1.bf16.xpose.msra.mxu0 0
        %964 = vmatprep.subr.bf16.mxu0 0
        %965 = vmatpush1.bf16.xpose.msra.mxu0 0
        %966 = vmatprep.subr.bf16.mxu0 0
        %967 = vmatpush1.bf16.xpose.msra.mxu0 0
        %968 = vmatprep.subr.bf16.mxu0 0
        %969 = vmatpush1.bf16.xpose.msra.mxu0 0
        %970 = vmatprep.subr.bf16.mxu0 0
        %971 = vmatpush1.bf16.xpose.msra.mxu0 0
        %972 = vmatprep.subr.bf16.mxu0 0
        %973 = vmatpush1.bf16.xpose.msra.mxu0 0
        %974 = vmatprep.subr.bf16.mxu0 0
        %975 = vmatpush1.bf16.xpose.msra.mxu0 %v958
        %976 = vmatprep.subr.bf16.mxu0 0
        %977 = vmatpush2.bf16.xpose.msra.mxu0 0
        %978 = vmatprep.subr.bf16.mxu0 0
        %979 = vmatpush2.bf16.xpose.msra.mxu0 0
        %980 = vmatprep.subr.bf16.mxu0 0
        %981 = vmatpush2.bf16.xpose.msra.mxu0 0
        %982 = vmatprep.subr.bf16.mxu0 0
        %983 = vmatpush2.bf16.xpose.msra.mxu0 0
        %984 = vmatprep.subr.bf16.mxu0 0
        %985 = vmatpush2.bf16.xpose.msra.mxu0 0
        %986 = vmatprep.subr.bf16.mxu0 0
        %987 = vmatpush2.bf16.xpose.msra.mxu0 0
        %988 = vmatprep.subr.bf16.mxu0 0
        %989 = vmatpush2.bf16.xpose.msra.mxu0 0
        %990 = vmatprep.subr.bf16.mxu0 0
        %991 = vmatpush2.bf16.xpose.msra.mxu0 0
        %992 = vmatprep.mubr.bf16.mxu0 0
        %993 = vmatmul.mubr.bf16.gmra.mxu0 %v955
        %v994 = vpop.f32.mrf.mxu0
        %v995 = vadd.f32 0.0, %v994
        %v996 = vpop.f32.mrf.mxu0
        %v997 = vpop.f32.mrf.mxu0
        %v998 = vpop.f32.mrf.mxu0
        %999 = vdwg.mxu0
        %v1000 = vsel %vm224, -1e+30, %v995
        %v1001 = vsel %vm350, %v1000, -inf
        %1002 = vmax.xlane.f32.xlu0 %v1001
        %v1003 = vpop.xlane.xlu0 %1002
        %v1004 = vsub.f32 %v1000, %v1003
        %v1005 = vmul.f32 %v1004, 1.442695
        %v1006 = vpow.pop %v1005
        %v1007 = vsel %vm350, %v1006, 0.0
        %1008 = vadd.xlane.f32.xlu0 %v1007
        %v1009 = vpop.xlane.xlu0 %1008
        %v1010 = vpack.c.bf16 %v1006, %v1006
        %v1011 = vrot.slane %v853, 3
        %v1012 = vrot.slane %v854, 2
        %v1013 = vsel %vm282, %v1012, %v1011
        %v1014 = vrot.slane %v855, 1
        %v1015 = vsel %vm285, %v1014, %v1013
        %v1016 = vsel %vm288, %v856, %v1015
        %v1017 = vrot.slane %v857, 7
        %v1018 = vsel %vm291, %v1017, %v1016
        %v1019 = vrot.slane %v858, 6
        %v1020 = vsel %vm294, %v1019, %v1018
        %v1021 = vrot.slane %v859, 5
        %v1022 = vsel %vm297, %v1021, %v1020
        %v1023 = vrot.slane %v860, 4
        %v1024 = vsel %vm300, %v1023, %v1022
        %v1025 = vpack.c.b16 %v1024, %v1024
        %v1027 = vsel %vm350, %v1010, 0
        %v1030 = vsel %vm458, %v1025, 0
        %1032 = vmatprep.subr.bf16.mxu0 0
        %1033 = vmatpush1.bf16.msra.mxu0 0
        %1034 = vmatprep.subr.bf16.mxu0 0
        %1035 = vmatpush1.bf16.msra.mxu0 0
        %1036 = vmatprep.subr.bf16.mxu0 0
        %1037 = vmatpush1.bf16.msra.mxu0 0
        %1038 = vmatprep.subr.bf16.mxu0 0
        %1039 = vmatpush1.bf16.msra.mxu0 0
        %1040 = vmatprep.subr.bf16.mxu0 0
        %1041 = vmatpush1.bf16.msra.mxu0 0
        %1042 = vmatprep.subr.bf16.mxu0 0
        %1043 = vmatpush1.bf16.msra.mxu0 0
        %1044 = vmatprep.subr.bf16.mxu0 0
        %1045 = vmatpush1.bf16.msra.mxu0 0
        %1046 = vmatprep.subr.bf16.mxu0 0
        %1047 = vmatpush1.bf16.msra.mxu0 %v1030
        %1048 = vmatprep.subr.bf16.mxu0 0
        %1049 = vmatpush2.bf16.msra.mxu0 0
        %1050 = vmatprep.subr.bf16.mxu0 0
        %1051 = vmatpush2.bf16.msra.mxu0 0
        %1052 = vmatprep.subr.bf16.mxu0 0
        %1053 = vmatpush2.bf16.msra.mxu0 0
        %1054 = vmatprep.subr.bf16.mxu0 0
        %1055 = vmatpush2.bf16.msra.mxu0 0
        %1056 = vmatprep.subr.bf16.mxu0 0
        %1057 = vmatpush2.bf16.msra.mxu0 0
        %1058 = vmatprep.subr.bf16.mxu0 0
        %1059 = vmatpush2.bf16.msra.mxu0 0
        %1060 = vmatprep.subr.bf16.mxu0 0
        %1061 = vmatpush2.bf16.msra.mxu0 0
        %1062 = vmatprep.subr.bf16.mxu0 0
        %1063 = vmatpush2.bf16.msra.mxu0 0
        %1064 = vmatprep.mubr.bf16.mxu0 0
        %1065 = vmatmul.mubr.bf16.gmra.mxu0 %v1027
        %v1066 = vpop.f32.mrf.mxu0
        %v1067 = vadd.f32 0.0, %v1066
        %v1068 = vpop.f32.mrf.mxu0
        %v1069 = vpop.f32.mrf.mxu0
        %v1070 = vpop.f32.mrf.mxu0
        %1071 = vdwg.mxu0
        %v1072 = vrcp.pop %v1009
        %v1073 = vmul.f32 %v1067, %v1072
        %1075 = vrot.lane.b32.xlu0 %v653, 8
        %v1076 = vpop.permute.xlu0 %1075
        %1079 = vrot.lane.b32.xlu0 %v923, 16
        %v1080 = vpop.permute.xlu0 %1079
        %1083 = vrot.lane.b32.xlu0 %v1073, 24
        %v1084 = vpop.permute.xlu0 %1083
        %v1086 = vsel %vm350, %v503, %v1076
        %vm1087 = vcmask 130048
        %v1088 = vsel %vm1087, %v1086, %v1080
        %vm1089 = vcmask 195584
        %v1090 = vsel %vm1089, %v1088, %v1084
        %v1091 = vpack.c.bf16 %v1090, %v1090
        %vm1092 = vcmask 257024
        %1093 = vst.msk [vmem:[%s218] sm:$0xf] %vm1092, %v1091
        %p1094 = scmp.lt.s32.totalorder %s12, 1
        %s1095 = scalar_select %p1094, %s12, 1
        %s1096 = smul.addr %s1095, 4
        %s1097 = scalar_lea.vmem %s1, %s1096
        // Predicated region
        $region66: #{transformer_decoder_layer.10} parent=60 // pred_check
          %p1098 = pneg %p56
        $region67: #{transformer_decoder_layer.10} parent=60 // pred_check_branch
          %1100 = sbr.rel (%p1098) target = $region69
        $region68: #{transformer_decoder_layer.10} parent=60 // pred_region
          _
        $region69: #{transformer_decoder_layer.10} parent=60 // pred_fallthru
          _
      $region61: #{transformer_decoder_layer.10} parent=5 // pred_fallthru
        _
      %p1101 = scmp.le.s32.totalorder 2, %s7
      // Predicated region
      $region70: #{transformer_decoder_layer.10} parent=5 // pred_check
        %p1102 = pneg %p1101
      $region71: #{transformer_decoder_layer.10} parent=5 // pred_check_branch
        %1104 = sbr.rel (%p1102) target = $region73
      $region72: #{transformer_decoder_layer.10} parent=5 // pred_region
        %s1105 = ssub.s32 %s7, 2
        // Predicated region
        $region74: #{transformer_decoder_layer.10} parent=72 // pred_check
          %p1106 = pneg %p62
        $region75: #{transformer_decoder_layer.10} parent=72 // pred_check_branch
          %1108 = sbr.rel (%p1106) target = $region77
        $region76: #{transformer_decoder_layer.10} parent=72 // pred_region
          %p1109 = scmp.lt.s32.totalorder %s13, 1
          %s1110 = scalar_select %p1109, %s13, 1
          %s1111 = smul.addr %s1110, 4
          %s1112 = scalar_lea.vmem %s1, %s1111
        $region77: #{transformer_decoder_layer.10} parent=72 // pred_fallthru
          _
      $region73: #{transformer_decoder_layer.10} parent=5 // pred_fallthru
        _
    $region6: #{transformer_decoder_layer.10} parent=1 // loop_footer
      %s11 = sadd.s32 1, %s7
    $region7: #{transformer_decoder_layer.10} parent=1 // loop_footer_branch
      %6 = sbr.rel target = $region3
    $region8: #{transformer_decoder_layer.10} parent=1 // loop_exit
      _

// kernel: transformer_decoder_layer.13
$region0: #{transformer_decoder_layer.13}
  #allocation0 [shape = 'u32[]', space=smem, size = 0x4, offset = 0x4, fixed_abs, tag = 'smem constant byte address 0x4 - core index']
  #allocation1 [shape = 'u32[144,128]{1,0:T(1,128)}', space=vmem, size = 0x12000, scoped, tag = 'internal scratch']
  #allocation2 [shape = 'f32[32,64]{1,0:T(8,128)}', space=vmem, size = 0x4000, scoped, tag = 'scratch operand']
  %s0 = inlined_call_operand.vmem [shape: f32[32,32], index: 0, kind: input, shape index: {}]
  %s1 = inlined_call_operand.vmem [shape: bf16[32,64], index: 1, kind: input, shape index: {}]
  %s2 = inlined_call_operand.vmem [shape: f32[1,64], index: 2, kind: input, shape index: {}]
  %s3 = inlined_call_operand.vmem [shape: bf16[32,64], index: 3, kind: output, shape index: {}]
  %s4 = sld [smem:[#allocation0]]
  $region30: #{transformer_decoder_layer.13} parent=0
    _
  %s6 = ssub.s32 1, %s4
  %s7 = scalar_select 0, %s6, %s4
  // Predicated region
  $region2: #{transformer_decoder_layer.13} parent=0 // pred_check
    _
  $region3: #{transformer_decoder_layer.13} parent=0 // pred_check_branch
    %9 = sbr.rel (0) target = $region5
  $region4: #{transformer_decoder_layer.13} parent=0 // pred_region
    _
  $region5: #{transformer_decoder_layer.13} parent=0 // pred_fallthru
    _
  // Predicated region
  $region6: #{transformer_decoder_layer.13} parent=0 // pred_check
    _
  $region7: #{transformer_decoder_layer.13} parent=0 // pred_check_branch
    %11 = sbr.rel (0) target = $region9
  $region8: #{transformer_decoder_layer.13} parent=0 // pred_region
    _
  $region9: #{transformer_decoder_layer.13} parent=0 // pred_fallthru
    _
  // Predicated region
  $region10: #{transformer_decoder_layer.13} parent=0 // pred_check
    _
  $region11: #{transformer_decoder_layer.13} parent=0 // pred_check_branch
    %13 = sbr.rel (0) target = $region13
  $region12: #{transformer_decoder_layer.13} parent=0 // pred_region
    _
  $region13: #{transformer_decoder_layer.13} parent=0 // pred_fallthru
    _
  %p15 = scmp.eq.s32.totalorder 0, 0
  // Predicated region
  $region14: #{transformer_decoder_layer.13} parent=0 // pred_check
    %p16 = pneg %p15
  $region15: #{transformer_decoder_layer.13} parent=0 // pred_check_branch
    %18 = sbr.rel (%p16) target = $region17
  $region16: #{transformer_decoder_layer.13} parent=0 // pred_region
    %vm19 = vcmask 523264
    %20 = vst.msk [vmem:[#allocation2] sm:$0xff] %vm19, 0.0
    %21 = vst.msk [vmem:[#allocation2 + $0x8] sm:$0xff] %vm19, 0.0
    %22 = vst.msk [vmem:[#allocation2 + $0x10] sm:$0xff] %vm19, 0.0
    %23 = vst.msk [vmem:[#allocation2 + $0x18] sm:$0xff] %vm19, 0.0
  $region17: #{transformer_decoder_layer.13} parent=0 // pred_fallthru
    _
  %v24 = vld [vmem:[#allocation2] sm:$0xff]
  %v25 = vld [vmem:[#allocation2 + $0x8] sm:$0xff]
  %v26 = vld [vmem:[#allocation2 + $0x10] sm:$0xff]
  %v27 = vld [vmem:[#allocation2 + $0x18] sm:$0xff]
  %v28 = vld [vmem:[%s0] sm:$0xff]
  %v29 = vld [vmem:[%s0 + $0x8] sm:$0xff]
  %v30 = vld [vmem:[%s0 + $0x10] sm:$0xff]
  %v31 = vld [vmem:[%s0 + $0x18] sm:$0xff]
  %v32 = vpack.c.bf16 %v29, %v28
  %v33 = vpack.c.bf16 %v31, %v30
  %v34 = vld [vmem:[%s1] sm:$0xf]
  %v35 = vld [vmem:[%s1 + $0x4] sm:$0xf]
  %v36 = vld [vmem:[%s1 + $0x8] sm:$0xf]
  %v37 = vld [vmem:[%s1 + $0xc] sm:$0xf]
  %v42 = vunpack.c.l.b16 %v34
  %v43 = vunpack.c.l.b16 %v35
  %v44 = vunpack.c.l.b16 %v36
  %v45 = vunpack.c.l.b16 %v37
  %v46 = vpack.c.b16 %v43, %v42
  %v47 = vpack.c.b16 %v45, %v44
  %vm50 = vcmask 261120
  %v52 = vsel %vm50, %v32, 0
  %v55 = vsel %vm50, %v33, 0
  %57 = vmatprep.subr.bf16.mxu0 0
  %58 = vmatpush1.bf16.msra.mxu0 0
  %59 = vmatprep.subr.bf16.mxu0 0
  %60 = vmatpush1.bf16.msra.mxu0 0
  %61 = vmatprep.subr.bf16.mxu0 0
  %62 = vmatpush1.bf16.msra.mxu0 0
  %63 = vmatprep.subr.bf16.mxu0 0
  %64 = vmatpush1.bf16.msra.mxu0 0
  %65 = vmatprep.subr.bf16.mxu0 0
  %66 = vmatpush1.bf16.msra.mxu0 0
  %67 = vmatprep.subr.bf16.mxu0 0
  %68 = vmatpush1.bf16.msra.mxu0 0
  %69 = vmatprep.subr.bf16.mxu0 0
  %70 = vmatpush1.bf16.msra.mxu0 %v47
  %71 = vmatprep.subr.bf16.mxu0 0
  %72 = vmatpush1.bf16.msra.mxu0 %v46
  %73 = vmatprep.subr.bf16.mxu0 0
  %74 = vmatpush2.bf16.msra.mxu0 0
  %75 = vmatprep.subr.bf16.mxu0 0
  %76 = vmatpush2.bf16.msra.mxu0 0
  %77 = vmatprep.subr.bf16.mxu0 0
  %78 = vmatpush2.bf16.msra.mxu0 0
  %79 = vmatprep.subr.bf16.mxu0 0
  %80 = vmatpush2.bf16.msra.mxu0 0
  %81 = vmatprep.subr.bf16.mxu0 0
  %82 = vmatpush2.bf16.msra.mxu0 0
  %83 = vmatprep.subr.bf16.mxu0 0
  %84 = vmatpush2.bf16.msra.mxu0 0
  %85 = vmatprep.subr.bf16.mxu0 0
  %86 = vmatpush2.bf16.msra.mxu0 0
  %87 = vmatprep.subr.bf16.mxu0 0
  %88 = vmatpush2.bf16.msra.mxu0 0
  %89 = vmatprep.mubr.bf16.mxu0 0
  %90 = vmatmul.mubr.bf16.gmra.mxu0 %v52
  %v91 = vpop.f32.mrf.mxu0
  %v92 = vadd.f32 0.0, %v91
  %v93 = vpop.f32.mrf.mxu0
  %v94 = vpop.f32.mrf.mxu0
  %v95 = vadd.f32 0.0, %v94
  %v96 = vpop.f32.mrf.mxu0
  %97 = vmatprep.mubr.bf16.mxu0 0
  %98 = vmatmul.mubr.bf16.gmra.mxu0 %v55
  %v99 = vpop.f32.mrf.mxu0
  %v100 = vadd.f32 0.0, %v99
  %v101 = vpop.f32.mrf.mxu0
  %v102 = vpop.f32.mrf.mxu0
  %v103 = vadd.f32 0.0, %v102
  %v104 = vpop.f32.mrf.mxu0
  %105 = vdwg.mxu0
  %v106 = vadd.f32 %v24, %v92
  %v107 = vadd.f32 %v25, %v95
  %v108 = vadd.f32 %v26, %v100
  %v109 = vadd.f32 %v27, %v103
  %vm110 = vcmask 523264
  %111 = vst.msk [vmem:[#allocation2] sm:$0xff] %vm110, %v106
  %112 = vst.msk [vmem:[#allocation2 + $0x8] sm:$0xff] %vm110, %v107
  %113 = vst.msk [vmem:[#allocation2 + $0x10] sm:$0xff] %vm110, %v108
  %114 = vst.msk [vmem:[#allocation2 + $0x18] sm:$0xff] %vm110, %v109
  // Predicated region
  $region18: #{transformer_decoder_layer.13} parent=0 // pred_check
    %p115 = pneg %p15
  $region19: #{transformer_decoder_layer.13} parent=0 // pred_check_branch
    %117 = sbr.rel (%p115) target = $region21
  $region20: #{transformer_decoder_layer.13} parent=0 // pred_region
    %v118 = vld [vmem:[#allocation2] sm:$0xff]
    %v119 = vld [vmem:[#allocation2 + $0x8] sm:$0xff]
    %v120 = vld [vmem:[#allocation2 + $0x10] sm:$0xff]
    %v121 = vld [vmem:[#allocation2 + $0x18] sm:$0xff]
    %v122 = vld [vmem:[%s2] sm:$0x1]
    %v124 = vlaneseq
    %v125 = vshrl.u32 %v124, 7
    %v126 = vsub.s32 0, %v125
    %v127 = vrot.slane %v122, %v126
    %v129 = vadd.f32 %v118, %v127
    %v130 = vadd.f32 %v119, %v127
    %v131 = vadd.f32 %v120, %v127
    %v132 = vadd.f32 %v121, %v127
    %v133 = vpack.c.bf16 %v130, %v129
    %v134 = vpack.c.bf16 %v132, %v131
    %v137 = vunpack.c.l.b16 %v133
    %v138 = vunpack.c.h.b16 %v133
    %v139 = vunpack.c.l.b16 %v134
    %v140 = vunpack.c.h.b16 %v134
    %v141 = vpack.c.b16 %v137, %v137
    %v142 = vpack.c.b16 %v138, %v138
    %v143 = vpack.c.b16 %v139, %v139
    %v144 = vpack.c.b16 %v140, %v140
    %vm149 = vcmask 519168
    %150 = vst.msk [vmem:[%s3] sm:$0xf] %vm149, %v141
    %151 = vst.msk [vmem:[%s3 + $0x4] sm:$0xf] %vm149, %v142
    %152 = vst.msk [vmem:[%s3 + $0x8] sm:$0xf] %vm149, %v143
    %153 = vst.msk [vmem:[%s3 + $0xc] sm:$0xf] %vm149, %v144
  $region21: #{transformer_decoder_layer.13} parent=0 // pred_fallthru
    _
  // Predicated region
  $region22: #{transformer_decoder_layer.13} parent=0 // pred_check
    _
  $region23: #{transformer_decoder_layer.13} parent=0 // pred_check_branch
    %155 = sbr.rel (0) target = $region25
  $region24: #{transformer_decoder_layer.13} parent=0 // pred_region
    _
  $region25: #{transformer_decoder_layer.13} parent=0 // pred_fallthru
    _
  // Predicated region
  $region26: #{transformer_decoder_layer.13} parent=0 // pred_check
    _
  $region27: #{transformer_decoder_layer.13} parent=0 // pred_check_branch
    %157 = sbr.rel (0) target = $region29
  $region28: #{transformer_decoder_layer.13} parent=0 // pred_region
    _
  $region29: #{transformer_decoder_layer.13} parent=0 // pred_fallthru
    _

// kernel: transformer_decoder_layer.16
$region0: #{transformer_decoder_layer.16}
  #allocation0 [shape = 'u32[]', space=smem, size = 0x4, offset = 0x4, fixed_abs, tag = 'smem constant byte address 0x4 - core index']
  #allocation1 [shape = 'u32[144,128]{1,0:T(1,128)}', space=vmem, size = 0x12000, scoped, tag = 'internal scratch']
  #allocation2 [shape = 'f32[16,64]{1,0:T(8,128)}', space=vmem, size = 0x2000, scoped, tag = 'scratch operand']
  %s0 = inlined_call_operand.vmem [shape: f32[16,32], index: 0, kind: input, shape index: {}]
  %s1 = inlined_call_operand.vmem [shape: bf16[32,64], index: 1, kind: input, shape index: {}]
  %s2 = inlined_call_operand.vmem [shape: f32[1,64], index: 2, kind: input, shape index: {}]
  %s3 = inlined_call_operand.vmem [shape: bf16[16,64], index: 3, kind: output, shape index: {}]
  %s4 = sld [smem:[#allocation0]]
  $region30: #{transformer_decoder_layer.16} parent=0
    _
  %s6 = ssub.s32 1, %s4
  %s7 = scalar_select 0, %s6, %s4
  // Predicated region
  $region2: #{transformer_decoder_layer.16} parent=0 // pred_check
    _
  $region3: #{transformer_decoder_layer.16} parent=0 // pred_check_branch
    %9 = sbr.rel (0) target = $region5
  $region4: #{transformer_decoder_layer.16} parent=0 // pred_region
    _
  $region5: #{transformer_decoder_layer.16} parent=0 // pred_fallthru
    _
  // Predicated region
  $region6: #{transformer_decoder_layer.16} parent=0 // pred_check
    _
  $region7: #{transformer_decoder_layer.16} parent=0 // pred_check_branch
    %11 = sbr.rel (0) target = $region9
  $region8: #{transformer_decoder_layer.16} parent=0 // pred_region
    _
  $region9: #{transformer_decoder_layer.16} parent=0 // pred_fallthru
    _
  // Predicated region
  $region10: #{transformer_decoder_layer.16} parent=0 // pred_check
    _
  $region11: #{transformer_decoder_layer.16} parent=0 // pred_check_branch
    %13 = sbr.rel (0) target = $region13
  $region12: #{transformer_decoder_layer.16} parent=0 // pred_region
    _
  $region13: #{transformer_decoder_layer.16} parent=0 // pred_fallthru
    _
  %p15 = scmp.eq.s32.totalorder 0, 0
  // Predicated region
  $region14: #{transformer_decoder_layer.16} parent=0 // pred_check
    %p16 = pneg %p15
  $region15: #{transformer_decoder_layer.16} parent=0 // pred_check_branch
    %18 = sbr.rel (%p16) target = $region17
  $region16: #{transformer_decoder_layer.16} parent=0 // pred_region
    %vm19 = vcmask 523264
    %20 = vst.msk [vmem:[#allocation2] sm:$0xff] %vm19, 0.0
    %21 = vst.msk [vmem:[#allocation2 + $0x8] sm:$0xff] %vm19, 0.0
  $region17: #{transformer_decoder_layer.16} parent=0 // pred_fallthru
    _
  %v22 = vld [vmem:[#allocation2] sm:$0xff]
  %v23 = vld [vmem:[#allocation2 + $0x8] sm:$0xff]
  %v24 = vld [vmem:[%s0] sm:$0xff]
  %v25 = vld [vmem:[%s0 + $0x8] sm:$0xff]
  %v26 = vpack.c.bf16 %v25, %v24
  %v27 = vld [vmem:[%s1] sm:$0xf]
  %v28 = vld [vmem:[%s1 + $0x4] sm:$0xf]
  %v29 = vld [vmem:[%s1 + $0x8] sm:$0xf]
  %v30 = vld [vmem:[%s1 + $0xc] sm:$0xf]
  %v35 = vunpack.c.l.b16 %v27
  %v36 = vunpack.c.l.b16 %v28
  %v37 = vunpack.c.l.b16 %v29
  %v38 = vunpack.c.l.b16 %v30
  %v39 = vpack.c.b16 %v36, %v35
  %v40 = vpack.c.b16 %v38, %v37
  %vm43 = vcmask 261120
  %v45 = vsel %vm43, %v26, 0
  %47 = vmatprep.subr.bf16.mxu0 0
  %48 = vmatpush1.bf16.msra.mxu0 0
  %49 = vmatprep.subr.bf16.mxu0 0
  %50 = vmatpush1.bf16.msra.mxu0 0
  %51 = vmatprep.subr.bf16.mxu0 0
  %52 = vmatpush1.bf16.msra.mxu0 0
  %53 = vmatprep.subr.bf16.mxu0 0
  %54 = vmatpush1.bf16.msra.mxu0 0
  %55 = vmatprep.subr.bf16.mxu0 0
  %56 = vmatpush1.bf16.msra.mxu0 0
  %57 = vmatprep.subr.bf16.mxu0 0
  %58 = vmatpush1.bf16.msra.mxu0 0
  %59 = vmatprep.subr.bf16.mxu0 0
  %60 = vmatpush1.bf16.msra.mxu0 %v40
  %61 = vmatprep.subr.bf16.mxu0 0
  %62 = vmatpush1.bf16.msra.mxu0 %v39
  %63 = vmatprep.subr.bf16.mxu0 0
  %64 = vmatpush2.bf16.msra.mxu0 0
  %65 = vmatprep.subr.bf16.mxu0 0
  %66 = vmatpush2.bf16.msra.mxu0 0
  %67 = vmatprep.subr.bf16.mxu0 0
  %68 = vmatpush2.bf16.msra.mxu0 0
  %69 = vmatprep.subr.bf16.mxu0 0
  %70 = vmatpush2.bf16.msra.mxu0 0
  %71 = vmatprep.subr.bf16.mxu0 0
  %72 = vmatpush2.bf16.msra.mxu0 0
  %73 = vmatprep.subr.bf16.mxu0 0
  %74 = vmatpush2.bf16.msra.mxu0 0
  %75 = vmatprep.subr.bf16.mxu0 0
  %76 = vmatpush2.bf16.msra.mxu0 0
  %77 = vmatprep.subr.bf16.mxu0 0
  %78 = vmatpush2.bf16.msra.mxu0 0
  %79 = vmatprep.mubr.bf16.mxu0 0
  %80 = vmatmul.mubr.bf16.gmra.mxu0 %v45
  %v81 = vpop.f32.mrf.mxu0
  %v82 = vadd.f32 0.0, %v81
  %v83 = vpop.f32.mrf.mxu0
  %v84 = vpop.f32.mrf.mxu0
  %v85 = vadd.f32 0.0, %v84
  %v86 = vpop.f32.mrf.mxu0
  %87 = vdwg.mxu0
  %v88 = vadd.f32 %v22, %v82
  %v89 = vadd.f32 %v23, %v85
  %vm90 = vcmask 523264
  %91 = vst.msk [vmem:[#allocation2] sm:$0xff] %vm90, %v88
  %92 = vst.msk [vmem:[#allocation2 + $0x8] sm:$0xff] %vm90, %v89
  // Predicated region
  $region18: #{transformer_decoder_layer.16} parent=0 // pred_check
    %p93 = pneg %p15
  $region19: #{transformer_decoder_layer.16} parent=0 // pred_check_branch
    %95 = sbr.rel (%p93) target = $region21
  $region20: #{transformer_decoder_layer.16} parent=0 // pred_region
    %v96 = vld [vmem:[#allocation2] sm:$0xff]
    %v97 = vld [vmem:[#allocation2 + $0x8] sm:$0xff]
    %v98 = vld [vmem:[%s2] sm:$0x1]
    %v100 = vlaneseq
    %v101 = vshrl.u32 %v100, 7
    %v102 = vsub.s32 0, %v101
    %v103 = vrot.slane %v98, %v102
    %v105 = vadd.f32 %v96, %v103
    %v106 = vadd.f32 %v97, %v103
    %v107 = vmax.f32 %v105, 0.0
    %v108 = vmax.f32 %v106, 0.0
    %v109 = vpack.c.bf16 %v108, %v107
    %v111 = vunpack.c.l.b16 %v109
    %v112 = vunpack.c.h.b16 %v109
    %v113 = vpack.c.b16 %v111, %v111
    %v114 = vpack.c.b16 %v112, %v112
    %vm117 = vcmask 519168
    %118 = vst.msk [vmem:[%s3] sm:$0xf] %vm117, %v113
    %119 = vst.msk [vmem:[%s3 + $0x4] sm:$0xf] %vm117, %v114
  $region21: #{transformer_decoder_layer.16} parent=0 // pred_fallthru
    _
  // Predicated region
  $region22: #{transformer_decoder_layer.16} parent=0 // pred_check
    _
  $region23: #{transformer_decoder_layer.16} parent=0 // pred_check_branch
    %121 = sbr.rel (0) target = $region25
  $region24: #{transformer_decoder_layer.16} parent=0 // pred_region
    _
  $region25: #{transformer_decoder_layer.16} parent=0 // pred_fallthru
    _
  // Predicated region
  $region26: #{transformer_decoder_layer.16} parent=0 // pred_check
    _
  $region27: #{transformer_decoder_layer.16} parent=0 // pred_check_branch
    %123 = sbr.rel (0) target = $region29
  $region28: #{transformer_decoder_layer.16} parent=0 // pred_region
    _
  $region29: #{transformer_decoder_layer.16} parent=0 // pred_fallthru
    _

// kernel: transformer_decoder_layer.17
$region0: #{transformer_decoder_layer.17}
  #allocation0 [shape = 'u32[]', space=smem, size = 0x4, offset = 0x4, fixed_abs, tag = 'smem constant byte address 0x4 - core index']
  #allocation1 [shape = 'u32[144,128]{1,0:T(1,128)}', space=vmem, size = 0x12000, scoped, tag = 'internal scratch']
  #allocation2 [shape = 'f32[16,32]{1,0:T(8,128)}', space=vmem, size = 0x2000, scoped, tag = 'scratch operand']
  %s0 = inlined_call_operand.vmem [shape: bf16[16,64], index: 0, kind: input, shape index: {}]
  %s1 = inlined_call_operand.vmem [shape: bf16[64,32], index: 1, kind: input, shape index: {}]
  %s2 = inlined_call_operand.vmem [shape: f32[1,32], index: 2, kind: input, shape index: {}]
  %s3 = inlined_call_operand.vmem [shape: f32[16,32], index: 3, kind: input, shape index: {}]
  %s4 = inlined_call_operand.hbm [shape: f32[16,32], index: 4, kind: output, shape index: {}]
  %s5 = sld [smem:[#allocation0]]
  $region34: #{transformer_decoder_layer.17} parent=0
    _
  %s7 = ssub.s32 1, %s5
  %s8 = scalar_select 0, %s7, %s5
  $region1: #{transformer_decoder_layer.17} parent=0
    #allocation3 [shape = 'u8[8192]{0}', space=vmem, size = 0x2000, scoped, tag = 'output window, operand 0, single buffered']
    #allocation4 [shape = 's32[1]{0}', space=sflag, size = 0x4, scoped, tag = 'scoped memory for transformer_decoder_layer.17']
    %9 = vsyncpa [#allocation4], 0
    // Predicated region
    $region2: #{transformer_decoder_layer.17} parent=1 // pred_check
      _
    $region3: #{transformer_decoder_layer.17} parent=1 // pred_check_branch
      %11 = sbr.rel (0) target = $region5
    $region4: #{transformer_decoder_layer.17} parent=1 // pred_region
      _
    $region5: #{transformer_decoder_layer.17} parent=1 // pred_fallthru
      _
    // Predicated region
    $region6: #{transformer_decoder_layer.17} parent=1 // pred_check
      _
    $region7: #{transformer_decoder_layer.17} parent=1 // pred_check_branch
      %13 = sbr.rel (0) target = $region9
    $region8: #{transformer_decoder_layer.17} parent=1 // pred_region
      _
    $region9: #{transformer_decoder_layer.17} parent=1 // pred_fallthru
      _
    // Predicated region
    $region10: #{transformer_decoder_layer.17} parent=1 // pred_check
      _
    $region11: #{transformer_decoder_layer.17} parent=1 // pred_check_branch
      %15 = sbr.rel (0) target = $region13
    $region12: #{transformer_decoder_layer.17} parent=1 // pred_region
      _
    $region13: #{transformer_decoder_layer.17} parent=1 // pred_fallthru
      _
    // Predicated region
    $region14: #{transformer_decoder_layer.17} parent=1 // pred_check
      _
    $region15: #{transformer_decoder_layer.17} parent=1 // pred_check_branch
      %17 = sbr.rel (0) target = $region17
    $region16: #{transformer_decoder_layer.17} parent=1 // pred_region
      _
    $region17: #{transformer_decoder_layer.17} parent=1 // pred_fallthru
      _
    %p19 = scmp.eq.s32.totalorder 0, 0
    // Predicated region
    $region18: #{transformer_decoder_layer.17} parent=1 // pred_check
      %p20 = pneg %p19
    $region19: #{transformer_decoder_layer.17} parent=1 // pred_check_branch
      %22 = sbr.rel (%p20) target = $region21
    $region20: #{transformer_decoder_layer.17} parent=1 // pred_region
      %vm23 = vcmask 261120
      %24 = vst.msk [vmem:[#allocation2] sm:$0xff] %vm23, 0.0
      %25 = vst.msk [vmem:[#allocation2 + $0x8] sm:$0xff] %vm23, 0.0
    $region21: #{transformer_decoder_layer.17} parent=1 // pred_fallthru
      _
    %v26 = vld [vmem:[#allocation2] sm:$0xff]
    %v27 = vld [vmem:[#allocation2 + $0x8] sm:$0xff]
    %v28 = vld [vmem:[%s0] sm:$0xf]
    %v29 = vld [vmem:[%s0 + $0x4] sm:$0xf]
    %v30 = vld [vmem:[%s1] sm:$0xf]
    %v31 = vld [vmem:[%s1 + $0x4] sm:$0xf]
    %v32 = vld [vmem:[%s1 + $0x8] sm:$0xf]
    %v33 = vld [vmem:[%s1 + $0xc] sm:$0xf]
    %v34 = vld [vmem:[%s1 + $0x10] sm:$0xf]
    %v35 = vld [vmem:[%s1 + $0x14] sm:$0xf]
    %v36 = vld [vmem:[%s1 + $0x18] sm:$0xf]
    %v37 = vld [vmem:[%s1 + $0x1c] sm:$0xf]
    %v40 = vunpack.c.l.b16 %v28
    %v41 = vunpack.c.l.b16 %v29
    %v42 = vpack.c.b16 %v41, %v40
    %v51 = vunpack.c.l.b16 %v30
    %v52 = vunpack.c.l.b16 %v31
    %v53 = vunpack.c.l.b16 %v32
    %v54 = vunpack.c.l.b16 %v33
    %v55 = vunpack.c.l.b16 %v34
    %v56 = vunpack.c.l.b16 %v35
    %v57 = vunpack.c.l.b16 %v36
    %v58 = vunpack.c.l.b16 %v37
    %v59 = vpack.c.b16 %v52, %v51
    %v60 = vpack.c.b16 %v54, %v53
    %v61 = vpack.c.b16 %v56, %v55
    %v62 = vpack.c.b16 %v58, %v57
    %vm67 = vcmask 523264
    %v69 = vsel %vm67, %v42, 0
    %71 = vmatprep.subr.bf16.mxu0 0
    %72 = vmatpush1.bf16.msra.mxu0 0
    %73 = vmatprep.subr.bf16.mxu0 0
    %74 = vmatpush1.bf16.msra.mxu0 0
    %75 = vmatprep.subr.bf16.mxu0 0
    %76 = vmatpush1.bf16.msra.mxu0 0
    %77 = vmatprep.subr.bf16.mxu0 0
    %78 = vmatpush1.bf16.msra.mxu0 0
    %79 = vmatprep.subr.bf16.mxu0 0
    %80 = vmatpush1.bf16.msra.mxu0 %v62
    %81 = vmatprep.subr.bf16.mxu0 0
    %82 = vmatpush1.bf16.msra.mxu0 %v61
    %83 = vmatprep.subr.bf16.mxu0 0
    %84 = vmatpush1.bf16.msra.mxu0 %v60
    %85 = vmatprep.subr.bf16.mxu0 0
    %86 = vmatpush1.bf16.msra.mxu0 %v59
    %87 = vmatprep.subr.bf16.mxu0 0
    %88 = vmatpush2.bf16.msra.mxu0 0
    %89 = vmatprep.subr.bf16.mxu0 0
    %90 = vmatpush2.bf16.msra.mxu0 0
    %91 = vmatprep.subr.bf16.mxu0 0
    %92 = vmatpush2.bf16.msra.mxu0 0
    %93 = vmatprep.subr.bf16.mxu0 0
    %94 = vmatpush2.bf16.msra.mxu0 0
    %95 = vmatprep.subr.bf16.mxu0 0
    %96 = vmatpush2.bf16.msra.mxu0 0
    %97 = vmatprep.subr.bf16.mxu0 0
    %98 = vmatpush2.bf16.msra.mxu0 0
    %99 = vmatprep.subr.bf16.mxu0 0
    %100 = vmatpush2.bf16.msra.mxu0 0
    %101 = vmatprep.subr.bf16.mxu0 0
    %102 = vmatpush2.bf16.msra.mxu0 0
    %103 = vmatprep.mubr.bf16.mxu0 0
    %104 = vmatmul.mubr.bf16.gmra.mxu0 %v69
    %v105 = vpop.f32.mrf.mxu0
    %v106 = vadd.f32 0.0, %v105
    %v107 = vpop.f32.mrf.mxu0
    %v108 = vpop.f32.mrf.mxu0
    %v109 = vadd.f32 0.0, %v108
    %v110 = vpop.f32.mrf.mxu0
    %111 = vdwg.mxu0
    %v112 = vadd.f32 %v26, %v106
    %v113 = vadd.f32 %v27, %v109
    %vm114 = vcmask 261120
    %115 = vst.msk [vmem:[#allocation2] sm:$0xff] %vm114, %v112
    %116 = vst.msk [vmem:[#allocation2 + $0x8] sm:$0xff] %vm114, %v113
    // Predicated region
    $region22: #{transformer_decoder_layer.17} parent=1 // pred_check
      %p117 = pneg %p19
    $region23: #{transformer_decoder_layer.17} parent=1 // pred_check_branch
      %119 = sbr.rel (%p117) target = $region25
    $region24: #{transformer_decoder_layer.17} parent=1 // pred_region
      %v120 = vld [vmem:[#allocation2] sm:$0xff]
      %v121 = vld [vmem:[#allocation2 + $0x8] sm:$0xff]
      %v122 = vld [vmem:[%s2] sm:$0x1]
      %v124 = vlaneseq
      %v125 = vshrl.u32 %v124, 7
      %v126 = vsub.s32 0, %v125
      %v127 = vrot.slane %v122, %v126
      %v129 = vadd.f32 %v120, %v127
      %v130 = vadd.f32 %v121, %v127
      %v131 = vld [vmem:[%s3] sm:$0xff]
      %v132 = vld [vmem:[%s3 + $0x8] sm:$0xff]
      %v133 = vadd.f32 %v129, %v131
      %v134 = vadd.f32 %v130, %v132
      %135 = vst.msk [vmem:[#allocation3] sm:$0xff] %vm114, %v133
      %136 = vst.msk [vmem:[#allocation3 + $0x8] sm:$0xff] %vm114, %v134
    $region25: #{transformer_decoder_layer.17} parent=1 // pred_fallthru
      _
    // Predicated region
    $region26: #{transformer_decoder_layer.17} parent=1 // pred_check
      _
    $region27: #{transformer_decoder_layer.17} parent=1 // pred_check_branch
      %138 = sbr.rel (0) target = $region29
    $region28: #{transformer_decoder_layer.17} parent=1 // pred_region
      %s140 = ssub.s32 256, 256
      %141 = vsyncadd [#allocation4], %s140
      %s142 = sshll.u32 [#allocation3], 4
      %s143 = int_to_ptr.vmem [resolvable:$true] %s142
      %148 = dma.vmem_to_hbm [thread:$0]  %s143, 256, %s4, [#allocation4], 128, 128, 8
    $region29: #{transformer_decoder_layer.17} parent=1 // pred_fallthru
      _
    // Predicated region
    $region30: #{transformer_decoder_layer.17} parent=1 // pred_check
      _
    $region31: #{transformer_decoder_layer.17} parent=1 // pred_check_branch
      %150 = sbr.rel (0) target = $region33
    $region32: #{transformer_decoder_layer.17} parent=1 // pred_region
      %151 = dma.done [#allocation4], 256
    $region33: #{transformer_decoder_layer.17} parent=1 // pred_fallthru
      _
    %152 = vsyncpa [#allocation4], 1

// kernel: transformer_decoder_layer.14
$region0: #{transformer_decoder_layer.14}
  #allocation0 [shape = 'u32[]', space=smem, size = 0x4, offset = 0x4, fixed_abs, tag = 'smem constant byte address 0x4 - core index']
  #allocation1 [shape = 'u32[144,128]{1,0:T(1,128)}', space=vmem, size = 0x12000, scoped, tag = 'internal scratch']
  %s0 = inlined_call_operand.vmem [shape: bf16[8,2,4,8], index: 0, kind: input, shape index: {}]
  %s1 = inlined_call_operand.vmem [shape: bf16[16,2,8,8], index: 1, kind: input, shape index: {}]
  %s2 = inlined_call_operand.vmem [shape: f32[2,1,16], index: 2, kind: input, shape index: {}]
  %s3 = inlined_call_operand.vmem [shape: bf16[2,8,32], index: 3, kind: output, shape index: {0}]
  %s4 = inlined_call_operand.hbm [shape: f32[2,8,16], index: 4, kind: output, shape index: {1}]
  %5 = xla_tuple %s3, %s4
  %s6 = sld [smem:[#allocation0]]
  $region135: #{transformer_decoder_layer.14} parent=0
    _
  %s8 = ssub.s32 1, %s6
  %s9 = scalar_select 0, %s8, %s6
  $region1: #{transformer_decoder_layer.14} parent=0
    #allocation2 [shape = 'u8[16384]{0}', space=vmem, size = 0x4000, scoped, tag = 'input window, operand 0']
    #allocation3 [shape = 'u8[65536]{0}', space=vmem, size = 0x10000, scoped, tag = 'input window, operand 1']
    #allocation4 [shape = 'u8[8192]{0}', space=vmem, size = 0x2000, scoped, tag = 'output window, operand 1']
    #allocation5 [shape = 's32[2]{0}', space=sflag, size = 0x8, scoped, tag = 'scoped memory for transformer_decoder_layer.14']
    %10 = vsyncpa [#allocation5], 0
    %s11 = scalar_lea.sflag [#allocation5], 1
    %12 = vsyncpa %s11, 0
    loop: start=0, step=1, limit=4
    $region2: #{transformer_decoder_layer.14} parent=1 // loop_pre_header
      _
    $region3: #{transformer_decoder_layer.14} parent=1 // loop_header
      %s14 = sphi 0, %s18
      %p15 = scmp.ge.s32.totalorder %s14, 4
      %s24 = sphi 0, %s26
      %s27 = sphi 0, %s24
      %s28 = sphi 0, %s27
      %s44 = sphi 0, %s28
      %s50 = sphi 0, %s52
      %s53 = sphi 0, %s50
      %s54 = sphi 0, %s53
      %s70 = sphi 0, %s54
      %s76 = sphi 0, %s78
      %s79 = sphi 0, %s76
      %s80 = sphi 0, %s79
      %s96 = sphi 0, %s80
      %s102 = sphi 0, %s104
      %s105 = sphi 0, %s102
      %s106 = sphi 0, %s105
      %s122 = sphi 0, %s106
      %s128 = sphi 0, %s130
      %s131 = sphi 0, %s128
      %s132 = sphi 0, %s131
      %s148 = sphi 0, %s132
    $region4: #{transformer_decoder_layer.14} parent=1 // loop_header_branch
      %17 = sbr.rel (%p15) target = $region8
    $region5: #{transformer_decoder_layer.14} parent=1 // loop_body
      %s19 = ssub.s32 %s14, 1
      %s20 = ssub.s32 %s14, 2
      %s21 = sadd.s32 %s14, 1
      %s22 = ssub.s32 %s14, %s21
      %p23 = scmp.eq.s32.totalorder %s22, 0
      %s25 = sadd.s32 %s24, 1
      %s26 = scalar_select %p23, %s24, %s25
      %p29 = pneg %p23
      %p30 = scmp.eq.s32.totalorder %s14, 1
      %p31 = por %p29, %p30
      %p32 = scmp.ne.s32.totalorder %s24, %s27
      %p33 = scmp.eq.s32.totalorder %s14, 0
      %p34 = por %p32, %p33
      %p35 = scmp.ne.s32.totalorder %s24, %s27
      %p36 = scmp.eq.s32.totalorder %s19, 1
      %p37 = por %p35, %p36
      %p38 = scmp.ne.s32.totalorder %s27, %s28
      %p39 = scmp.eq.s32.totalorder %s19, 0
      %p40 = por %p38, %p39
      %p41 = scmp.ne.s32.totalorder %s27, %s28
      %p42 = scmp.eq.s32.totalorder %s20, 1
      %p43 = por %p41, %p42
      %p45 = scmp.ne.s32.totalorder %s28, %s44
      %p46 = scmp.eq.s32.totalorder %s20, 0
      %p47 = por %p45, %p46
      %s48 = ssub.s32 %s14, %s21
      %p49 = scmp.eq.s32.totalorder %s48, 0
      %s51 = sadd.s32 %s50, 1
      %s52 = scalar_select %p49, %s50, %s51
      %p55 = pneg %p49
      %p56 = scmp.eq.s32.totalorder %s14, 1
      %p57 = por %p55, %p56
      %p58 = scmp.ne.s32.totalorder %s50, %s53
      %p59 = scmp.eq.s32.totalorder %s14, 0
      %p60 = por %p58, %p59
      %p61 = scmp.ne.s32.totalorder %s50, %s53
      %p62 = scmp.eq.s32.totalorder %s19, 1
      %p63 = por %p61, %p62
      %p64 = scmp.ne.s32.totalorder %s53, %s54
      %p65 = scmp.eq.s32.totalorder %s19, 0
      %p66 = por %p64, %p65
      %p67 = scmp.ne.s32.totalorder %s53, %s54
      %p68 = scmp.eq.s32.totalorder %s20, 1
      %p69 = por %p67, %p68
      %p71 = scmp.ne.s32.totalorder %s54, %s70
      %p72 = scmp.eq.s32.totalorder %s20, 0
      %p73 = por %p71, %p72
      %s74 = ssub.s32 %s14, %s21
      %p75 = scmp.eq.s32.totalorder %s74, 0
      %s77 = sadd.s32 %s76, 1
      %s78 = scalar_select %p75, %s76, %s77
      %p81 = pneg %p75
      %p82 = scmp.eq.s32.totalorder %s14, 1
      %p83 = por %p81, %p82
      %p84 = scmp.ne.s32.totalorder %s76, %s79
      %p85 = scmp.eq.s32.totalorder %s14, 0
      %p86 = por %p84, %p85
      %p87 = scmp.ne.s32.totalorder %s76, %s79
      %p88 = scmp.eq.s32.totalorder %s19, 1
      %p89 = por %p87, %p88
      %p90 = scmp.ne.s32.totalorder %s79, %s80
      %p91 = scmp.eq.s32.totalorder %s19, 0
      %p92 = por %p90, %p91
      %p93 = scmp.ne.s32.totalorder %s79, %s80
      %p94 = scmp.eq.s32.totalorder %s20, 1
      %p95 = por %p93, %p94
      %p97 = scmp.ne.s32.totalorder %s80, %s96
      %p98 = scmp.eq.s32.totalorder %s20, 0
      %p99 = por %p97, %p98
      %s100 = ssub.s32 %s14, %s21
      %p101 = scmp.eq.s32.totalorder %s100, 0
      %s103 = sadd.s32 %s102, 1
      %s104 = scalar_select %p101, %s102, %s103
      %p107 = pneg %p101
      %p108 = scmp.eq.s32.totalorder %s14, 1
      %p109 = por %p107, %p108
      %p110 = scmp.ne.s32.totalorder %s102, %s105
      %p111 = scmp.eq.s32.totalorder %s14, 0
      %p112 = por %p110, %p111
      %p113 = scmp.ne.s32.totalorder %s102, %s105
      %p114 = scmp.eq.s32.totalorder %s19, 1
      %p115 = por %p113, %p114
      %p116 = scmp.ne.s32.totalorder %s105, %s106
      %p117 = scmp.eq.s32.totalorder %s19, 0
      %p118 = por %p116, %p117
      %p119 = scmp.ne.s32.totalorder %s105, %s106
      %p120 = scmp.eq.s32.totalorder %s20, 1
      %p121 = por %p119, %p120
      %p123 = scmp.ne.s32.totalorder %s106, %s122
      %p124 = scmp.eq.s32.totalorder %s20, 0
      %p125 = por %p123, %p124
      %s126 = ssub.s32 %s14, %s21
      %p127 = scmp.eq.s32.totalorder %s126, 0
      %s129 = sadd.s32 %s128, 1
      %s130 = scalar_select %p127, %s128, %s129
      %p133 = pneg %p127
      %p134 = scmp.eq.s32.totalorder %s14, 1
      %p135 = por %p133, %p134
      %p136 = scmp.ne.s32.totalorder %s128, %s131
      %p137 = scmp.eq.s32.totalorder %s14, 0
      %p138 = por %p136, %p137
      %p139 = scmp.ne.s32.totalorder %s128, %s131
      %p140 = scmp.eq.s32.totalorder %s19, 1
      %p141 = por %p139, %p140
      %p142 = scmp.ne.s32.totalorder %s131, %s132
      %p143 = scmp.eq.s32.totalorder %s19, 0
      %p144 = por %p142, %p143
      %p145 = scmp.ne.s32.totalorder %s131, %s132
      %p146 = scmp.eq.s32.totalorder %s20, 1
      %p147 = por %p145, %p146
      %p149 = scmp.ne.s32.totalorder %s132, %s148
      %p150 = scmp.eq.s32.totalorder %s20, 0
      %p151 = por %p149, %p150
      %p152 = scmp.le.s32.totalorder 1, %s14
      %p153 = scmp.lt.s32.totalorder %s14, 3
      %p154 = pnand %p152, %p153
      %p155 = pneg %p154
      // Predicated region
      $region9: #{transformer_decoder_layer.14} parent=5 // pred_check
        _
      $region10: #{transformer_decoder_layer.14} parent=5 // pred_check_branch
        %157 = sbr.rel (%p154) target = $region12
      $region11: #{transformer_decoder_layer.14} parent=5 // pred_region
        %s158 = ssub.s32 %s14, 1
      $region12: #{transformer_decoder_layer.14} parent=5 // pred_fallthru
        _
      %p159 = scmp.lt.s32.totalorder %s14, 2
      // Predicated region
      $region13: #{transformer_decoder_layer.14} parent=5 // pred_check
        %p160 = pneg %p159
      $region14: #{transformer_decoder_layer.14} parent=5 // pred_check_branch
        %162 = sbr.rel (%p160) target = $region16
      $region15: #{transformer_decoder_layer.14} parent=5 // pred_region
        // Predicated region
        $region17: #{transformer_decoder_layer.14} parent=15 // pred_check
          %p163 = pneg %p34
        $region18: #{transformer_decoder_layer.14} parent=15 // pred_check_branch
          %165 = sbr.rel (%p163) target = $region20
        $region19: #{transformer_decoder_layer.14} parent=15 // pred_region
          %s166 = sand.u32 %s24, 1
          %s167 = sand.u32 %s24, 1
          %s168 = smul.addr %s167, 16
          %s169 = scalar_lea.vmem [#allocation2], %s168
          %s170 = smul.addr %s14, 2
          %s171 = scalar_lea.vmem %s0, %s170
          // Predicated region
          $region21: #{transformer_decoder_layer.14} parent=19 // pred_check
            _
          $region22: #{transformer_decoder_layer.14} parent=19 // pred_check_branch
            %173 = sbr.rel (0) target = $region24
          $region23: #{transformer_decoder_layer.14} parent=19 // pred_region
            // Predicated region
            $region25: #{transformer_decoder_layer.14} parent=23 // pred_check
              _
            $region26: #{transformer_decoder_layer.14} parent=23 // pred_check_branch
              %175 = sbr.rel target = $region28
            $region27: #{transformer_decoder_layer.14} parent=23 // pred_region
              // Predicated region
              $region40: #{transformer_decoder_layer.14} parent=27 // pred_check
                _
              $region41: #{transformer_decoder_layer.14} parent=27 // pred_check_branch
                %205 = sbr.rel (0) target = $region43
              $region42: #{transformer_decoder_layer.14} parent=27 // pred_region
                loop: start=0, step=1, limit=1
                $region44: #{transformer_decoder_layer.14} parent=42 // loop_pre_header
                  _
                $region45: #{transformer_decoder_layer.14} parent=42 // loop_header
                  %s207 = sphi 0, %s211
                  %p208 = scmp.ge.s32.totalorder %s207, 1
                  %s212 = sphi %s171, %s171
                  %s213 = sphi %s169, %s169
                $region46: #{transformer_decoder_layer.14} parent=42 // loop_header_branch
                  %210 = sbr.rel (%p208) target = $region50
                $region47: #{transformer_decoder_layer.14} parent=42 // loop_body
                  _
                $region48: #{transformer_decoder_layer.14} parent=42 // loop_footer
                  %s211 = sadd.s32 1, %s207
                $region49: #{transformer_decoder_layer.14} parent=42 // loop_footer_branch
                  %206 = sbr.rel target = $region45
                $region50: #{transformer_decoder_layer.14} parent=42 // loop_exit
                  _
                %s215 = ssub.s32 4, 1
                loop: start=0, step=1, limit=1
                $region51: #{transformer_decoder_layer.14} parent=42 // loop_pre_header
                  _
                $region52: #{transformer_decoder_layer.14} parent=42 // loop_header
                  %s217 = sphi 0, %s221
                  %p218 = scmp.ge.s32.totalorder %s217, 1
                  %s222 = sphi %s171, %s171
                  %s223 = sphi %s169, %s169
                $region53: #{transformer_decoder_layer.14} parent=42 // loop_header_branch
                  %220 = sbr.rel (%p218) target = $region57
                $region54: #{transformer_decoder_layer.14} parent=42 // loop_body
                  %v224 = vld [vmem:[%s222] sm:%s215]
                  %225 = vst [vmem:[%s223] sm:%s215] %v224
                  %v226 = vld [vmem:[%s222 + $0x4] sm:%s215]
                  %227 = vst [vmem:[%s223 + $0x2] sm:%s215] %v226
                  %v228 = vld [vmem:[%s222 + $0x8] sm:%s215]
                  %229 = vst [vmem:[%s223 + $0x4] sm:%s215] %v228
                  %v230 = vld [vmem:[%s222 + $0xc] sm:%s215]
                  %231 = vst [vmem:[%s223 + $0x6] sm:%s215] %v230
                  %v232 = vld [vmem:[%s222 + $0x10] sm:%s215]
                  %233 = vst [vmem:[%s223 + $0x8] sm:%s215] %v232
                  %v234 = vld [vmem:[%s222 + $0x14] sm:%s215]
                  %235 = vst [vmem:[%s223 + $0xa] sm:%s215] %v234
                  %v236 = vld [vmem:[%s222 + $0x18] sm:%s215]
                  %237 = vst [vmem:[%s223 + $0xc] sm:%s215] %v236
                  %v238 = vld [vmem:[%s222 + $0x1c] sm:%s215]
                  %239 = vst [vmem:[%s223 + $0xe] sm:%s215] %v238
                $region55: #{transformer_decoder_layer.14} parent=42 // loop_footer
                  %s221 = sadd.s32 1, %s217
                $region56: #{transformer_decoder_layer.14} parent=42 // loop_footer_branch
                  %216 = sbr.rel target = $region52
                $region57: #{transformer_decoder_layer.14} parent=42 // loop_exit
                  _
              $region43: #{transformer_decoder_layer.14} parent=27 // pred_fallthru
                _
            $region28: #{transformer_decoder_layer.14} parent=23 // pred_fallthru
              _
            // Predicated region
            $region29: #{transformer_decoder_layer.14} parent=23 // pred_check
              _
            $region30: #{transformer_decoder_layer.14} parent=23 // pred_check_branch
              %177 = sbr.rel (0) target = $region32
            $region31: #{transformer_decoder_layer.14} parent=23 // pred_region
              %s179 = ssub.s32 4, 1
              loop: start=0, step=1, limit=1
              $region33: #{transformer_decoder_layer.14} parent=31 // loop_pre_header
                _
              $region34: #{transformer_decoder_layer.14} parent=31 // loop_header
                %s181 = sphi 0, %s185
                %p182 = scmp.ge.s32.totalorder %s181, 1
                %s186 = sphi %s171, %s171
                %s187 = sphi %s169, %s169
              $region35: #{transformer_decoder_layer.14} parent=31 // loop_header_branch
                %184 = sbr.rel (%p182) target = $region39
              $region36: #{transformer_decoder_layer.14} parent=31 // loop_body
                %v188 = vld [vmem:[%s186] sm:%s179]
                %189 = vst [vmem:[%s187] sm:%s179] %v188
                %v190 = vld [vmem:[%s186 + $0x4] sm:%s179]
                %191 = vst [vmem:[%s187 + $0x2] sm:%s179] %v190
                %v192 = vld [vmem:[%s186 + $0x8] sm:%s179]
                %193 = vst [vmem:[%s187 + $0x4] sm:%s179] %v192
                %v194 = vld [vmem:[%s186 + $0xc] sm:%s179]
                %195 = vst [vmem:[%s187 + $0x6] sm:%s179] %v194
                %v196 = vld [vmem:[%s186 + $0x10] sm:%s179]
                %197 = vst [vmem:[%s187 + $0x8] sm:%s179] %v196
                %v198 = vld [vmem:[%s186 + $0x14] sm:%s179]
                %199 = vst [vmem:[%s187 + $0xa] sm:%s179] %v198
                %v200 = vld [vmem:[%s186 + $0x18] sm:%s179]
                %201 = vst [vmem:[%s187 + $0xc] sm:%s179] %v200
                %v202 = vld [vmem:[%s186 + $0x1c] sm:%s179]
                %203 = vst [vmem:[%s187 + $0xe] sm:%s179] %v202
              $region37: #{transformer_decoder_layer.14} parent=31 // loop_footer
                %s185 = sadd.s32 1, %s181
              $region38: #{transformer_decoder_layer.14} parent=31 // loop_footer_branch
                %180 = sbr.rel target = $region34
              $region39: #{transformer_decoder_layer.14} parent=31 // loop_exit
                _
            $region32: #{transformer_decoder_layer.14} parent=23 // pred_fallthru
              _
          $region24: #{transformer_decoder_layer.14} parent=19 // pred_fallthru
            _
          %240 = vnop
        $region20: #{transformer_decoder_layer.14} parent=15 // pred_fallthru
          _
        // Predicated region
        $region58: #{transformer_decoder_layer.14} parent=15 // pred_check
          %p241 = pneg %p60
        $region59: #{transformer_decoder_layer.14} parent=15 // pred_check_branch
          %243 = sbr.rel (%p241) target = $region61
        $region60: #{transformer_decoder_layer.14} parent=15 // pred_region
          %s244 = sand.u32 %s50, 1
          %s245 = sand.u32 %s50, 1
          %s246 = smul.addr %s245, 64
          %s247 = scalar_lea.vmem [#allocation3], %s246
          %s248 = smul.addr %s14, 4
          %s249 = scalar_lea.vmem %s1, %s248
          // Predicated region
          $region62: #{transformer_decoder_layer.14} parent=60 // pred_check
            _
          $region63: #{transformer_decoder_layer.14} parent=60 // pred_check_branch
            %251 = sbr.rel (0) target = $region65
          $region64: #{transformer_decoder_layer.14} parent=60 // pred_region
            // Predicated region
            $region66: #{transformer_decoder_layer.14} parent=64 // pred_check
              _
            $region67: #{transformer_decoder_layer.14} parent=64 // pred_check_branch
              %253 = sbr.rel target = $region69
            $region68: #{transformer_decoder_layer.14} parent=64 // pred_region
              // Predicated region
              $region81: #{transformer_decoder_layer.14} parent=68 // pred_check
                _
              $region82: #{transformer_decoder_layer.14} parent=68 // pred_check_branch
                %299 = sbr.rel (0) target = $region84
              $region83: #{transformer_decoder_layer.14} parent=68 // pred_region
                loop: start=0, step=1, limit=1
                $region85: #{transformer_decoder_layer.14} parent=83 // loop_pre_header
                  _
                $region86: #{transformer_decoder_layer.14} parent=83 // loop_header
                  %s301 = sphi 0, %s305
                  %p302 = scmp.ge.s32.totalorder %s301, 1
                  %s306 = sphi %s249, %s249
                  %s307 = sphi %s247, %s247
                $region87: #{transformer_decoder_layer.14} parent=83 // loop_header_branch
                  %304 = sbr.rel (%p302) target = $region91
                $region88: #{transformer_decoder_layer.14} parent=83 // loop_body
                  _
                $region89: #{transformer_decoder_layer.14} parent=83 // loop_footer
                  %s305 = sadd.s32 1, %s301
                $region90: #{transformer_decoder_layer.14} parent=83 // loop_footer_branch
                  %300 = sbr.rel target = $region86
                $region91: #{transformer_decoder_layer.14} parent=83 // loop_exit
                  _
                %s309 = ssub.s32 16, 1
                loop: start=0, step=1, limit=1
                $region92: #{transformer_decoder_layer.14} parent=83 // loop_pre_header
                  _
                $region93: #{transformer_decoder_layer.14} parent=83 // loop_header
                  %s311 = sphi 0, %s315
                  %p312 = scmp.ge.s32.totalorder %s311, 1
                  %s316 = sphi %s249, %s249
                  %s317 = sphi %s247, %s247
                $region94: #{transformer_decoder_layer.14} parent=83 // loop_header_branch
                  %314 = sbr.rel (%p312) target = $region98
                $region95: #{transformer_decoder_layer.14} parent=83 // loop_body
                  %v318 = vld [vmem:[%s316] sm:%s309]
                  %319 = vst [vmem:[%s317] sm:%s309] %v318
                  %v320 = vld [vmem:[%s316 + $0x8] sm:%s309]
                  %321 = vst [vmem:[%s317 + $0x4] sm:%s309] %v320
                  %v322 = vld [vmem:[%s316 + $0x10] sm:%s309]
                  %323 = vst [vmem:[%s317 + $0x8] sm:%s309] %v322
                  %v324 = vld [vmem:[%s316 + $0x18] sm:%s309]
                  %325 = vst [vmem:[%s317 + $0xc] sm:%s309] %v324
                  %v326 = vld [vmem:[%s316 + $0x20] sm:%s309]
                  %327 = vst [vmem:[%s317 + $0x10] sm:%s309] %v326
                  %v328 = vld [vmem:[%s316 + $0x28] sm:%s309]
                  %329 = vst [vmem:[%s317 + $0x14] sm:%s309] %v328
                  %v330 = vld [vmem:[%s316 + $0x30] sm:%s309]
                  %331 = vst [vmem:[%s317 + $0x18] sm:%s309] %v330
                  %v332 = vld [vmem:[%s316 + $0x38] sm:%s309]
                  %333 = vst [vmem:[%s317 + $0x1c] sm:%s309] %v332
                  %v334 = vld [vmem:[%s316 + $0x40] sm:%s309]
                  %335 = vst [vmem:[%s317 + $0x20] sm:%s309] %v334
                  %v336 = vld [vmem:[%s316 + $0x48] sm:%s309]
                  %337 = vst [vmem:[%s317 + $0x24] sm:%s309] %v336
                  %v338 = vld [vmem:[%s316 + $0x50] sm:%s309]
                  %339 = vst [vmem:[%s317 + $0x28] sm:%s309] %v338
                  %v340 = vld [vmem:[%s316 + $0x58] sm:%s309]
                  %341 = vst [vmem:[%s317 + $0x2c] sm:%s309] %v340
                  %v342 = vld [vmem:[%s316 + $0x60] sm:%s309]
                  %343 = vst [vmem:[%s317 + $0x30] sm:%s309] %v342
                  %v344 = vld [vmem:[%s316 + $0x68] sm:%s309]
                  %345 = vst [vmem:[%s317 + $0x34] sm:%s309] %v344
                  %v346 = vld [vmem:[%s316 + $0x70] sm:%s309]
                  %347 = vst [vmem:[%s317 + $0x38] sm:%s309] %v346
                  %v348 = vld [vmem:[%s316 + $0x78] sm:%s309]
                  %349 = vst [vmem:[%s317 + $0x3c] sm:%s309] %v348
                $region96: #{transformer_decoder_layer.14} parent=83 // loop_footer
                  %s315 = sadd.s32 1, %s311
                $region97: #{transformer_decoder_layer.14} parent=83 // loop_footer_branch
                  %310 = sbr.rel target = $region93
                $region98: #{transformer_decoder_layer.14} parent=83 // loop_exit
                  _
              $region84: #{transformer_decoder_layer.14} parent=68 // pred_fallthru
                _
            $region69: #{transformer_decoder_layer.14} parent=64 // pred_fallthru
              _
            // Predicated region
            $region70: #{transformer_decoder_layer.14} parent=64 // pred_check
              _
            $region71: #{transformer_decoder_layer.14} parent=64 // pred_check_branch
              %255 = sbr.rel (0) target = $region73
            $region72: #{transformer_decoder_layer.14} parent=64 // pred_region
              %s257 = ssub.s32 16, 1
              loop: start=0, step=1, limit=1
              $region74: #{transformer_decoder_layer.14} parent=72 // loop_pre_header
                _
              $region75: #{transformer_decoder_layer.14} parent=72 // loop_header
                %s259 = sphi 0, %s263
                %p260 = scmp.ge.s32.totalorder %s259, 1
                %s264 = sphi %s249, %s249
                %s265 = sphi %s247, %s247
              $region76: #{transformer_decoder_layer.14} parent=72 // loop_header_branch
                %262 = sbr.rel (%p260) target = $region80
              $region77: #{transformer_decoder_layer.14} parent=72 // loop_body
                %v266 = vld [vmem:[%s264] sm:%s257]
                %267 = vst [vmem:[%s265] sm:%s257] %v266
                %v268 = vld [vmem:[%s264 + $0x8] sm:%s257]
                %269 = vst [vmem:[%s265 + $0x4] sm:%s257] %v268
                %v270 = vld [vmem:[%s264 + $0x10] sm:%s257]
                %271 = vst [vmem:[%s265 + $0x8] sm:%s257] %v270
                %v272 = vld [vmem:[%s264 + $0x18] sm:%s257]
                %273 = vst [vmem:[%s265 + $0xc] sm:%s257] %v272
                %v274 = vld [vmem:[%s264 + $0x20] sm:%s257]
                %275 = vst [vmem:[%s265 + $0x10] sm:%s257] %v274
                %v276 = vld [vmem:[%s264 + $0x28] sm:%s257]
                %277 = vst [vmem:[%s265 + $0x14] sm:%s257] %v276
                %v278 = vld [vmem:[%s264 + $0x30] sm:%s257]
                %279 = vst [vmem:[%s265 + $0x18] sm:%s257] %v278
                %v280 = vld [vmem:[%s264 + $0x38] sm:%s257]
                %281 = vst [vmem:[%s265 + $0x1c] sm:%s257] %v280
                %v282 = vld [vmem:[%s264 + $0x40] sm:%s257]
                %283 = vst [vmem:[%s265 + $0x20] sm:%s257] %v282
                %v284 = vld [vmem:[%s264 + $0x48] sm:%s257]
                %285 = vst [vmem:[%s265 + $0x24] sm:%s257] %v284
                %v286 = vld [vmem:[%s264 + $0x50] sm:%s257]
                %287 = vst [vmem:[%s265 + $0x28] sm:%s257] %v286
                %v288 = vld [vmem:[%s264 + $0x58] sm:%s257]
                %289 = vst [vmem:[%s265 + $0x2c] sm:%s257] %v288
                %v290 = vld [vmem:[%s264 + $0x60] sm:%s257]
                %291 = vst [vmem:[%s265 + $0x30] sm:%s257] %v290
                %v292 = vld [vmem:[%s264 + $0x68] sm:%s257]
                %293 = vst [vmem:[%s265 + $0x34] sm:%s257] %v292
                %v294 = vld [vmem:[%s264 + $0x70] sm:%s257]
                %295 = vst [vmem:[%s265 + $0x38] sm:%s257] %v294
                %v296 = vld [vmem:[%s264 + $0x78] sm:%s257]
                %297 = vst [vmem:[%s265 + $0x3c] sm:%s257] %v296
              $region78: #{transformer_decoder_layer.14} parent=72 // loop_footer
                %s263 = sadd.s32 1, %s259
              $region79: #{transformer_decoder_layer.14} parent=72 // loop_footer_branch
                %258 = sbr.rel target = $region75
              $region80: #{transformer_decoder_layer.14} parent=72 // loop_exit
                _
            $region73: #{transformer_decoder_layer.14} parent=64 // pred_fallthru
              _
          $region65: #{transformer_decoder_layer.14} parent=60 // pred_fallthru
            _
          %350 = vnop
        $region61: #{transformer_decoder_layer.14} parent=15 // pred_fallthru
          _
        // Predicated region
        $region99: #{transformer_decoder_layer.14} parent=15 // pred_check
          %p351 = pneg %p86
        $region100: #{transformer_decoder_layer.14} parent=15 // pred_check_branch
          %353 = sbr.rel (%p351) target = $region102
        $region101: #{transformer_decoder_layer.14} parent=15 // pred_region
          %p354 = scmp.lt.s32.totalorder %s14, 1
          %s355 = scalar_select %p354, %s14, 1
          %s356 = scalar_lea.vmem %s2, %s355
        $region102: #{transformer_decoder_layer.14} parent=15 // pred_fallthru
          _
      $region16: #{transformer_decoder_layer.14} parent=5 // pred_fallthru
        _
      %p357 = scmp.le.s32.totalorder 1, %s14
      %p358 = scmp.lt.s32.totalorder %s14, 3
      %p359 = pnand %p357, %p358
      %p360 = pneg %p359
      // Predicated region
      $region103: #{transformer_decoder_layer.14} parent=5 // pred_check
        _
      $region104: #{transformer_decoder_layer.14} parent=5 // pred_check_branch
        %362 = sbr.rel (%p359) target = $region106
      $region105: #{transformer_decoder_layer.14} parent=5 // pred_region
        %s363 = ssub.s32 %s14, 1
        %s364 = sand.u32 %s27, 1
        %s365 = sand.u32 %s27, 1
        %s366 = smul.addr %s365, 16
        %s367 = scalar_lea.vmem [#allocation2], %s366
        // Predicated region
        $region107: #{transformer_decoder_layer.14} parent=105 // pred_check
          %p368 = pneg %p40
        $region108: #{transformer_decoder_layer.14} parent=105 // pred_check_branch
          %370 = sbr.rel (%p368) target = $region110
        $region109: #{transformer_decoder_layer.14} parent=105 // pred_region
          _
        $region110: #{transformer_decoder_layer.14} parent=105 // pred_fallthru
          _
        %s371 = sand.u32 %s53, 1
        %s372 = sand.u32 %s53, 1
        %s373 = smul.addr %s372, 64
        %s374 = scalar_lea.vmem [#allocation3], %s373
        // Predicated region
        $region111: #{transformer_decoder_layer.14} parent=105 // pred_check
          %p375 = pneg %p66
        $region112: #{transformer_decoder_layer.14} parent=105 // pred_check_branch
          %377 = sbr.rel (%p375) target = $region114
        $region113: #{transformer_decoder_layer.14} parent=105 // pred_region
          _
        $region114: #{transformer_decoder_layer.14} parent=105 // pred_fallthru
          _
        %s378 = sand.u32 %s27, 1
        %s379 = sand.u32 %s27, 1
        %s380 = smul.addr %s379, 16
        %s381 = scalar_lea.vmem [#allocation2], %s380
        %p382 = pneg %p40
        %p383 = pneg %p37
        %s384 = sand.u32 %s53, 1
        %s385 = sand.u32 %s53, 1
        %s386 = smul.addr %s385, 64
        %s387 = scalar_lea.vmem [#allocation3], %s386
        %p388 = pneg %p66
        %p389 = pneg %p63
        %p390 = scmp.lt.s32.totalorder %s19, 1
        %s391 = scalar_select %p390, %s19, 1
        %s392 = scalar_lea.vmem %s2, %s391
        %p393 = pneg %p92
        %p394 = pneg %p89
        %p395 = pneg %p118
        %p396 = pneg %p115
        %p397 = scmp.lt.s32.totalorder %s19, 1
        %s398 = scalar_select %p397, %s19, 1
        %s399 = smul.addr %s398, 4
        %s400 = scalar_lea.vmem %s3, %s399
        %p401 = pneg %p144
        %p402 = pneg %p141
        %s403 = sand.u32 %s131, 1
        %s404 = scalar_lea.sflag [#allocation5], %s403
        %s405 = sand.u32 %s131, 1
        %s406 = smul.addr %s405, 8
        %s407 = scalar_lea.vmem [#allocation4], %s406
        %p408 = scmp.lt.s32.totalorder %s19, 1
        %s409 = scalar_select %p408, %s19, 1
        %s410 = scalar_lea.vmem %s2, %s409
        %p411 = scmp.lt.s32.totalorder %s19, 1
        %s412 = scalar_select %p411, %s19, 1
        %s413 = smul.addr %s412, 4
        %s414 = scalar_lea.vmem %s3, %s413
        %v416 = vld [vmem:[%s410] sm:$0x1]
        %v417 = vld [vmem:[%s367] sm:$0x1]
        %v418 = vld [vmem:[%s367 + $0x2] sm:$0x1]
        %v419 = vld [vmem:[%s367 + $0x4] sm:$0x1]
        %v420 = vld [vmem:[%s367 + $0x6] sm:$0x1]
        %v421 = vld [vmem:[%s367 + $0x8] sm:$0x1]
        %v422 = vld [vmem:[%s367 + $0xa] sm:$0x1]
        %v423 = vld [vmem:[%s367 + $0xc] sm:$0x1]
        %v424 = vld [vmem:[%s367 + $0xe] sm:$0x1]
        %v425 = vld [vmem:[%s374] sm:$0x1]
        %v426 = vld [vmem:[%s374 + $0x4] sm:$0x1]
        %v427 = vld [vmem:[%s374 + $0x8] sm:$0x1]
        %v428 = vld [vmem:[%s374 + $0xc] sm:$0x1]
        %v429 = vld [vmem:[%s374 + $0x10] sm:$0x1]
        %v430 = vld [vmem:[%s374 + $0x14] sm:$0x1]
        %v431 = vld [vmem:[%s374 + $0x18] sm:$0x1]
        %v432 = vld [vmem:[%s374 + $0x1c] sm:$0x1]
        %v433 = vld [vmem:[%s374 + $0x20] sm:$0x1]
        %v434 = vld [vmem:[%s374 + $0x24] sm:$0x1]
        %v435 = vld [vmem:[%s374 + $0x28] sm:$0x1]
        %v436 = vld [vmem:[%s374 + $0x2c] sm:$0x1]
        %v437 = vld [vmem:[%s374 + $0x30] sm:$0x1]
        %v438 = vld [vmem:[%s374 + $0x34] sm:$0x1]
        %v439 = vld [vmem:[%s374 + $0x38] sm:$0x1]
        %v440 = vld [vmem:[%s374 + $0x3c] sm:$0x1]
        %v441 = vld [vmem:[%s374] sm:$0x4]
        %v442 = vld [vmem:[%s374 + $0x4] sm:$0x4]
        %v443 = vld [vmem:[%s374 + $0x8] sm:$0x4]
        %v444 = vld [vmem:[%s374 + $0xc] sm:$0x4]
        %v445 = vld [vmem:[%s374 + $0x10] sm:$0x4]
        %v446 = vld [vmem:[%s374 + $0x14] sm:$0x4]
        %v447 = vld [vmem:[%s374 + $0x18] sm:$0x4]
        %v448 = vld [vmem:[%s374 + $0x1c] sm:$0x4]
        %v449 = vld [vmem:[%s374 + $0x20] sm:$0x4]
        %v450 = vld [vmem:[%s374 + $0x24] sm:$0x4]
        %v451 = vld [vmem:[%s374 + $0x28] sm:$0x4]
        %v452 = vld [vmem:[%s374 + $0x2c] sm:$0x4]
        %v453 = vld [vmem:[%s374 + $0x30] sm:$0x4]
        %v454 = vld [vmem:[%s374 + $0x34] sm:$0x4]
        %v455 = vld [vmem:[%s374 + $0x38] sm:$0x4]
        %v456 = vld [vmem:[%s374 + $0x3c] sm:$0x4]
        %v458 = vlaneseq
        %v459 = vshrl.u32 %v458, 7
        %v460 = vsub.s32 0, %v459
        %v461 = vrot.slane %v416, %v460
        %v472 = vunpack.c.l.s4 1983009808
        %v473 = vunpack.c.0.s8 %v472
        %v474 = vlaneseq
        %v475 = vshrl.u32 %v474, 7
        %v476 = vsub.s32 %v473, %v475
        %v477 = vrot.slane %v417, %v476
        %v479 = vunpack.c.l.s4 1983009808
        %v480 = vunpack.c.0.s8 %v479
        %v481 = vlaneseq
        %v482 = vshrl.u32 %v481, 7
        %v483 = vsub.s32 %v480, %v482
        %v484 = vrot.slane %v418, %v483
        %v486 = vunpack.c.l.s4 1983009808
        %v487 = vunpack.c.0.s8 %v486
        %v488 = vlaneseq
        %v489 = vshrl.u32 %v488, 7
        %v490 = vsub.s32 %v487, %v489
        %v491 = vrot.slane %v419, %v490
        %v493 = vunpack.c.l.s4 1983009808
        %v494 = vunpack.c.0.s8 %v493
        %v495 = vlaneseq
        %v496 = vshrl.u32 %v495, 7
        %v497 = vsub.s32 %v494, %v496
        %v498 = vrot.slane %v420, %v497
        %v500 = vunpack.c.l.s4 1983009808
        %v501 = vunpack.c.0.s8 %v500
        %v502 = vlaneseq
        %v503 = vshrl.u32 %v502, 7
        %v504 = vsub.s32 %v501, %v503
        %v505 = vrot.slane %v421, %v504
        %v507 = vunpack.c.l.s4 1983009808
        %v508 = vunpack.c.0.s8 %v507
        %v509 = vlaneseq
        %v510 = vshrl.u32 %v509, 7
        %v511 = vsub.s32 %v508, %v510
        %v512 = vrot.slane %v422, %v511
        %v514 = vunpack.c.l.s4 1983009808
        %v515 = vunpack.c.0.s8 %v514
        %v516 = vlaneseq
        %v517 = vshrl.u32 %v516, 7
        %v518 = vsub.s32 %v515, %v517
        %v519 = vrot.slane %v423, %v518
        %v521 = vunpack.c.l.s4 1983009808
        %v522 = vunpack.c.0.s8 %v521
        %v523 = vlaneseq
        %v524 = vshrl.u32 %v523, 7
        %v525 = vsub.s32 %v522, %v524
        %v526 = vrot.slane %v424, %v525
        %v527 = vunpack.c.l.b16 %v477
        %v528 = vunpack.c.l.b16 %v484
        %v529 = vunpack.c.l.b16 %v491
        %v530 = vunpack.c.l.b16 %v498
        %v531 = vunpack.c.l.b16 %v505
        %v532 = vunpack.c.l.b16 %v512
        %v533 = vunpack.c.l.b16 %v519
        %v534 = vunpack.c.l.b16 %v526
        %v535 = vrot.slane %v528, 7
        %vm536 = vcmask 1041409
        %v537 = vsel %vm536, %v535, %v527
        %v538 = vrot.slane %v529, 6
        %vm539 = vcmask 1042434
        %v540 = vsel %vm539, %v538, %v537
        %v541 = vrot.slane %v530, 5
        %vm542 = vcmask 1043459
        %v543 = vsel %vm542, %v541, %v540
        %v544 = vrot.slane %v531, 4
        %vm545 = vcmask 1044484
        %v546 = vsel %vm545, %v544, %v543
        %v547 = vrot.slane %v532, 3
        %vm548 = vcmask 1045509
        %v549 = vsel %vm548, %v547, %v546
        %v550 = vrot.slane %v533, 2
        %vm551 = vcmask 1046534
        %v552 = vsel %vm551, %v550, %v549
        %v553 = vrot.slane %v534, 1
        %vm554 = vcmask 1047559
        %v555 = vsel %vm554, %v553, %v552
        %v556 = vpack.c.b16 %v555, %v555
        %v573 = vunpack.c.l.b16 %v425
        %v574 = vunpack.c.l.b16 %v426
        %v575 = vunpack.c.l.b16 %v427
        %v576 = vunpack.c.l.b16 %v428
        %v577 = vunpack.c.l.b16 %v429
        %v578 = vunpack.c.l.b16 %v430
        %v579 = vunpack.c.l.b16 %v431
        %v580 = vunpack.c.l.b16 %v432
        %v581 = vunpack.c.l.b16 %v433
        %v582 = vunpack.c.l.b16 %v434
        %v583 = vunpack.c.l.b16 %v435
        %v584 = vunpack.c.l.b16 %v436
        %v585 = vunpack.c.l.b16 %v437
        %v586 = vunpack.c.l.b16 %v438
        %v587 = vunpack.c.l.b16 %v439
        %v588 = vunpack.c.l.b16 %v440
        %v589 = vpack.c.b16 %v573, %v573
        %v590 = vpack.c.b16 %v574, %v574
        %v591 = vpack.c.b16 %v575, %v575
        %v592 = vpack.c.b16 %v576, %v576
        %v593 = vpack.c.b16 %v577, %v577
        %v594 = vpack.c.b16 %v578, %v578
        %v595 = vpack.c.b16 %v579, %v579
        %v596 = vpack.c.b16 %v580, %v580
        %v597 = vpack.c.b16 %v581, %v581
        %v598 = vpack.c.b16 %v582, %v582
        %v599 = vpack.c.b16 %v583, %v583
        %v600 = vpack.c.b16 %v584, %v584
        %v601 = vpack.c.b16 %v585, %v585
        %v602 = vpack.c.b16 %v586, %v586
        %v603 = vpack.c.b16 %v587, %v587
        %v604 = vpack.c.b16 %v588, %v588
        %v605 = vunpack.c.l.b16 %v589
        %v606 = vunpack.c.l.b16 %v590
        %v607 = vunpack.c.l.b16 %v591
        %v608 = vunpack.c.l.b16 %v592
        %v609 = vunpack.c.l.b16 %v593
        %v610 = vunpack.c.l.b16 %v594
        %v611 = vunpack.c.l.b16 %v595
        %v612 = vunpack.c.l.b16 %v596
        %v613 = vunpack.c.l.b16 %v597
        %v614 = vunpack.c.l.b16 %v598
        %v615 = vunpack.c.l.b16 %v599
        %v616 = vunpack.c.l.b16 %v600
        %v617 = vunpack.c.l.b16 %v601
        %v618 = vunpack.c.l.b16 %v602
        %v619 = vunpack.c.l.b16 %v603
        %v620 = vunpack.c.l.b16 %v604
        %v621 = vrot.slane %v606, 7
        %v622 = vsel %vm536, %v621, %v605
        %v623 = vrot.slane %v607, 6
        %v624 = vsel %vm539, %v623, %v622
        %v625 = vrot.slane %v608, 5
        %v626 = vsel %vm542, %v625, %v624
        %v627 = vrot.slane %v609, 4
        %v628 = vsel %vm545, %v627, %v626
        %v629 = vrot.slane %v610, 3
        %v630 = vsel %vm548, %v629, %v628
        %v631 = vrot.slane %v611, 2
        %v632 = vsel %vm551, %v631, %v630
        %v633 = vrot.slane %v612, 1
        %v634 = vsel %vm554, %v633, %v632
        %v635 = vrot.slane %v614, 7
        %v636 = vsel %vm536, %v635, %v613
        %v637 = vrot.slane %v615, 6
        %v638 = vsel %vm539, %v637, %v636
        %v639 = vrot.slane %v616, 5
        %v640 = vsel %vm542, %v639, %v638
        %v641 = vrot.slane %v617, 4
        %v642 = vsel %vm545, %v641, %v640
        %v643 = vrot.slane %v618, 3
        %v644 = vsel %vm548, %v643, %v642
        %v645 = vrot.slane %v619, 2
        %v646 = vsel %vm551, %v645, %v644
        %v647 = vrot.slane %v620, 1
        %v648 = vsel %vm554, %v647, %v646
        %v649 = vpack.c.b16 %v648, %v634
        %vm650 = vcmask 64512
        %v652 = vsel %vm650, %v556, 0
        %v655 = vsel %vm650, %v649, 0
        %657 = vmatprep.subr.bf16.mxu0 0
        %658 = vmatpush1.bf16.xpose.msra.mxu0 0
        %659 = vmatprep.subr.bf16.mxu0 0
        %660 = vmatpush1.bf16.xpose.msra.mxu0 0
        %661 = vmatprep.subr.bf16.mxu0 0
        %662 = vmatpush1.bf16.xpose.msra.mxu0 0
        %663 = vmatprep.subr.bf16.mxu0 0
        %664 = vmatpush1.bf16.xpose.msra.mxu0 0
        %665 = vmatprep.subr.bf16.mxu0 0
        %666 = vmatpush1.bf16.xpose.msra.mxu0 0
        %667 = vmatprep.subr.bf16.mxu0 0
        %668 = vmatpush1.bf16.xpose.msra.mxu0 0
        %669 = vmatprep.subr.bf16.mxu0 0
        %670 = vmatpush1.bf16.xpose.msra.mxu0 0
        %671 = vmatprep.subr.bf16.mxu0 0
        %672 = vmatpush1.bf16.xpose.msra.mxu0 %v655
        %673 = vmatprep.subr.bf16.mxu0 0
        %674 = vmatpush2.bf16.xpose.msra.mxu0 0
        %675 = vmatprep.subr.bf16.mxu0 0
        %676 = vmatpush2.bf16.xpose.msra.mxu0 0
        %677 = vmatprep.subr.bf16.mxu0 0
        %678 = vmatpush2.bf16.xpose.msra.mxu0 0
        %679 = vmatprep.subr.bf16.mxu0 0
        %680 = vmatpush2.bf16.xpose.msra.mxu0 0
        %681 = vmatprep.subr.bf16.mxu0 0
        %682 = vmatpush2.bf16.xpose.msra.mxu0 0
        %683 = vmatprep.subr.bf16.mxu0 0
        %684 = vmatpush2.bf16.xpose.msra.mxu0 0
        %685 = vmatprep.subr.bf16.mxu0 0
        %686 = vmatpush2.bf16.xpose.msra.mxu0 0
        %687 = vmatprep.subr.bf16.mxu0 0
        %688 = vmatpush2.bf16.xpose.msra.mxu0 0
        %689 = vmatprep.mubr.bf16.mxu0 0
        %690 = vmatmul.mubr.bf16.gmra.mxu0 %v652
        %v691 = vpop.f32.mrf.mxu0
        %v692 = vadd.f32 %v461, %v691
        %v693 = vpop.f32.mrf.mxu0
        %v694 = vpop.f32.mrf.mxu0
        %v695 = vpop.f32.mrf.mxu0
        %696 = vdwg.mxu0
        %vm697 = vcmask 130048
        %v698 = vsel %vm697, %v692, -inf
        %699 = vmax.xlane.f32.xlu0 %v698
        %v700 = vpop.xlane.xlu0 %699
        %v701 = vsub.f32 %v692, %v700
        %v702 = vmul.f32 %v701, 1.442695
        %v703 = vpow.pop %v702
        %v704 = vsel %vm697, %v703, 0.0
        %705 = vadd.xlane.f32.xlu0 %v704
        %v706 = vpop.xlane.xlu0 %705
        %v707 = vrcp.pop %v706
        %v708 = vmul.f32 1.0, %v707
        %v709 = vpack.c.bf16 %v703, %v703
        %v726 = vunpack.c.l.b16 %v441
        %v727 = vunpack.c.l.b16 %v442
        %v728 = vunpack.c.l.b16 %v443
        %v729 = vunpack.c.l.b16 %v444
        %v730 = vunpack.c.l.b16 %v445
        %v731 = vunpack.c.l.b16 %v446
        %v732 = vunpack.c.l.b16 %v447
        %v733 = vunpack.c.l.b16 %v448
        %v734 = vunpack.c.l.b16 %v449
        %v735 = vunpack.c.l.b16 %v450
        %v736 = vunpack.c.l.b16 %v451
        %v737 = vunpack.c.l.b16 %v452
        %v738 = vunpack.c.l.b16 %v453
        %v739 = vunpack.c.l.b16 %v454
        %v740 = vunpack.c.l.b16 %v455
        %v741 = vunpack.c.l.b16 %v456
        %v742 = vpack.c.b16 %v726, %v726
        %v743 = vpack.c.b16 %v727, %v727
        %v744 = vpack.c.b16 %v728, %v728
        %v745 = vpack.c.b16 %v729, %v729
        %v746 = vpack.c.b16 %v730, %v730
        %v747 = vpack.c.b16 %v731, %v731
        %v748 = vpack.c.b16 %v732, %v732
        %v749 = vpack.c.b16 %v733, %v733
        %v750 = vpack.c.b16 %v734, %v734
        %v751 = vpack.c.b16 %v735, %v735
        %v752 = vpack.c.b16 %v736, %v736
        %v753 = vpack.c.b16 %v737, %v737
        %v754 = vpack.c.b16 %v738, %v738
        %v755 = vpack.c.b16 %v739, %v739
        %v756 = vpack.c.b16 %v740, %v740
        %v757 = vpack.c.b16 %v741, %v741
        %v758 = vunpack.c.l.b16 %v742
        %v759 = vunpack.c.l.b16 %v743
        %v760 = vunpack.c.l.b16 %v744
        %v761 = vunpack.c.l.b16 %v745
        %v762 = vunpack.c.l.b16 %v746
        %v763 = vunpack.c.l.b16 %v747
        %v764 = vunpack.c.l.b16 %v748
        %v765 = vunpack.c.l.b16 %v749
        %v766 = vunpack.c.l.b16 %v750
        %v767 = vunpack.c.l.b16 %v751
        %v768 = vunpack.c.l.b16 %v752
        %v769 = vunpack.c.l.b16 %v753
        %v770 = vunpack.c.l.b16 %v754
        %v771 = vunpack.c.l.b16 %v755
        %v772 = vunpack.c.l.b16 %v756
        %v773 = vunpack.c.l.b16 %v757
        %v774 = vrot.slane %v758, 4
        %v775 = vrot.slane %v759, 3
        %v776 = vsel %vm536, %v775, %v774
        %v777 = vrot.slane %v760, 2
        %v778 = vsel %vm539, %v777, %v776
        %v779 = vrot.slane %v761, 1
        %v780 = vsel %vm542, %v779, %v778
        %v781 = vsel %vm545, %v762, %v780
        %v782 = vrot.slane %v763, 7
        %v783 = vsel %vm548, %v782, %v781
        %v784 = vrot.slane %v764, 6
        %v785 = vsel %vm551, %v784, %v783
        %v786 = vrot.slane %v765, 5
        %v787 = vsel %vm554, %v786, %v785
        %v788 = vrot.slane %v766, 4
        %v789 = vrot.slane %v767, 3
        %v790 = vsel %vm536, %v789, %v788
        %v791 = vrot.slane %v768, 2
        %v792 = vsel %vm539, %v791, %v790
        %v793 = vrot.slane %v769, 1
        %v794 = vsel %vm542, %v793, %v792
        %v795 = vsel %vm545, %v770, %v794
        %v796 = vrot.slane %v771, 7
        %v797 = vsel %vm548, %v796, %v795
        %v798 = vrot.slane %v772, 6
        %v799 = vsel %vm551, %v798, %v797
        %v800 = vrot.slane %v773, 5
        %v801 = vsel %vm554, %v800, %v799
        %v802 = vpack.c.b16 %v801, %v787
        %v805 = vsel %vm697, %v709, 0
        %807 = vmatprep.subr.bf16.mxu0 0
        %808 = vmatpush1.bf16.msra.mxu0 0
        %809 = vmatprep.subr.bf16.mxu0 0
        %810 = vmatpush1.bf16.msra.mxu0 0
        %811 = vmatprep.subr.bf16.mxu0 0
        %812 = vmatpush1.bf16.msra.mxu0 0
        %813 = vmatprep.subr.bf16.mxu0 0
        %814 = vmatpush1.bf16.msra.mxu0 0
        %815 = vmatprep.subr.bf16.mxu0 0
        %816 = vmatpush1.bf16.msra.mxu0 0
        %817 = vmatprep.subr.bf16.mxu0 0
        %818 = vmatpush1.bf16.msra.mxu0 0
        %819 = vmatprep.subr.bf16.mxu0 0
        %820 = vmatpush1.bf16.msra.mxu0 0
        %821 = vmatprep.subr.bf16.mxu0 0
        %822 = vmatpush1.bf16.msra.mxu0 %v802
        %823 = vmatprep.subr.bf16.mxu0 0
        %824 = vmatpush2.bf16.msra.mxu0 0
        %825 = vmatprep.subr.bf16.mxu0 0
        %826 = vmatpush2.bf16.msra.mxu0 0
        %827 = vmatprep.subr.bf16.mxu0 0
        %828 = vmatpush2.bf16.msra.mxu0 0
        %829 = vmatprep.subr.bf16.mxu0 0
        %830 = vmatpush2.bf16.msra.mxu0 0
        %831 = vmatprep.subr.bf16.mxu0 0
        %832 = vmatpush2.bf16.msra.mxu0 0
        %833 = vmatprep.subr.bf16.mxu0 0
        %834 = vmatpush2.bf16.msra.mxu0 0
        %835 = vmatprep.subr.bf16.mxu0 0
        %836 = vmatpush2.bf16.msra.mxu0 0
        %837 = vmatprep.subr.bf16.mxu0 0
        %838 = vmatpush2.bf16.msra.mxu0 0
        %839 = vmatprep.mubr.bf16.mxu0 0
        %840 = vmatmul.mubr.bf16.gmra.mxu0 %v805
        %v841 = vpop.f32.mrf.mxu0
        %v842 = vadd.f32 0.0, %v841
        %v843 = vpop.f32.mrf.mxu0
        %v844 = vpop.f32.mrf.mxu0
        %v845 = vpop.f32.mrf.mxu0
        %846 = vdwg.mxu0
        %v847 = vmul.f32 %v842, %v708
        %v848 = vmul.f32 %v708, 0.25
        %v849 = vmul.f32 %v703, %v848
        %850 = vst.msk [vmem:[%s407] sm:$0xff] %vm697, %v849
        %v851 = vld [vmem:[%s367] sm:$0x1]
        %v852 = vld [vmem:[%s367 + $0x2] sm:$0x1]
        %v853 = vld [vmem:[%s367 + $0x4] sm:$0x1]
        %v854 = vld [vmem:[%s367 + $0x6] sm:$0x1]
        %v855 = vld [vmem:[%s367 + $0x8] sm:$0x1]
        %v856 = vld [vmem:[%s367 + $0xa] sm:$0x1]
        %v857 = vld [vmem:[%s367 + $0xc] sm:$0x1]
        %v858 = vld [vmem:[%s367 + $0xe] sm:$0x1]
        %v859 = vld [vmem:[%s374] sm:$0x1]
        %v860 = vld [vmem:[%s374 + $0x4] sm:$0x1]
        %v861 = vld [vmem:[%s374 + $0x8] sm:$0x1]
        %v862 = vld [vmem:[%s374 + $0xc] sm:$0x1]
        %v863 = vld [vmem:[%s374 + $0x10] sm:$0x1]
        %v864 = vld [vmem:[%s374 + $0x14] sm:$0x1]
        %v865 = vld [vmem:[%s374 + $0x18] sm:$0x1]
        %v866 = vld [vmem:[%s374 + $0x1c] sm:$0x1]
        %v867 = vld [vmem:[%s374 + $0x20] sm:$0x1]
        %v868 = vld [vmem:[%s374 + $0x24] sm:$0x1]
        %v869 = vld [vmem:[%s374 + $0x28] sm:$0x1]
        %v870 = vld [vmem:[%s374 + $0x2c] sm:$0x1]
        %v871 = vld [vmem:[%s374 + $0x30] sm:$0x1]
        %v872 = vld [vmem:[%s374 + $0x34] sm:$0x1]
        %v873 = vld [vmem:[%s374 + $0x38] sm:$0x1]
        %v874 = vld [vmem:[%s374 + $0x3c] sm:$0x1]
        %v875 = vld [vmem:[%s374] sm:$0x4]
        %v876 = vld [vmem:[%s374 + $0x4] sm:$0x4]
        %v877 = vld [vmem:[%s374 + $0x8] sm:$0x4]
        %v878 = vld [vmem:[%s374 + $0xc] sm:$0x4]
        %v879 = vld [vmem:[%s374 + $0x10] sm:$0x4]
        %v880 = vld [vmem:[%s374 + $0x14] sm:$0x4]
        %v881 = vld [vmem:[%s374 + $0x18] sm:$0x4]
        %v882 = vld [vmem:[%s374 + $0x1c] sm:$0x4]
        %v883 = vld [vmem:[%s374 + $0x20] sm:$0x4]
        %v884 = vld [vmem:[%s374 + $0x24] sm:$0x4]
        %v885 = vld [vmem:[%s374 + $0x28] sm:$0x4]
        %v886 = vld [vmem:[%s374 + $0x2c] sm:$0x4]
        %v887 = vld [vmem:[%s374 + $0x30] sm:$0x4]
        %v888 = vld [vmem:[%s374 + $0x34] sm:$0x4]
        %v889 = vld [vmem:[%s374 + $0x38] sm:$0x4]
        %v890 = vld [vmem:[%s374 + $0x3c] sm:$0x4]
        %v900 = vunpack.c.l.s4 1983009808
        %v901 = vunpack.c.0.s8 %v900
        %v902 = vlaneseq
        %v903 = vshrl.u32 %v902, 7
        %v904 = vsub.s32 %v901, %v903
        %v905 = vrot.slane %v851, %v904
        %v907 = vunpack.c.l.s4 1983009808
        %v908 = vunpack.c.0.s8 %v907
        %v909 = vlaneseq
        %v910 = vshrl.u32 %v909, 7
        %v911 = vsub.s32 %v908, %v910
        %v912 = vrot.slane %v852, %v911
        %v914 = vunpack.c.l.s4 1983009808
        %v915 = vunpack.c.0.s8 %v914
        %v916 = vlaneseq
        %v917 = vshrl.u32 %v916, 7
        %v918 = vsub.s32 %v915, %v917
        %v919 = vrot.slane %v853, %v918
        %v921 = vunpack.c.l.s4 1983009808
        %v922 = vunpack.c.0.s8 %v921
        %v923 = vlaneseq
        %v924 = vshrl.u32 %v923, 7
        %v925 = vsub.s32 %v922, %v924
        %v926 = vrot.slane %v854, %v925
        %v928 = vunpack.c.l.s4 1983009808
        %v929 = vunpack.c.0.s8 %v928
        %v930 = vlaneseq
        %v931 = vshrl.u32 %v930, 7
        %v932 = vsub.s32 %v929, %v931
        %v933 = vrot.slane %v855, %v932
        %v935 = vunpack.c.l.s4 1983009808
        %v936 = vunpack.c.0.s8 %v935
        %v937 = vlaneseq
        %v938 = vshrl.u32 %v937, 7
        %v939 = vsub.s32 %v936, %v938
        %v940 = vrot.slane %v856, %v939
        %v942 = vunpack.c.l.s4 1983009808
        %v943 = vunpack.c.0.s8 %v942
        %v944 = vlaneseq
        %v945 = vshrl.u32 %v944, 7
        %v946 = vsub.s32 %v943, %v945
        %v947 = vrot.slane %v857, %v946
        %v949 = vunpack.c.l.s4 1983009808
        %v950 = vunpack.c.0.s8 %v949
        %v951 = vlaneseq
        %v952 = vshrl.u32 %v951, 7
        %v953 = vsub.s32 %v950, %v952
        %v954 = vrot.slane %v858, %v953
        %v955 = vunpack.c.l.b16 %v905
        %v956 = vunpack.c.l.b16 %v912
        %v957 = vunpack.c.l.b16 %v919
        %v958 = vunpack.c.l.b16 %v926
        %v959 = vunpack.c.l.b16 %v933
        %v960 = vunpack.c.l.b16 %v940
        %v961 = vunpack.c.l.b16 %v947
        %v962 = vunpack.c.l.b16 %v954
        %v963 = vrot.slane %v955, 1
        %v964 = vsel %vm536, %v956, %v963
        %v965 = vrot.slane %v957, 7
        %v966 = vsel %vm539, %v965, %v964
        %v967 = vrot.slane %v958, 6
        %v968 = vsel %vm542, %v967, %v966
        %v969 = vrot.slane %v959, 5
        %v970 = vsel %vm545, %v969, %v968
        %v971 = vrot.slane %v960, 4
        %v972 = vsel %vm548, %v971, %v970
        %v973 = vrot.slane %v961, 3
        %v974 = vsel %vm551, %v973, %v972
        %v975 = vrot.slane %v962, 2
        %v976 = vsel %vm554, %v975, %v974
        %v977 = vpack.c.b16 %v976, %v976
        %v994 = vunpack.c.l.b16 %v859
        %v995 = vunpack.c.l.b16 %v860
        %v996 = vunpack.c.l.b16 %v861
        %v997 = vunpack.c.l.b16 %v862
        %v998 = vunpack.c.l.b16 %v863
        %v999 = vunpack.c.l.b16 %v864
        %v1000 = vunpack.c.l.b16 %v865
        %v1001 = vunpack.c.l.b16 %v866
        %v1002 = vunpack.c.l.b16 %v867
        %v1003 = vunpack.c.l.b16 %v868
        %v1004 = vunpack.c.l.b16 %v869
        %v1005 = vunpack.c.l.b16 %v870
        %v1006 = vunpack.c.l.b16 %v871
        %v1007 = vunpack.c.l.b16 %v872
        %v1008 = vunpack.c.l.b16 %v873
        %v1009 = vunpack.c.l.b16 %v874
        %v1010 = vpack.c.b16 %v994, %v994
        %v1011 = vpack.c.b16 %v995, %v995
        %v1012 = vpack.c.b16 %v996, %v996
        %v1013 = vpack.c.b16 %v997, %v997
        %v1014 = vpack.c.b16 %v998, %v998
        %v1015 = vpack.c.b16 %v999, %v999
        %v1016 = vpack.c.b16 %v1000, %v1000
        %v1017 = vpack.c.b16 %v1001, %v1001
        %v1018 = vpack.c.b16 %v1002, %v1002
        %v1019 = vpack.c.b16 %v1003, %v1003
        %v1020 = vpack.c.b16 %v1004, %v1004
        %v1021 = vpack.c.b16 %v1005, %v1005
        %v1022 = vpack.c.b16 %v1006, %v1006
        %v1023 = vpack.c.b16 %v1007, %v1007
        %v1024 = vpack.c.b16 %v1008, %v1008
        %v1025 = vpack.c.b16 %v1009, %v1009
        %v1026 = vunpack.c.l.b16 %v1010
        %v1027 = vunpack.c.l.b16 %v1011
        %v1028 = vunpack.c.l.b16 %v1012
        %v1029 = vunpack.c.l.b16 %v1013
        %v1030 = vunpack.c.l.b16 %v1014
        %v1031 = vunpack.c.l.b16 %v1015
        %v1032 = vunpack.c.l.b16 %v1016
        %v1033 = vunpack.c.l.b16 %v1017
        %v1034 = vunpack.c.l.b16 %v1018
        %v1035 = vunpack.c.l.b16 %v1019
        %v1036 = vunpack.c.l.b16 %v1020
        %v1037 = vunpack.c.l.b16 %v1021
        %v1038 = vunpack.c.l.b16 %v1022
        %v1039 = vunpack.c.l.b16 %v1023
        %v1040 = vunpack.c.l.b16 %v1024
        %v1041 = vunpack.c.l.b16 %v1025
        %v1042 = vrot.slane %v1026, 1
        %v1043 = vsel %vm536, %v1027, %v1042
        %v1044 = vrot.slane %v1028, 7
        %v1045 = vsel %vm539, %v1044, %v1043
        %v1046 = vrot.slane %v1029, 6
        %v1047 = vsel %vm542, %v1046, %v1045
        %v1048 = vrot.slane %v1030, 5
        %v1049 = vsel %vm545, %v1048, %v1047
        %v1050 = vrot.slane %v1031, 4
        %v1051 = vsel %vm548, %v1050, %v1049
        %v1052 = vrot.slane %v1032, 3
        %v1053 = vsel %vm551, %v1052, %v1051
        %v1054 = vrot.slane %v1033, 2
        %v1055 = vsel %vm554, %v1054, %v1053
        %v1056 = vrot.slane %v1034, 1
        %v1057 = vsel %vm536, %v1035, %v1056
        %v1058 = vrot.slane %v1036, 7
        %v1059 = vsel %vm539, %v1058, %v1057
        %v1060 = vrot.slane %v1037, 6
        %v1061 = vsel %vm542, %v1060, %v1059
        %v1062 = vrot.slane %v1038, 5
        %v1063 = vsel %vm545, %v1062, %v1061
        %v1064 = vrot.slane %v1039, 4
        %v1065 = vsel %vm548, %v1064, %v1063
        %v1066 = vrot.slane %v1040, 3
        %v1067 = vsel %vm551, %v1066, %v1065
        %v1068 = vrot.slane %v1041, 2
        %v1069 = vsel %vm554, %v1068, %v1067
        %v1070 = vpack.c.b16 %v1069, %v1055
        %v1072 = vsel %vm650, %v977, 0
        %v1075 = vsel %vm650, %v1070, 0
        %1077 = vmatprep.subr.bf16.mxu0 0
        %1078 = vmatpush1.bf16.xpose.msra.mxu0 0
        %1079 = vmatprep.subr.bf16.mxu0 0
        %1080 = vmatpush1.bf16.xpose.msra.mxu0 0
        %1081 = vmatprep.subr.bf16.mxu0 0
        %1082 = vmatpush1.bf16.xpose.msra.mxu0 0
        %1083 = vmatprep.subr.bf16.mxu0 0
        %1084 = vmatpush1.bf16.xpose.msra.mxu0 0
        %1085 = vmatprep.subr.bf16.mxu0 0
        %1086 = vmatpush1.bf16.xpose.msra.mxu0 0
        %1087 = vmatprep.subr.bf16.mxu0 0
        %1088 = vmatpush1.bf16.xpose.msra.mxu0 0
        %1089 = vmatprep.subr.bf16.mxu0 0
        %1090 = vmatpush1.bf16.xpose.msra.mxu0 0
        %1091 = vmatprep.subr.bf16.mxu0 0
        %1092 = vmatpush1.bf16.xpose.msra.mxu0 %v1075
        %1093 = vmatprep.subr.bf16.mxu0 0
        %1094 = vmatpush2.bf16.xpose.msra.mxu0 0
        %1095 = vmatprep.subr.bf16.mxu0 0
        %1096 = vmatpush2.bf16.xpose.msra.mxu0 0
        %1097 = vmatprep.subr.bf16.mxu0 0
        %1098 = vmatpush2.bf16.xpose.msra.mxu0 0
        %1099 = vmatprep.subr.bf16.mxu0 0
        %1100 = vmatpush2.bf16.xpose.msra.mxu0 0
        %1101 = vmatprep.subr.bf16.mxu0 0
        %1102 = vmatpush2.bf16.xpose.msra.mxu0 0
        %1103 = vmatprep.subr.bf16.mxu0 0
        %1104 = vmatpush2.bf16.xpose.msra.mxu0 0
        %1105 = vmatprep.subr.bf16.mxu0 0
        %1106 = vmatpush2.bf16.xpose.msra.mxu0 0
        %1107 = vmatprep.subr.bf16.mxu0 0
        %1108 = vmatpush2.bf16.xpose.msra.mxu0 0
        %1109 = vmatprep.mubr.bf16.mxu0 0
        %1110 = vmatmul.mubr.bf16.gmra.mxu0 %v1072
        %v1111 = vpop.f32.mrf.mxu0
        %v1112 = vadd.f32 %v461, %v1111
        %v1113 = vpop.f32.mrf.mxu0
        %v1114 = vpop.f32.mrf.mxu0
        %v1115 = vpop.f32.mrf.mxu0
        %1116 = vdwg.mxu0
        %v1117 = vsel %vm697, %v1112, -inf
        %1118 = vmax.xlane.f32.xlu0 %v1117
        %v1119 = vpop.xlane.xlu0 %1118
        %v1120 = vsub.f32 %v1112, %v1119
        %v1121 = vmul.f32 %v1120, 1.442695
        %v1122 = vpow.pop %v1121
        %v1123 = vsel %vm697, %v1122, 0.0
        %1124 = vadd.xlane.f32.xlu0 %v1123
        %v1125 = vpop.xlane.xlu0 %1124
        %v1126 = vrcp.pop %v1125
        %v1127 = vmul.f32 1.0, %v1126
        %v1128 = vpack.c.bf16 %v1122, %v1122
        %v1145 = vunpack.c.l.b16 %v875
        %v1146 = vunpack.c.l.b16 %v876
        %v1147 = vunpack.c.l.b16 %v877
        %v1148 = vunpack.c.l.b16 %v878
        %v1149 = vunpack.c.l.b16 %v879
        %v1150 = vunpack.c.l.b16 %v880
        %v1151 = vunpack.c.l.b16 %v881
        %v1152 = vunpack.c.l.b16 %v882
        %v1153 = vunpack.c.l.b16 %v883
        %v1154 = vunpack.c.l.b16 %v884
        %v1155 = vunpack.c.l.b16 %v885
        %v1156 = vunpack.c.l.b16 %v886
        %v1157 = vunpack.c.l.b16 %v887
        %v1158 = vunpack.c.l.b16 %v888
        %v1159 = vunpack.c.l.b16 %v889
        %v1160 = vunpack.c.l.b16 %v890
        %v1161 = vpack.c.b16 %v1145, %v1145
        %v1162 = vpack.c.b16 %v1146, %v1146
        %v1163 = vpack.c.b16 %v1147, %v1147
        %v1164 = vpack.c.b16 %v1148, %v1148
        %v1165 = vpack.c.b16 %v1149, %v1149
        %v1166 = vpack.c.b16 %v1150, %v1150
        %v1167 = vpack.c.b16 %v1151, %v1151
        %v1168 = vpack.c.b16 %v1152, %v1152
        %v1169 = vpack.c.b16 %v1153, %v1153
        %v1170 = vpack.c.b16 %v1154, %v1154
        %v1171 = vpack.c.b16 %v1155, %v1155
        %v1172 = vpack.c.b16 %v1156, %v1156
        %v1173 = vpack.c.b16 %v1157, %v1157
        %v1174 = vpack.c.b16 %v1158, %v1158
        %v1175 = vpack.c.b16 %v1159, %v1159
        %v1176 = vpack.c.b16 %v1160, %v1160
        %v1177 = vunpack.c.l.b16 %v1161
        %v1178 = vunpack.c.l.b16 %v1162
        %v1179 = vunpack.c.l.b16 %v1163
        %v1180 = vunpack.c.l.b16 %v1164
        %v1181 = vunpack.c.l.b16 %v1165
        %v1182 = vunpack.c.l.b16 %v1166
        %v1183 = vunpack.c.l.b16 %v1167
        %v1184 = vunpack.c.l.b16 %v1168
        %v1185 = vunpack.c.l.b16 %v1169
        %v1186 = vunpack.c.l.b16 %v1170
        %v1187 = vunpack.c.l.b16 %v1171
        %v1188 = vunpack.c.l.b16 %v1172
        %v1189 = vunpack.c.l.b16 %v1173
        %v1190 = vunpack.c.l.b16 %v1174
        %v1191 = vunpack.c.l.b16 %v1175
        %v1192 = vunpack.c.l.b16 %v1176
        %v1193 = vrot.slane %v1177, 5
        %v1194 = vrot.slane %v1178, 4
        %v1195 = vsel %vm536, %v1194, %v1193
        %v1196 = vrot.slane %v1179, 3
        %v1197 = vsel %vm539, %v1196, %v1195
        %v1198 = vrot.slane %v1180, 2
        %v1199 = vsel %vm542, %v1198, %v1197
        %v1200 = vrot.slane %v1181, 1
        %v1201 = vsel %vm545, %v1200, %v1199
        %v1202 = vsel %vm548, %v1182, %v1201
        %v1203 = vrot.slane %v1183, 7
        %v1204 = vsel %vm551, %v1203, %v1202
        %v1205 = vrot.slane %v1184, 6
        %v1206 = vsel %vm554, %v1205, %v1204
        %v1207 = vrot.slane %v1185, 5
        %v1208 = vrot.slane %v1186, 4
        %v1209 = vsel %vm536, %v1208, %v1207
        %v1210 = vrot.slane %v1187, 3
        %v1211 = vsel %vm539, %v1210, %v1209
        %v1212 = vrot.slane %v1188, 2
        %v1213 = vsel %vm542, %v1212, %v1211
        %v1214 = vrot.slane %v1189, 1
        %v1215 = vsel %vm545, %v1214, %v1213
        %v1216 = vsel %vm548, %v1190, %v1215
        %v1217 = vrot.slane %v1191, 7
        %v1218 = vsel %vm551, %v1217, %v1216
        %v1219 = vrot.slane %v1192, 6
        %v1220 = vsel %vm554, %v1219, %v1218
        %v1221 = vpack.c.b16 %v1220, %v1206
        %v1224 = vsel %vm697, %v1128, 0
        %1226 = vmatprep.subr.bf16.mxu0 0
        %1227 = vmatpush1.bf16.msra.mxu0 0
        %1228 = vmatprep.subr.bf16.mxu0 0
        %1229 = vmatpush1.bf16.msra.mxu0 0
        %1230 = vmatprep.subr.bf16.mxu0 0
        %1231 = vmatpush1.bf16.msra.mxu0 0
        %1232 = vmatprep.subr.bf16.mxu0 0
        %1233 = vmatpush1.bf16.msra.mxu0 0
        %1234 = vmatprep.subr.bf16.mxu0 0
        %1235 = vmatpush1.bf16.msra.mxu0 0
        %1236 = vmatprep.subr.bf16.mxu0 0
        %1237 = vmatpush1.bf16.msra.mxu0 0
        %1238 = vmatprep.subr.bf16.mxu0 0
        %1239 = vmatpush1.bf16.msra.mxu0 0
        %1240 = vmatprep.subr.bf16.mxu0 0
        %1241 = vmatpush1.bf16.msra.mxu0 %v1221
        %1242 = vmatprep.subr.bf16.mxu0 0
        %1243 = vmatpush2.bf16.msra.mxu0 0
        %1244 = vmatprep.subr.bf16.mxu0 0
        %1245 = vmatpush2.bf16.msra.mxu0 0
        %1246 = vmatprep.subr.bf16.mxu0 0
        %1247 = vmatpush2.bf16.msra.mxu0 0
        %1248 = vmatprep.subr.bf16.mxu0 0
        %1249 = vmatpush2.bf16.msra.mxu0 0
        %1250 = vmatprep.subr.bf16.mxu0 0
        %1251 = vmatpush2.bf16.msra.mxu0 0
        %1252 = vmatprep.subr.bf16.mxu0 0
        %1253 = vmatpush2.bf16.msra.mxu0 0
        %1254 = vmatprep.subr.bf16.mxu0 0
        %1255 = vmatpush2.bf16.msra.mxu0 0
        %1256 = vmatprep.subr.bf16.mxu0 0
        %1257 = vmatpush2.bf16.msra.mxu0 0
        %1258 = vmatprep.mubr.bf16.mxu0 0
        %1259 = vmatmul.mubr.bf16.gmra.mxu0 %v1224
        %v1260 = vpop.f32.mrf.mxu0
        %v1261 = vadd.f32 0.0, %v1260
        %v1262 = vpop.f32.mrf.mxu0
        %v1263 = vpop.f32.mrf.mxu0
        %v1264 = vpop.f32.mrf.mxu0
        %1265 = vdwg.mxu0
        %v1266 = vmul.f32 %v1261, %v1127
        %v1267 = vmul.f32 %v1127, 0.25
        %v1268 = vmul.f32 %v1122, %v1267
        %v1269 = vld [vmem:[%s407] sm:$0xff]
        %v1270 = vadd.f32 %v1269, %v1268
        %1271 = vst.msk [vmem:[%s407] sm:$0xff] %vm697, %v1270
        %v1272 = vld [vmem:[%s367] sm:$0x2]
        %v1273 = vld [vmem:[%s367 + $0x2] sm:$0x2]
        %v1274 = vld [vmem:[%s367 + $0x4] sm:$0x2]
        %v1275 = vld [vmem:[%s367 + $0x6] sm:$0x2]
        %v1276 = vld [vmem:[%s367 + $0x8] sm:$0x2]
        %v1277 = vld [vmem:[%s367 + $0xa] sm:$0x2]
        %v1278 = vld [vmem:[%s367 + $0xc] sm:$0x2]
        %v1279 = vld [vmem:[%s367 + $0xe] sm:$0x2]
        %v1280 = vld [vmem:[%s374] sm:$0x2]
        %v1281 = vld [vmem:[%s374 + $0x4] sm:$0x2]
        %v1282 = vld [vmem:[%s374 + $0x8] sm:$0x2]
        %v1283 = vld [vmem:[%s374 + $0xc] sm:$0x2]
        %v1284 = vld [vmem:[%s374 + $0x10] sm:$0x2]
        %v1285 = vld [vmem:[%s374 + $0x14] sm:$0x2]
        %v1286 = vld [vmem:[%s374 + $0x18] sm:$0x2]
        %v1287 = vld [vmem:[%s374 + $0x1c] sm:$0x2]
        %v1288 = vld [vmem:[%s374 + $0x20] sm:$0x2]
        %v1289 = vld [vmem:[%s374 + $0x24] sm:$0x2]
        %v1290 = vld [vmem:[%s374 + $0x28] sm:$0x2]
        %v1291 = vld [vmem:[%s374 + $0x2c] sm:$0x2]
        %v1292 = vld [vmem:[%s374 + $0x30] sm:$0x2]
        %v1293 = vld [vmem:[%s374 + $0x34] sm:$0x2]
        %v1294 = vld [vmem:[%s374 + $0x38] sm:$0x2]
        %v1295 = vld [vmem:[%s374 + $0x3c] sm:$0x2]
        %v1296 = vld [vmem:[%s374] sm:$0x8]
        %v1297 = vld [vmem:[%s374 + $0x4] sm:$0x8]
        %v1298 = vld [vmem:[%s374 + $0x8] sm:$0x8]
        %v1299 = vld [vmem:[%s374 + $0xc] sm:$0x8]
        %v1300 = vld [vmem:[%s374 + $0x10] sm:$0x8]
        %v1301 = vld [vmem:[%s374 + $0x14] sm:$0x8]
        %v1302 = vld [vmem:[%s374 + $0x18] sm:$0x8]
        %v1303 = vld [vmem:[%s374 + $0x1c] sm:$0x8]
        %v1304 = vld [vmem:[%s374 + $0x20] sm:$0x8]
        %v1305 = vld [vmem:[%s374 + $0x24] sm:$0x8]
        %v1306 = vld [vmem:[%s374 + $0x28] sm:$0x8]
        %v1307 = vld [vmem:[%s374 + $0x2c] sm:$0x8]
        %v1308 = vld [vmem:[%s374 + $0x30] sm:$0x8]
        %v1309 = vld [vmem:[%s374 + $0x34] sm:$0x8]
        %v1310 = vld [vmem:[%s374 + $0x38] sm:$0x8]
        %v1311 = vld [vmem:[%s374 + $0x3c] sm:$0x8]
        %v1321 = vunpack.c.l.s4 1983009808
        %v1322 = vunpack.c.0.s8 %v1321
        %v1323 = vlaneseq
        %v1324 = vshrl.u32 %v1323, 7
        %v1325 = vsub.s32 %v1322, %v1324
        %v1326 = vrot.slane %v1272, %v1325
        %v1328 = vunpack.c.l.s4 1983009808
        %v1329 = vunpack.c.0.s8 %v1328
        %v1330 = vlaneseq
        %v1331 = vshrl.u32 %v1330, 7
        %v1332 = vsub.s32 %v1329, %v1331
        %v1333 = vrot.slane %v1273, %v1332
        %v1335 = vunpack.c.l.s4 1983009808
        %v1336 = vunpack.c.0.s8 %v1335
        %v1337 = vlaneseq
        %v1338 = vshrl.u32 %v1337, 7
        %v1339 = vsub.s32 %v1336, %v1338
        %v1340 = vrot.slane %v1274, %v1339
        %v1342 = vunpack.c.l.s4 1983009808
        %v1343 = vunpack.c.0.s8 %v1342
        %v1344 = vlaneseq
        %v1345 = vshrl.u32 %v1344, 7
        %v1346 = vsub.s32 %v1343, %v1345
        %v1347 = vrot.slane %v1275, %v1346
        %v1349 = vunpack.c.l.s4 1983009808
        %v1350 = vunpack.c.0.s8 %v1349
        %v1351 = vlaneseq
        %v1352 = vshrl.u32 %v1351, 7
        %v1353 = vsub.s32 %v1350, %v1352
        %v1354 = vrot.slane %v1276, %v1353
        %v1356 = vunpack.c.l.s4 1983009808
        %v1357 = vunpack.c.0.s8 %v1356
        %v1358 = vlaneseq
        %v1359 = vshrl.u32 %v1358, 7
        %v1360 = vsub.s32 %v1357, %v1359
        %v1361 = vrot.slane %v1277, %v1360
        %v1363 = vunpack.c.l.s4 1983009808
        %v1364 = vunpack.c.0.s8 %v1363
        %v1365 = vlaneseq
        %v1366 = vshrl.u32 %v1365, 7
        %v1367 = vsub.s32 %v1364, %v1366
        %v1368 = vrot.slane %v1278, %v1367
        %v1370 = vunpack.c.l.s4 1983009808
        %v1371 = vunpack.c.0.s8 %v1370
        %v1372 = vlaneseq
        %v1373 = vshrl.u32 %v1372, 7
        %v1374 = vsub.s32 %v1371, %v1373
        %v1375 = vrot.slane %v1279, %v1374
        %v1376 = vunpack.c.l.b16 %v1326
        %v1377 = vunpack.c.l.b16 %v1333
        %v1378 = vunpack.c.l.b16 %v1340
        %v1379 = vunpack.c.l.b16 %v1347
        %v1380 = vunpack.c.l.b16 %v1354
        %v1381 = vunpack.c.l.b16 %v1361
        %v1382 = vunpack.c.l.b16 %v1368
        %v1383 = vunpack.c.l.b16 %v1375
        %v1384 = vrot.slane %v1376, 2
        %v1385 = vrot.slane %v1377, 1
        %v1386 = vsel %vm536, %v1385, %v1384
        %v1387 = vsel %vm539, %v1378, %v1386
        %v1388 = vrot.slane %v1379, 7
        %v1389 = vsel %vm542, %v1388, %v1387
        %v1390 = vrot.slane %v1380, 6
        %v1391 = vsel %vm545, %v1390, %v1389
        %v1392 = vrot.slane %v1381, 5
        %v1393 = vsel %vm548, %v1392, %v1391
        %v1394 = vrot.slane %v1382, 4
        %v1395 = vsel %vm551, %v1394, %v1393
        %v1396 = vrot.slane %v1383, 3
        %v1397 = vsel %vm554, %v1396, %v1395
        %v1398 = vpack.c.b16 %v1397, %v1397
        %v1415 = vunpack.c.l.b16 %v1280
        %v1416 = vunpack.c.l.b16 %v1281
        %v1417 = vunpack.c.l.b16 %v1282
        %v1418 = vunpack.c.l.b16 %v1283
        %v1419 = vunpack.c.l.b16 %v1284
        %v1420 = vunpack.c.l.b16 %v1285
        %v1421 = vunpack.c.l.b16 %v1286
        %v1422 = vunpack.c.l.b16 %v1287
        %v1423 = vunpack.c.l.b16 %v1288
        %v1424 = vunpack.c.l.b16 %v1289
        %v1425 = vunpack.c.l.b16 %v1290
        %v1426 = vunpack.c.l.b16 %v1291
        %v1427 = vunpack.c.l.b16 %v1292
        %v1428 = vunpack.c.l.b16 %v1293
        %v1429 = vunpack.c.l.b16 %v1294
        %v1430 = vunpack.c.l.b16 %v1295
        %v1431 = vpack.c.b16 %v1415, %v1415
        %v1432 = vpack.c.b16 %v1416, %v1416
        %v1433 = vpack.c.b16 %v1417, %v1417
        %v1434 = vpack.c.b16 %v1418, %v1418
        %v1435 = vpack.c.b16 %v1419, %v1419
        %v1436 = vpack.c.b16 %v1420, %v1420
        %v1437 = vpack.c.b16 %v1421, %v1421
        %v1438 = vpack.c.b16 %v1422, %v1422
        %v1439 = vpack.c.b16 %v1423, %v1423
        %v1440 = vpack.c.b16 %v1424, %v1424
        %v1441 = vpack.c.b16 %v1425, %v1425
        %v1442 = vpack.c.b16 %v1426, %v1426
        %v1443 = vpack.c.b16 %v1427, %v1427
        %v1444 = vpack.c.b16 %v1428, %v1428
        %v1445 = vpack.c.b16 %v1429, %v1429
        %v1446 = vpack.c.b16 %v1430, %v1430
        %v1447 = vunpack.c.l.b16 %v1431
        %v1448 = vunpack.c.l.b16 %v1432
        %v1449 = vunpack.c.l.b16 %v1433
        %v1450 = vunpack.c.l.b16 %v1434
        %v1451 = vunpack.c.l.b16 %v1435
        %v1452 = vunpack.c.l.b16 %v1436
        %v1453 = vunpack.c.l.b16 %v1437
        %v1454 = vunpack.c.l.b16 %v1438
        %v1455 = vunpack.c.l.b16 %v1439
        %v1456 = vunpack.c.l.b16 %v1440
        %v1457 = vunpack.c.l.b16 %v1441
        %v1458 = vunpack.c.l.b16 %v1442
        %v1459 = vunpack.c.l.b16 %v1443
        %v1460 = vunpack.c.l.b16 %v1444
        %v1461 = vunpack.c.l.b16 %v1445
        %v1462 = vunpack.c.l.b16 %v1446
        %v1463 = vrot.slane %v1447, 2
        %v1464 = vrot.slane %v1448, 1
        %v1465 = vsel %vm536, %v1464, %v1463
        %v1466 = vsel %vm539, %v1449, %v1465
        %v1467 = vrot.slane %v1450, 7
        %v1468 = vsel %vm542, %v1467, %v1466
        %v1469 = vrot.slane %v1451, 6
        %v1470 = vsel %vm545, %v1469, %v1468
        %v1471 = vrot.slane %v1452, 5
        %v1472 = vsel %vm548, %v1471, %v1470
        %v1473 = vrot.slane %v1453, 4
        %v1474 = vsel %vm551, %v1473, %v1472
        %v1475 = vrot.slane %v1454, 3
        %v1476 = vsel %vm554, %v1475, %v1474
        %v1477 = vrot.slane %v1455, 2
        %v1478 = vrot.slane %v1456, 1
        %v1479 = vsel %vm536, %v1478, %v1477
        %v1480 = vsel %vm539, %v1457, %v1479
        %v1481 = vrot.slane %v1458, 7
        %v1482 = vsel %vm542, %v1481, %v1480
        %v1483 = vrot.slane %v1459, 6
        %v1484 = vsel %vm545, %v1483, %v1482
        %v1485 = vrot.slane %v1460, 5
        %v1486 = vsel %vm548, %v1485, %v1484
        %v1487 = vrot.slane %v1461, 4
        %v1488 = vsel %vm551, %v1487, %v1486
        %v1489 = vrot.slane %v1462, 3
        %v1490 = vsel %vm554, %v1489, %v1488
        %v1491 = vpack.c.b16 %v1490, %v1476
        %v1493 = vsel %vm650, %v1398, 0
        %v1496 = vsel %vm650, %v1491, 0
        %1498 = vmatprep.subr.bf16.mxu0 0
        %1499 = vmatpush1.bf16.xpose.msra.mxu0 0
        %1500 = vmatprep.subr.bf16.mxu0 0
        %1501 = vmatpush1.bf16.xpose.msra.mxu0 0
        %1502 = vmatprep.subr.bf16.mxu0 0
        %1503 = vmatpush1.bf16.xpose.msra.mxu0 0
        %1504 = vmatprep.subr.bf16.mxu0 0
        %1505 = vmatpush1.bf16.xpose.msra.mxu0 0
        %1506 = vmatprep.subr.bf16.mxu0 0
        %1507 = vmatpush1.bf16.xpose.msra.mxu0 0
        %1508 = vmatprep.subr.bf16.mxu0 0
        %1509 = vmatpush1.bf16.xpose.msra.mxu0 0
        %1510 = vmatprep.subr.bf16.mxu0 0
        %1511 = vmatpush1.bf16.xpose.msra.mxu0 0
        %1512 = vmatprep.subr.bf16.mxu0 0
        %1513 = vmatpush1.bf16.xpose.msra.mxu0 %v1496
        %1514 = vmatprep.subr.bf16.mxu0 0
        %1515 = vmatpush2.bf16.xpose.msra.mxu0 0
        %1516 = vmatprep.subr.bf16.mxu0 0
        %1517 = vmatpush2.bf16.xpose.msra.mxu0 0
        %1518 = vmatprep.subr.bf16.mxu0 0
        %1519 = vmatpush2.bf16.xpose.msra.mxu0 0
        %1520 = vmatprep.subr.bf16.mxu0 0
        %1521 = vmatpush2.bf16.xpose.msra.mxu0 0
        %1522 = vmatprep.subr.bf16.mxu0 0
        %1523 = vmatpush2.bf16.xpose.msra.mxu0 0
        %1524 = vmatprep.subr.bf16.mxu0 0
        %1525 = vmatpush2.bf16.xpose.msra.mxu0 0
        %1526 = vmatprep.subr.bf16.mxu0 0
        %1527 = vmatpush2.bf16.xpose.msra.mxu0 0
        %1528 = vmatprep.subr.bf16.mxu0 0
        %1529 = vmatpush2.bf16.xpose.msra.mxu0 0
        %1530 = vmatprep.mubr.bf16.mxu0 0
        %1531 = vmatmul.mubr.bf16.gmra.mxu0 %v1493
        %v1532 = vpop.f32.mrf.mxu0
        %v1533 = vadd.f32 %v461, %v1532
        %v1534 = vpop.f32.mrf.mxu0
        %v1535 = vpop.f32.mrf.mxu0
        %v1536 = vpop.f32.mrf.mxu0
        %1537 = vdwg.mxu0
        %v1538 = vsel %vm697, %v1533, -inf
        %1539 = vmax.xlane.f32.xlu0 %v1538
        %v1540 = vpop.xlane.xlu0 %1539
        %v1541 = vsub.f32 %v1533, %v1540
        %v1542 = vmul.f32 %v1541, 1.442695
        %v1543 = vpow.pop %v1542
        %v1544 = vsel %vm697, %v1543, 0.0
        %1545 = vadd.xlane.f32.xlu0 %v1544
        %v1546 = vpop.xlane.xlu0 %1545
        %v1547 = vrcp.pop %v1546
        %v1548 = vmul.f32 1.0, %v1547
        %v1549 = vpack.c.bf16 %v1543, %v1543
        %v1566 = vunpack.c.l.b16 %v1296
        %v1567 = vunpack.c.l.b16 %v1297
        %v1568 = vunpack.c.l.b16 %v1298
        %v1569 = vunpack.c.l.b16 %v1299
        %v1570 = vunpack.c.l.b16 %v1300
        %v1571 = vunpack.c.l.b16 %v1301
        %v1572 = vunpack.c.l.b16 %v1302
        %v1573 = vunpack.c.l.b16 %v1303
        %v1574 = vunpack.c.l.b16 %v1304
        %v1575 = vunpack.c.l.b16 %v1305
        %v1576 = vunpack.c.l.b16 %v1306
        %v1577 = vunpack.c.l.b16 %v1307
        %v1578 = vunpack.c.l.b16 %v1308
        %v1579 = vunpack.c.l.b16 %v1309
        %v1580 = vunpack.c.l.b16 %v1310
        %v1581 = vunpack.c.l.b16 %v1311
        %v1582 = vpack.c.b16 %v1566, %v1566
        %v1583 = vpack.c.b16 %v1567, %v1567
        %v1584 = vpack.c.b16 %v1568, %v1568
        %v1585 = vpack.c.b16 %v1569, %v1569
        %v1586 = vpack.c.b16 %v1570, %v1570
        %v1587 = vpack.c.b16 %v1571, %v1571
        %v1588 = vpack.c.b16 %v1572, %v1572
        %v1589 = vpack.c.b16 %v1573, %v1573
        %v1590 = vpack.c.b16 %v1574, %v1574
        %v1591 = vpack.c.b16 %v1575, %v1575
        %v1592 = vpack.c.b16 %v1576, %v1576
        %v1593 = vpack.c.b16 %v1577, %v1577
        %v1594 = vpack.c.b16 %v1578, %v1578
        %v1595 = vpack.c.b16 %v1579, %v1579
        %v1596 = vpack.c.b16 %v1580, %v1580
        %v1597 = vpack.c.b16 %v1581, %v1581
        %v1598 = vunpack.c.l.b16 %v1582
        %v1599 = vunpack.c.l.b16 %v1583
        %v1600 = vunpack.c.l.b16 %v1584
        %v1601 = vunpack.c.l.b16 %v1585
        %v1602 = vunpack.c.l.b16 %v1586
        %v1603 = vunpack.c.l.b16 %v1587
        %v1604 = vunpack.c.l.b16 %v1588
        %v1605 = vunpack.c.l.b16 %v1589
        %v1606 = vunpack.c.l.b16 %v1590
        %v1607 = vunpack.c.l.b16 %v1591
        %v1608 = vunpack.c.l.b16 %v1592
        %v1609 = vunpack.c.l.b16 %v1593
        %v1610 = vunpack.c.l.b16 %v1594
        %v1611 = vunpack.c.l.b16 %v1595
        %v1612 = vunpack.c.l.b16 %v1596
        %v1613 = vunpack.c.l.b16 %v1597
        %v1614 = vrot.slane %v1598, 6
        %v1615 = vrot.slane %v1599, 5
        %v1616 = vsel %vm536, %v1615, %v1614
        %v1617 = vrot.slane %v1600, 4
        %v1618 = vsel %vm539, %v1617, %v1616
        %v1619 = vrot.slane %v1601, 3
        %v1620 = vsel %vm542, %v1619, %v1618
        %v1621 = vrot.slane %v1602, 2
        %v1622 = vsel %vm545, %v1621, %v1620
        %v1623 = vrot.slane %v1603, 1
        %v1624 = vsel %vm548, %v1623, %v1622
        %v1625 = vsel %vm551, %v1604, %v1624
        %v1626 = vrot.slane %v1605, 7
        %v1627 = vsel %vm554, %v1626, %v1625
        %v1628 = vrot.slane %v1606, 6
        %v1629 = vrot.slane %v1607, 5
        %v1630 = vsel %vm536, %v1629, %v1628
        %v1631 = vrot.slane %v1608, 4
        %v1632 = vsel %vm539, %v1631, %v1630
        %v1633 = vrot.slane %v1609, 3
        %v1634 = vsel %vm542, %v1633, %v1632
        %v1635 = vrot.slane %v1610, 2
        %v1636 = vsel %vm545, %v1635, %v1634
        %v1637 = vrot.slane %v1611, 1
        %v1638 = vsel %vm548, %v1637, %v1636
        %v1639 = vsel %vm551, %v1612, %v1638
        %v1640 = vrot.slane %v1613, 7
        %v1641 = vsel %vm554, %v1640, %v1639
        %v1642 = vpack.c.b16 %v1641, %v1627
        %v1645 = vsel %vm697, %v1549, 0
        %1647 = vmatprep.subr.bf16.mxu0 0
        %1648 = vmatpush1.bf16.msra.mxu0 0
        %1649 = vmatprep.subr.bf16.mxu0 0
        %1650 = vmatpush1.bf16.msra.mxu0 0
        %1651 = vmatprep.subr.bf16.mxu0 0
        %1652 = vmatpush1.bf16.msra.mxu0 0
        %1653 = vmatprep.subr.bf16.mxu0 0
        %1654 = vmatpush1.bf16.msra.mxu0 0
        %1655 = vmatprep.subr.bf16.mxu0 0
        %1656 = vmatpush1.bf16.msra.mxu0 0
        %1657 = vmatprep.subr.bf16.mxu0 0
        %1658 = vmatpush1.bf16.msra.mxu0 0
        %1659 = vmatprep.subr.bf16.mxu0 0
        %1660 = vmatpush1.bf16.msra.mxu0 0
        %1661 = vmatprep.subr.bf16.mxu0 0
        %1662 = vmatpush1.bf16.msra.mxu0 %v1642
        %1663 = vmatprep.subr.bf16.mxu0 0
        %1664 = vmatpush2.bf16.msra.mxu0 0
        %1665 = vmatprep.subr.bf16.mxu0 0
        %1666 = vmatpush2.bf16.msra.mxu0 0
        %1667 = vmatprep.subr.bf16.mxu0 0
        %1668 = vmatpush2.bf16.msra.mxu0 0
        %1669 = vmatprep.subr.bf16.mxu0 0
        %1670 = vmatpush2.bf16.msra.mxu0 0
        %1671 = vmatprep.subr.bf16.mxu0 0
        %1672 = vmatpush2.bf16.msra.mxu0 0
        %1673 = vmatprep.subr.bf16.mxu0 0
        %1674 = vmatpush2.bf16.msra.mxu0 0
        %1675 = vmatprep.subr.bf16.mxu0 0
        %1676 = vmatpush2.bf16.msra.mxu0 0
        %1677 = vmatprep.subr.bf16.mxu0 0
        %1678 = vmatpush2.bf16.msra.mxu0 0
        %1679 = vmatprep.mubr.bf16.mxu0 0
        %1680 = vmatmul.mubr.bf16.gmra.mxu0 %v1645
        %v1681 = vpop.f32.mrf.mxu0
        %v1682 = vadd.f32 0.0, %v1681
        %v1683 = vpop.f32.mrf.mxu0
        %v1684 = vpop.f32.mrf.mxu0
        %v1685 = vpop.f32.mrf.mxu0
        %1686 = vdwg.mxu0
        %v1687 = vmul.f32 %v1682, %v1548
        %v1688 = vmul.f32 %v1548, 0.25
        %v1689 = vmul.f32 %v1543, %v1688
        %v1690 = vld [vmem:[%s407] sm:$0xff]
        %v1691 = vadd.f32 %v1690, %v1689
        %1692 = vst.msk [vmem:[%s407] sm:$0xff] %vm697, %v1691
        %v1693 = vld [vmem:[%s367] sm:$0x2]
        %v1694 = vld [vmem:[%s367 + $0x2] sm:$0x2]
        %v1695 = vld [vmem:[%s367 + $0x4] sm:$0x2]
        %v1696 = vld [vmem:[%s367 + $0x6] sm:$0x2]
        %v1697 = vld [vmem:[%s367 + $0x8] sm:$0x2]
        %v1698 = vld [vmem:[%s367 + $0xa] sm:$0x2]
        %v1699 = vld [vmem:[%s367 + $0xc] sm:$0x2]
        %v1700 = vld [vmem:[%s367 + $0xe] sm:$0x2]
        %v1701 = vld [vmem:[%s374] sm:$0x2]
        %v1702 = vld [vmem:[%s374 + $0x4] sm:$0x2]
        %v1703 = vld [vmem:[%s374 + $0x8] sm:$0x2]
        %v1704 = vld [vmem:[%s374 + $0xc] sm:$0x2]
        %v1705 = vld [vmem:[%s374 + $0x10] sm:$0x2]
        %v1706 = vld [vmem:[%s374 + $0x14] sm:$0x2]
        %v1707 = vld [vmem:[%s374 + $0x18] sm:$0x2]
        %v1708 = vld [vmem:[%s374 + $0x1c] sm:$0x2]
        %v1709 = vld [vmem:[%s374 + $0x20] sm:$0x2]
        %v1710 = vld [vmem:[%s374 + $0x24] sm:$0x2]
        %v1711 = vld [vmem:[%s374 + $0x28] sm:$0x2]
        %v1712 = vld [vmem:[%s374 + $0x2c] sm:$0x2]
        %v1713 = vld [vmem:[%s374 + $0x30] sm:$0x2]
        %v1714 = vld [vmem:[%s374 + $0x34] sm:$0x2]
        %v1715 = vld [vmem:[%s374 + $0x38] sm:$0x2]
        %v1716 = vld [vmem:[%s374 + $0x3c] sm:$0x2]
        %v1717 = vld [vmem:[%s374] sm:$0x8]
        %v1718 = vld [vmem:[%s374 + $0x4] sm:$0x8]
        %v1719 = vld [vmem:[%s374 + $0x8] sm:$0x8]
        %v1720 = vld [vmem:[%s374 + $0xc] sm:$0x8]
        %v1721 = vld [vmem:[%s374 + $0x10] sm:$0x8]
        %v1722 = vld [vmem:[%s374 + $0x14] sm:$0x8]
        %v1723 = vld [vmem:[%s374 + $0x18] sm:$0x8]
        %v1724 = vld [vmem:[%s374 + $0x1c] sm:$0x8]
        %v1725 = vld [vmem:[%s374 + $0x20] sm:$0x8]
        %v1726 = vld [vmem:[%s374 + $0x24] sm:$0x8]
        %v1727 = vld [vmem:[%s374 + $0x28] sm:$0x8]
        %v1728 = vld [vmem:[%s374 + $0x2c] sm:$0x8]
        %v1729 = vld [vmem:[%s374 + $0x30] sm:$0x8]
        %v1730 = vld [vmem:[%s374 + $0x34] sm:$0x8]
        %v1731 = vld [vmem:[%s374 + $0x38] sm:$0x8]
        %v1732 = vld [vmem:[%s374 + $0x3c] sm:$0x8]
        %v1742 = vunpack.c.l.s4 1983009808
        %v1743 = vunpack.c.0.s8 %v1742
        %v1744 = vlaneseq
        %v1745 = vshrl.u32 %v1744, 7
        %v1746 = vsub.s32 %v1743, %v1745
        %v1747 = vrot.slane %v1693, %v1746
        %v1749 = vunpack.c.l.s4 1983009808
        %v1750 = vunpack.c.0.s8 %v1749
        %v1751 = vlaneseq
        %v1752 = vshrl.u32 %v1751, 7
        %v1753 = vsub.s32 %v1750, %v1752
        %v1754 = vrot.slane %v1694, %v1753
        %v1756 = vunpack.c.l.s4 1983009808
        %v1757 = vunpack.c.0.s8 %v1756
        %v1758 = vlaneseq
        %v1759 = vshrl.u32 %v1758, 7
        %v1760 = vsub.s32 %v1757, %v1759
        %v1761 = vrot.slane %v1695, %v1760
        %v1763 = vunpack.c.l.s4 1983009808
        %v1764 = vunpack.c.0.s8 %v1763
        %v1765 = vlaneseq
        %v1766 = vshrl.u32 %v1765, 7
        %v1767 = vsub.s32 %v1764, %v1766
        %v1768 = vrot.slane %v1696, %v1767
        %v1770 = vunpack.c.l.s4 1983009808
        %v1771 = vunpack.c.0.s8 %v1770
        %v1772 = vlaneseq
        %v1773 = vshrl.u32 %v1772, 7
        %v1774 = vsub.s32 %v1771, %v1773
        %v1775 = vrot.slane %v1697, %v1774
        %v1777 = vunpack.c.l.s4 1983009808
        %v1778 = vunpack.c.0.s8 %v1777
        %v1779 = vlaneseq
        %v1780 = vshrl.u32 %v1779, 7
        %v1781 = vsub.s32 %v1778, %v1780
        %v1782 = vrot.slane %v1698, %v1781
        %v1784 = vunpack.c.l.s4 1983009808
        %v1785 = vunpack.c.0.s8 %v1784
        %v1786 = vlaneseq
        %v1787 = vshrl.u32 %v1786, 7
        %v1788 = vsub.s32 %v1785, %v1787
        %v1789 = vrot.slane %v1699, %v1788
        %v1791 = vunpack.c.l.s4 1983009808
        %v1792 = vunpack.c.0.s8 %v1791
        %v1793 = vlaneseq
        %v1794 = vshrl.u32 %v1793, 7
        %v1795 = vsub.s32 %v1792, %v1794
        %v1796 = vrot.slane %v1700, %v1795
        %v1797 = vunpack.c.l.b16 %v1747
        %v1798 = vunpack.c.l.b16 %v1754
        %v1799 = vunpack.c.l.b16 %v1761
        %v1800 = vunpack.c.l.b16 %v1768
        %v1801 = vunpack.c.l.b16 %v1775
        %v1802 = vunpack.c.l.b16 %v1782
        %v1803 = vunpack.c.l.b16 %v1789
        %v1804 = vunpack.c.l.b16 %v1796
        %v1805 = vrot.slane %v1797, 3
        %v1806 = vrot.slane %v1798, 2
        %v1807 = vsel %vm536, %v1806, %v1805
        %v1808 = vrot.slane %v1799, 1
        %v1809 = vsel %vm539, %v1808, %v1807
        %v1810 = vsel %vm542, %v1800, %v1809
        %v1811 = vrot.slane %v1801, 7
        %v1812 = vsel %vm545, %v1811, %v1810
        %v1813 = vrot.slane %v1802, 6
        %v1814 = vsel %vm548, %v1813, %v1812
        %v1815 = vrot.slane %v1803, 5
        %v1816 = vsel %vm551, %v1815, %v1814
        %v1817 = vrot.slane %v1804, 4
        %v1818 = vsel %vm554, %v1817, %v1816
        %v1819 = vpack.c.b16 %v1818, %v1818
        %v1836 = vunpack.c.l.b16 %v1701
        %v1837 = vunpack.c.l.b16 %v1702
        %v1838 = vunpack.c.l.b16 %v1703
        %v1839 = vunpack.c.l.b16 %v1704
        %v1840 = vunpack.c.l.b16 %v1705
        %v1841 = vunpack.c.l.b16 %v1706
        %v1842 = vunpack.c.l.b16 %v1707
        %v1843 = vunpack.c.l.b16 %v1708
        %v1844 = vunpack.c.l.b16 %v1709
        %v1845 = vunpack.c.l.b16 %v1710
        %v1846 = vunpack.c.l.b16 %v1711
        %v1847 = vunpack.c.l.b16 %v1712
        %v1848 = vunpack.c.l.b16 %v1713
        %v1849 = vunpack.c.l.b16 %v1714
        %v1850 = vunpack.c.l.b16 %v1715
        %v1851 = vunpack.c.l.b16 %v1716
        %v1852 = vpack.c.b16 %v1836, %v1836
        %v1853 = vpack.c.b16 %v1837, %v1837
        %v1854 = vpack.c.b16 %v1838, %v1838
        %v1855 = vpack.c.b16 %v1839, %v1839
        %v1856 = vpack.c.b16 %v1840, %v1840
        %v1857 = vpack.c.b16 %v1841, %v1841
        %v1858 = vpack.c.b16 %v1842, %v1842
        %v1859 = vpack.c.b16 %v1843, %v1843
        %v1860 = vpack.c.b16 %v1844, %v1844
        %v1861 = vpack.c.b16 %v1845, %v1845
        %v1862 = vpack.c.b16 %v1846, %v1846
        %v1863 = vpack.c.b16 %v1847, %v1847
        %v1864 = vpack.c.b16 %v1848, %v1848
        %v1865 = vpack.c.b16 %v1849, %v1849
        %v1866 = vpack.c.b16 %v1850, %v1850
        %v1867 = vpack.c.b16 %v1851, %v1851
        %v1868 = vunpack.c.l.b16 %v1852
        %v1869 = vunpack.c.l.b16 %v1853
        %v1870 = vunpack.c.l.b16 %v1854
        %v1871 = vunpack.c.l.b16 %v1855
        %v1872 = vunpack.c.l.b16 %v1856
        %v1873 = vunpack.c.l.b16 %v1857
        %v1874 = vunpack.c.l.b16 %v1858
        %v1875 = vunpack.c.l.b16 %v1859
        %v1876 = vunpack.c.l.b16 %v1860
        %v1877 = vunpack.c.l.b16 %v1861
        %v1878 = vunpack.c.l.b16 %v1862
        %v1879 = vunpack.c.l.b16 %v1863
        %v1880 = vunpack.c.l.b16 %v1864
        %v1881 = vunpack.c.l.b16 %v1865
        %v1882 = vunpack.c.l.b16 %v1866
        %v1883 = vunpack.c.l.b16 %v1867
        %v1884 = vrot.slane %v1868, 3
        %v1885 = vrot.slane %v1869, 2
        %v1886 = vsel %vm536, %v1885, %v1884
        %v1887 = vrot.slane %v1870, 1
        %v1888 = vsel %vm539, %v1887, %v1886
        %v1889 = vsel %vm542, %v1871, %v1888
        %v1890 = vrot.slane %v1872, 7
        %v1891 = vsel %vm545, %v1890, %v1889
        %v1892 = vrot.slane %v1873, 6
        %v1893 = vsel %vm548, %v1892, %v1891
        %v1894 = vrot.slane %v1874, 5
        %v1895 = vsel %vm551, %v1894, %v1893
        %v1896 = vrot.slane %v1875, 4
        %v1897 = vsel %vm554, %v1896, %v1895
        %v1898 = vrot.slane %v1876, 3
        %v1899 = vrot.slane %v1877, 2
        %v1900 = vsel %vm536, %v1899, %v1898
        %v1901 = vrot.slane %v1878, 1
        %v1902 = vsel %vm539, %v1901, %v1900
        %v1903 = vsel %vm542, %v1879, %v1902
        %v1904 = vrot.slane %v1880, 7
        %v1905 = vsel %vm545, %v1904, %v1903
        %v1906 = vrot.slane %v1881, 6
        %v1907 = vsel %vm548, %v1906, %v1905
        %v1908 = vrot.slane %v1882, 5
        %v1909 = vsel %vm551, %v1908, %v1907
        %v1910 = vrot.slane %v1883, 4
        %v1911 = vsel %vm554, %v1910, %v1909
        %v1912 = vpack.c.b16 %v1911, %v1897
        %v1914 = vsel %vm650, %v1819, 0
        %v1917 = vsel %vm650, %v1912, 0
        %1919 = vmatprep.subr.bf16.mxu0 0
        %1920 = vmatpush1.bf16.xpose.msra.mxu0 0
        %1921 = vmatprep.subr.bf16.mxu0 0
        %1922 = vmatpush1.bf16.xpose.msra.mxu0 0
        %1923 = vmatprep.subr.bf16.mxu0 0
        %1924 = vmatpush1.bf16.xpose.msra.mxu0 0
        %1925 = vmatprep.subr.bf16.mxu0 0
        %1926 = vmatpush1.bf16.xpose.msra.mxu0 0
        %1927 = vmatprep.subr.bf16.mxu0 0
        %1928 = vmatpush1.bf16.xpose.msra.mxu0 0
        %1929 = vmatprep.subr.bf16.mxu0 0
        %1930 = vmatpush1.bf16.xpose.msra.mxu0 0
        %1931 = vmatprep.subr.bf16.mxu0 0
        %1932 = vmatpush1.bf16.xpose.msra.mxu0 0
        %1933 = vmatprep.subr.bf16.mxu0 0
        %1934 = vmatpush1.bf16.xpose.msra.mxu0 %v1917
        %1935 = vmatprep.subr.bf16.mxu0 0
        %1936 = vmatpush2.bf16.xpose.msra.mxu0 0
        %1937 = vmatprep.subr.bf16.mxu0 0
        %1938 = vmatpush2.bf16.xpose.msra.mxu0 0
        %1939 = vmatprep.subr.bf16.mxu0 0
        %1940 = vmatpush2.bf16.xpose.msra.mxu0 0
        %1941 = vmatprep.subr.bf16.mxu0 0
        %1942 = vmatpush2.bf16.xpose.msra.mxu0 0
        %1943 = vmatprep.subr.bf16.mxu0 0
        %1944 = vmatpush2.bf16.xpose.msra.mxu0 0
        %1945 = vmatprep.subr.bf16.mxu0 0
        %1946 = vmatpush2.bf16.xpose.msra.mxu0 0
        %1947 = vmatprep.subr.bf16.mxu0 0
        %1948 = vmatpush2.bf16.xpose.msra.mxu0 0
        %1949 = vmatprep.subr.bf16.mxu0 0
        %1950 = vmatpush2.bf16.xpose.msra.mxu0 0
        %1951 = vmatprep.mubr.bf16.mxu0 0
        %1952 = vmatmul.mubr.bf16.gmra.mxu0 %v1914
        %v1953 = vpop.f32.mrf.mxu0
        %v1954 = vadd.f32 %v461, %v1953
        %v1955 = vpop.f32.mrf.mxu0
        %v1956 = vpop.f32.mrf.mxu0
        %v1957 = vpop.f32.mrf.mxu0
        %1958 = vdwg.mxu0
        %v1959 = vsel %vm697, %v1954, -inf
        %1960 = vmax.xlane.f32.xlu0 %v1959
        %v1961 = vpop.xlane.xlu0 %1960
        %v1962 = vsub.f32 %v1954, %v1961
        %v1963 = vmul.f32 %v1962, 1.442695
        %v1964 = vpow.pop %v1963
        %v1965 = vsel %vm697, %v1964, 0.0
        %1966 = vadd.xlane.f32.xlu0 %v1965
        %v1967 = vpop.xlane.xlu0 %1966
        %v1968 = vrcp.pop %v1967
        %v1969 = vmul.f32 1.0, %v1968
        %v1970 = vpack.c.bf16 %v1964, %v1964
        %v1987 = vunpack.c.l.b16 %v1717
        %v1988 = vunpack.c.l.b16 %v1718
        %v1989 = vunpack.c.l.b16 %v1719
        %v1990 = vunpack.c.l.b16 %v1720
        %v1991 = vunpack.c.l.b16 %v1721
        %v1992 = vunpack.c.l.b16 %v1722
        %v1993 = vunpack.c.l.b16 %v1723
        %v1994 = vunpack.c.l.b16 %v1724
        %v1995 = vunpack.c.l.b16 %v1725
        %v1996 = vunpack.c.l.b16 %v1726
        %v1997 = vunpack.c.l.b16 %v1727
        %v1998 = vunpack.c.l.b16 %v1728
        %v1999 = vunpack.c.l.b16 %v1729
        %v2000 = vunpack.c.l.b16 %v1730
        %v2001 = vunpack.c.l.b16 %v1731
        %v2002 = vunpack.c.l.b16 %v1732
        %v2003 = vpack.c.b16 %v1987, %v1987
        %v2004 = vpack.c.b16 %v1988, %v1988
        %v2005 = vpack.c.b16 %v1989, %v1989
        %v2006 = vpack.c.b16 %v1990, %v1990
        %v2007 = vpack.c.b16 %v1991, %v1991
        %v2008 = vpack.c.b16 %v1992, %v1992
        %v2009 = vpack.c.b16 %v1993, %v1993
        %v2010 = vpack.c.b16 %v1994, %v1994
        %v2011 = vpack.c.b16 %v1995, %v1995
        %v2012 = vpack.c.b16 %v1996, %v1996
        %v2013 = vpack.c.b16 %v1997, %v1997
        %v2014 = vpack.c.b16 %v1998, %v1998
        %v2015 = vpack.c.b16 %v1999, %v1999
        %v2016 = vpack.c.b16 %v2000, %v2000
        %v2017 = vpack.c.b16 %v2001, %v2001
        %v2018 = vpack.c.b16 %v2002, %v2002
        %v2019 = vunpack.c.l.b16 %v2003
        %v2020 = vunpack.c.l.b16 %v2004
        %v2021 = vunpack.c.l.b16 %v2005
        %v2022 = vunpack.c.l.b16 %v2006
        %v2023 = vunpack.c.l.b16 %v2007
        %v2024 = vunpack.c.l.b16 %v2008
        %v2025 = vunpack.c.l.b16 %v2009
        %v2026 = vunpack.c.l.b16 %v2010
        %v2027 = vunpack.c.l.b16 %v2011
        %v2028 = vunpack.c.l.b16 %v2012
        %v2029 = vunpack.c.l.b16 %v2013
        %v2030 = vunpack.c.l.b16 %v2014
        %v2031 = vunpack.c.l.b16 %v2015
        %v2032 = vunpack.c.l.b16 %v2016
        %v2033 = vunpack.c.l.b16 %v2017
        %v2034 = vunpack.c.l.b16 %v2018
        %v2035 = vrot.slane %v2019, 7
        %v2036 = vrot.slane %v2020, 6
        %v2037 = vsel %vm536, %v2036, %v2035
        %v2038 = vrot.slane %v2021, 5
        %v2039 = vsel %vm539, %v2038, %v2037
        %v2040 = vrot.slane %v2022, 4
        %v2041 = vsel %vm542, %v2040, %v2039
        %v2042 = vrot.slane %v2023, 3
        %v2043 = vsel %vm545, %v2042, %v2041
        %v2044 = vrot.slane %v2024, 2
        %v2045 = vsel %vm548, %v2044, %v2043
        %v2046 = vrot.slane %v2025, 1
        %v2047 = vsel %vm551, %v2046, %v2045
        %v2048 = vsel %vm554, %v2026, %v2047
        %v2049 = vrot.slane %v2027, 7
        %v2050 = vrot.slane %v2028, 6
        %v2051 = vsel %vm536, %v2050, %v2049
        %v2052 = vrot.slane %v2029, 5
        %v2053 = vsel %vm539, %v2052, %v2051
        %v2054 = vrot.slane %v2030, 4
        %v2055 = vsel %vm542, %v2054, %v2053
        %v2056 = vrot.slane %v2031, 3
        %v2057 = vsel %vm545, %v2056, %v2055
        %v2058 = vrot.slane %v2032, 2
        %v2059 = vsel %vm548, %v2058, %v2057
        %v2060 = vrot.slane %v2033, 1
        %v2061 = vsel %vm551, %v2060, %v2059
        %v2062 = vsel %vm554, %v2034, %v2061
        %v2063 = vpack.c.b16 %v2062, %v2048
        %v2066 = vsel %vm697, %v1970, 0
        %2068 = vmatprep.subr.bf16.mxu0 0
        %2069 = vmatpush1.bf16.msra.mxu0 0
        %2070 = vmatprep.subr.bf16.mxu0 0
        %2071 = vmatpush1.bf16.msra.mxu0 0
        %2072 = vmatprep.subr.bf16.mxu0 0
        %2073 = vmatpush1.bf16.msra.mxu0 0
        %2074 = vmatprep.subr.bf16.mxu0 0
        %2075 = vmatpush1.bf16.msra.mxu0 0
        %2076 = vmatprep.subr.bf16.mxu0 0
        %2077 = vmatpush1.bf16.msra.mxu0 0
        %2078 = vmatprep.subr.bf16.mxu0 0
        %2079 = vmatpush1.bf16.msra.mxu0 0
        %2080 = vmatprep.subr.bf16.mxu0 0
        %2081 = vmatpush1.bf16.msra.mxu0 0
        %2082 = vmatprep.subr.bf16.mxu0 0
        %2083 = vmatpush1.bf16.msra.mxu0 %v2063
        %2084 = vmatprep.subr.bf16.mxu0 0
        %2085 = vmatpush2.bf16.msra.mxu0 0
        %2086 = vmatprep.subr.bf16.mxu0 0
        %2087 = vmatpush2.bf16.msra.mxu0 0
        %2088 = vmatprep.subr.bf16.mxu0 0
        %2089 = vmatpush2.bf16.msra.mxu0 0
        %2090 = vmatprep.subr.bf16.mxu0 0
        %2091 = vmatpush2.bf16.msra.mxu0 0
        %2092 = vmatprep.subr.bf16.mxu0 0
        %2093 = vmatpush2.bf16.msra.mxu0 0
        %2094 = vmatprep.subr.bf16.mxu0 0
        %2095 = vmatpush2.bf16.msra.mxu0 0
        %2096 = vmatprep.subr.bf16.mxu0 0
        %2097 = vmatpush2.bf16.msra.mxu0 0
        %2098 = vmatprep.subr.bf16.mxu0 0
        %2099 = vmatpush2.bf16.msra.mxu0 0
        %2100 = vmatprep.mubr.bf16.mxu0 0
        %2101 = vmatmul.mubr.bf16.gmra.mxu0 %v2066
        %v2102 = vpop.f32.mrf.mxu0
        %v2103 = vadd.f32 0.0, %v2102
        %v2104 = vpop.f32.mrf.mxu0
        %v2105 = vpop.f32.mrf.mxu0
        %v2106 = vpop.f32.mrf.mxu0
        %2107 = vdwg.mxu0
        %v2108 = vmul.f32 %v2103, %v1969
        %v2109 = vmul.f32 %v1969, 0.25
        %v2110 = vmul.f32 %v1964, %v2109
        %v2111 = vld [vmem:[%s407] sm:$0xff]
        %v2112 = vadd.f32 %v2111, %v2110
        %2113 = vst.msk [vmem:[%s407] sm:$0xff] %vm697, %v2112
        %2115 = vrot.lane.b32.xlu0 %v1266, 8
        %v2116 = vpop.permute.xlu0 %2115
        %2119 = vrot.lane.b32.xlu0 %v1687, 16
        %v2120 = vpop.permute.xlu0 %2119
        %2123 = vrot.lane.b32.xlu0 %v2108, 24
        %v2124 = vpop.permute.xlu0 %2123
        %v2126 = vsel %vm650, %v847, %v2116
        %v2127 = vsel %vm697, %v2126, %v2120
        %vm2128 = vcmask 195584
        %v2129 = vsel %vm2128, %v2127, %v2124
        %v2130 = vpack.c.bf16 %v2129, %v2129
        %vm2131 = vcmask 257024
        %2132 = vst.msk [vmem:[%s414] sm:$0xf] %vm2131, %v2130
        %p2133 = scmp.lt.s32.totalorder %s19, 1
        %s2134 = scalar_select %p2133, %s19, 1
        %s2135 = smul.addr %s2134, 4
        %s2136 = scalar_lea.vmem %s3, %s2135
        %s2137 = sand.u32 %s131, 1
        %s2138 = scalar_lea.sflag [#allocation5], %s2137
        %s2139 = sand.u32 %s131, 1
        %s2140 = smul.addr %s2139, 8
        %s2141 = scalar_lea.vmem [#allocation4], %s2140
        // Predicated region
        $region115: #{transformer_decoder_layer.14} parent=105 // pred_check
          %p2142 = pneg %p115
        $region116: #{transformer_decoder_layer.14} parent=105 // pred_check_branch
          %2144 = sbr.rel (%p2142) target = $region118
        $region117: #{transformer_decoder_layer.14} parent=105 // pred_region
          _
        $region118: #{transformer_decoder_layer.14} parent=105 // pred_fallthru
          _
        // Predicated region
        $region119: #{transformer_decoder_layer.14} parent=105 // pred_check
          %p2145 = pneg %p141
        $region120: #{transformer_decoder_layer.14} parent=105 // pred_check_branch
          %2147 = sbr.rel (%p2145) target = $region122
        $region121: #{transformer_decoder_layer.14} parent=105 // pred_region
          %s2149 = ssub.s32 128, 128
          %2150 = vsyncadd %s2138, %s2149
          %s2151 = smul.addr %s19, 128
          %s2152 = scalar_lea.hbm %s4, %s2151
          %s2154 = sshll.u32 %s2141, 4
          %s2155 = int_to_ptr.vmem [resolvable:$true] %s2154
          %2157 = dma.vmem_to_hbm [thread:$0]  %s2155, 128, %s2152, %s2138
        $region122: #{transformer_decoder_layer.14} parent=105 // pred_fallthru
          _
      $region106: #{transformer_decoder_layer.14} parent=5 // pred_fallthru
        _
      %p2158 = scmp.le.s32.totalorder 2, %s14
      // Predicated region
      $region123: #{transformer_decoder_layer.14} parent=5 // pred_check
        %p2159 = pneg %p2158
      $region124: #{transformer_decoder_layer.14} parent=5 // pred_check_branch
        %2161 = sbr.rel (%p2159) target = $region126
      $region125: #{transformer_decoder_layer.14} parent=5 // pred_region
        %s2162 = ssub.s32 %s14, 2
        // Predicated region
        $region127: #{transformer_decoder_layer.14} parent=125 // pred_check
          %p2163 = pneg %p121
        $region128: #{transformer_decoder_layer.14} parent=125 // pred_check_branch
          %2165 = sbr.rel (%p2163) target = $region130
        $region129: #{transformer_decoder_layer.14} parent=125 // pred_region
          %p2166 = scmp.lt.s32.totalorder %s20, 1
          %s2167 = scalar_select %p2166, %s20, 1
          %s2168 = smul.addr %s2167, 4
          %s2169 = scalar_lea.vmem %s3, %s2168
        $region130: #{transformer_decoder_layer.14} parent=125 // pred_fallthru
          _
        // Predicated region
        $region131: #{transformer_decoder_layer.14} parent=125 // pred_check
          %p2170 = pneg %p147
        $region132: #{transformer_decoder_layer.14} parent=125 // pred_check_branch
          %2172 = sbr.rel (%p2170) target = $region134
        $region133: #{transformer_decoder_layer.14} parent=125 // pred_region
          %s2173 = sand.u32 %s132, 1
          %s2174 = scalar_lea.sflag [#allocation5], %s2173
          %s2175 = sand.u32 %s132, 1
          %s2176 = smul.addr %s2175, 8
          %s2177 = scalar_lea.vmem [#allocation4], %s2176
          %2178 = dma.done %s2174, 128
        $region134: #{transformer_decoder_layer.14} parent=125 // pred_fallthru
          _
      $region126: #{transformer_decoder_layer.14} parent=5 // pred_fallthru
        _
    $region6: #{transformer_decoder_layer.14} parent=1 // loop_footer
      %s18 = sadd.s32 1, %s14
    $region7: #{transformer_decoder_layer.14} parent=1 // loop_footer_branch
      %13 = sbr.rel target = $region3
    $region8: #{transformer_decoder_layer.14} parent=1 // loop_exit
      _
    %2179 = vsyncpa [#allocation5], 1
    %s2180 = scalar_lea.sflag [#allocation5], 1
    %2181 = vsyncpa %s2180, 1

</llo_original>
